<compile_context>
chip_gen: v7x
topology: tpu7x:2x2x1
jax: 0.10.0
libtpu: 0.0.40
codegen_flags: <defaults>
</compile_context>

<pallas_src>
import functools

import numpy as np
import jax
import jax.numpy as jnp
from jax.experimental import pallas as pl
from jax.experimental.pallas import tpu as pltpu

EPS = 1e-5  # nn.BatchNorm2d default eps


# ------------------------------ fused Pallas kernel ------------------------------

def _fused_kernel(x_ref, s_ref, wc_ref, wd_ref, mw_ref, ah_ref,
                  bnc_ref, bnd_ref, pc_ref, pd_ref,
                  out_ref, s1pad_ref, *, N, H, W, Cin, Cout):
    NH = N * H
    WC = W * Cin

    def conv3x3(src, base):
        """3x3 conv (pad=1) of a vertically-padded (N, H+2, W*Cin) slab.

        The kx taps and horizontal zero padding are folded into the per-dy
        (W*Cin, W*Cout) weight matrices wc_ref[base+dy], so this is just three
        lane-dense matmuls on row slices, accumulated.  Output: (N*H, W*Cout).
        """
        acc = None
        for dy in range(3):
            rows = src[:, dy:dy + H, :].reshape(NH, WC)
            t = jnp.dot(rows, wc_ref[base + dy], preferred_element_type=jnp.float32)
            acc = t if acc is None else acc + t
        return acc

    def bn_relu(z, gamma_b, beta_b, p):
        """Training-mode BatchNorm (biased var) + LeakyReLU(0) on a slab.

        `p` is the channel-mean projector kron(ones, I_C)/count, so one tiny
        matmul both reduces over the w-column groups and broadcasts back.
        Conv bias is omitted: the mean subtraction cancels it exactly.
        """
        mean_b = jnp.dot(jnp.sum(z, axis=0, keepdims=True), p,
                         preferred_element_type=jnp.float32)
        d = z - mean_b
        var_b = jnp.dot(jnp.sum(d * d, axis=0, keepdims=True), p,
                        preferred_element_type=jnp.float32)
        zn = d * (jax.lax.rsqrt(var_b + EPS) * gamma_b) + beta_b
        return jnp.maximum(zn, 0.0)          # LeakyReLU with slope 0 == ReLU

    pc = pc_ref[...]
    bnc = bnc_ref[...]

    # ---- conv1 (on skip) ----
    s1 = bn_relu(conv3x3(s_ref, 0), bnc[0:1], bnc[1:2], pc)          # (N*H, W*Cin)

    # Vertically re-pad s1 in a lane-dense scratch slab: zero halo rows only,
    # interior written with full-lane-width stores.
    zero_row = jnp.zeros((N, 1, WC), jnp.float32)
    s1pad_ref[:, 0:1, :] = zero_row
    s1pad_ref[:, H + 1:H + 2, :] = zero_row
    s1pad_ref[:, 1:H + 1, :] = s1.reshape(N, H, WC)

    # ---- conv2 on cat([x, s1]): x-half + s1-half matmuls accumulated (no concat) ----
    c2 = bn_relu(conv3x3(x_ref, 3) + conv3x3(s1pad_ref, 6),
                 bnc[2:3], bnc[3:4], pc)                             # (N*H, W*Cin)

    # ---- ConvTranspose2d(k=2, s=2): one matmul per kh, kw taps fused along lanes ----
    y0 = jnp.dot(c2, wd_ref[0], preferred_element_type=jnp.float32)  # (N*H, 2*W*Cout)
    y1 = jnp.dot(c2, wd_ref[1], preferred_element_type=jnp.float32)

    # BatchNorm over the full (N, 2H, 2W) extent, computed on the pre-interleave
    # tap layout (identical statistics), then LeakyReLU(0.01).  Deconv bias omitted
    # (cancelled by the mean subtraction).
    pd = pd_ref[...]
    bnd = bnd_ref[...]
    mean_b = jnp.dot(jnp.sum(y0, axis=0, keepdims=True)
                     + jnp.sum(y1, axis=0, keepdims=True), pd,
                     preferred_element_type=jnp.float32)
    d0 = y0 - mean_b
    d1 = y1 - mean_b
    var_b = jnp.dot(jnp.sum(d0 * d0, axis=0, keepdims=True)
                    + jnp.sum(d1 * d1, axis=0, keepdims=True), pd,
                    preferred_element_type=jnp.float32)
    scale_b = jax.lax.rsqrt(var_b + EPS) * bnd[0:1]
    z0 = d0 * scale_b + bnd[1:2]
    z1 = d1 * scale_b + bnd[1:2]
    z0 = jnp.where(z0 >= 0, z0, 0.01 * z0)
    z1 = jnp.where(z1 >= 0, z1, 0.01 * z1)

    # ---- bilinear resize; stride-2 interleave folded into mw / ah (precomposed) ----
    mw = mw_ref[...]
    t0 = jnp.dot(z0, mw, preferred_element_type=jnp.float32)         # (N*H, Wo*Cout)
    t1 = jnp.dot(z1, mw, preferred_element_type=jnp.float32)
    out_ref[...] = (jnp.dot(ah_ref[0], t0, preferred_element_type=jnp.float32)
                    + jnp.dot(ah_ref[1], t1, preferred_element_type=jnp.float32))


# ------------------------------ wrapper (glue) ------------------------------

_ARB = pltpu.CompilerParams(dimension_semantics=("arbitrary",))


def _full_spec(shape):
    zeros = (0,) * len(shape)
    return pl.BlockSpec(shape, lambda i: zeros)


def _interp_matrix(out_size, in_size):
    """PyTorch F.interpolate(bilinear, align_corners=False) weights as a matrix."""
    scale = in_size / out_size
    i = np.arange(out_size, dtype=np.float64)
    src = (i + 0.5) * scale - 0.5
    src = np.maximum(src, 0.0)            # PyTorch clamps negative src coords to 0
    i0 = np.minimum(np.floor(src).astype(np.int64), in_size - 1)
    i1 = np.minimum(i0 + 1, in_size - 1)
    lam = (src - i0).astype(np.float32)
    A = np.zeros((out_size, in_size), np.float32)
    A[np.arange(out_size), i0] += (1.0 - lam)
    A[np.arange(out_size), i1] += lam
    return A


@functools.partial(jax.jit, static_argnames=("output_lim",))
def deconv_block_skip_forward(x, skip, params, output_lim=(18, 18)):
    """DeconvBlock_skip.forward(x, input).  x, skip are NCHW float32."""
    N, Cin, H, W = x.shape
    Cout = params['deconv_w'].shape[1]
    Ho, Wo = output_lim
    WC = W * Cin
    WD = W * Cout

    # ---- input slabs: NCHW -> (N, H+2, W*Cin) lane-dense, vertically zero-padded ----
    def to_slab(t):
        return jnp.pad(jnp.transpose(t, (0, 2, 3, 1)).reshape(N, H, WC),
                       ((0, 0), (1, 1), (0, 0)))

    x_slab, s_slab = to_slab(x), to_slab(skip)

    # ---- 3x3 conv weights folded into per-dy (W*Cin, W*Cout) slab matrices ----
    # (horizontal taps + left/right zero padding are absorbed into the matrix)
    S = np.zeros((3, W, W), np.float32)
    for dx in range(3):
        for wo_ in range(W):
            wi = wo_ + dx - 1
            if 0 <= wi < W:
                S[dx, wi, wo_] = 1.0
    S = jnp.asarray(S)

    def conv_slab_w(w):                               # w: (ky, kx, Ci, Co)
        Ci, Co = w.shape[2], w.shape[3]
        return jnp.einsum('dab,kdio->kaibo', S, w).reshape(3, W * Ci, W * Co)

    wconv = jnp.concatenate([conv_slab_w(params['conv1_w']),
                             conv_slab_w(params['conv2_w'][:, :, :Cin, :]),
                             conv_slab_w(params['conv2_w'][:, :, Cin:, :])],
                            axis=0)                   # (9, W*Cin, W*Cin)

    # ---- ConvTranspose2d(k=2,s=2): (W*Cin, 2*W*Cout) per kh, kw-blocked columns ----
    wd = params['deconv_w']                           # (Cin, Cout, kh, kw)
    eyeW = jnp.eye(W, dtype=jnp.float32)
    wdec = jnp.stack([
        jnp.concatenate([jnp.kron(eyeW, wd[:, :, kh, 0]),
                         jnp.kron(eyeW, wd[:, :, kh, 1])], axis=1)
        for kh in range(2)])                          # (2, W*Cin, 2*W*Cout)

    # ---- resize matrices with the stride-2 interleave precomposed (numpy consts) ----
    Ah = _interp_matrix(Ho, 2 * H)                    # (Ho, 2H)
    Aw = _interp_matrix(Wo, 2 * W)                    # (Wo, 2W)
    eyeC = np.eye(Cout, dtype=np.float32)
    mw = jnp.asarray(np.concatenate(
        [np.kron(Aw[:, 0::2].T, eyeC),
         np.kron(Aw[:, 1::2].T, eyeC)], axis=0))      # (2*W*Cout, Wo*Cout)
    eyeN = np.eye(N, dtype=np.float32)
    ah = jnp.asarray(np.stack(
        [np.kron(eyeN, Ah[:, 0::2]),
         np.kron(eyeN, Ah[:, 1::2])]))                # (2, N*Ho, N*H)

    # ---- BN constants: tiled gamma/beta rows + channel-mean projector matrices ----
    # (conv/deconv biases are not passed: training-mode BN cancels them exactly)
    bn_conv = jnp.stack([jnp.tile(params['conv1_gamma'], W),
                         jnp.tile(params['conv1_beta'], W),
                         jnp.tile(params['conv2_gamma'], W),
                         jnp.tile(params['conv2_beta'], W)])          # (4, W*Cin)
    bn_dec = jnp.stack([jnp.tile(params['deconv_gamma'], 2 * W),
                        jnp.tile(params['deconv_beta'], 2 * W)])      # (2, 2*W*Cout)
    p_c = jnp.asarray(np.kron(np.ones((W, W), np.float32),
                              np.eye(Cin, dtype=np.float32)) / (N * H * W))
    p_d = jnp.asarray(np.kron(np.ones((2 * W, 2 * W), np.float32),
                              np.eye(Cout, dtype=np.float32)) / (4 * N * H * W))

    args = (x_slab, s_slab, wconv, wdec, mw, ah, bn_conv, bn_dec, p_c, p_d)

    kern = functools.partial(_fused_kernel, N=N, H=H, W=W, Cin=Cin, Cout=Cout)
    # TODO(synk): at production UNet-decoder shapes (e.g. H=W=128, C=64) switch to a
    # row-block grid with BlockSpec pipelining (+ two-pass / cross-core BN stats) so
    # the everything-resident design stays under v7x's 64 MiB VMEM and uses both TCs.
    out = pl.pallas_call(
        kern,
        out_shape=jax.ShapeDtypeStruct((N * Ho, Wo * Cout), jnp.float32),
        grid=(1,),
        in_specs=[_full_spec(a.shape) for a in args],
        out_specs=_full_spec((N * Ho, Wo * Cout)),
        scratch_shapes=[pltpu.VMEM((N, H + 2, WC), jnp.float32)],
        compiler_params=_ARB,
    )(*args)

    # lane-dense (N*Ho, Wo*Cout) slab -> public NCHW layout (tiny glue transpose)
    return jnp.transpose(out.reshape(N, Ho, Wo, Cout), (0, 3, 1, 2))


# ------------------------- deterministic parameters --------------------------

def init_params(key, in_fea, out_fea):
    ks = jax.random.split(key, 12)

    def nrm(k, shape, s=0.1):
        return s * jax.random.normal(k, shape, jnp.float32)

    return dict(
        conv1_w=nrm(ks[0], (3, 3, in_fea, in_fea)),        # (ky, kx, Cin, Cout)
        conv1_b=nrm(ks[1], (in_fea,)),
        conv1_gamma=1.0 + nrm(ks[2], (in_fea,)),
        conv1_beta=nrm(ks[3], (in_fea,)),
        conv2_w=nrm(ks[4], (3, 3, 2 * in_fea, in_fea)),
        conv2_b=nrm(ks[5], (in_fea,)),
        conv2_gamma=1.0 + nrm(ks[6], (in_fea,)),
        conv2_beta=nrm(ks[7], (in_fea,)),
        deconv_w=nrm(ks[8], (in_fea, out_fea, 2, 2)),       # ConvTranspose2d layout
        deconv_b=nrm(ks[9], (out_fea,)),
        deconv_gamma=1.0 + nrm(ks[10], (out_fea,)),
        deconv_beta=nrm(ks[11], (out_fea,)),
    )


# --------------------------- pure-JAX reference ------------------------------

def _ref_forward(x, skip, params, output_lim):
    HI = jax.lax.Precision.HIGHEST

    def conv3x3(z, w, b):
        w_oihw = jnp.transpose(w, (3, 2, 0, 1))
        y = jax.lax.conv_general_dilated(z, w_oihw, (1, 1), ((1, 1), (1, 1)),
                                         dimension_numbers=('NCHW', 'OIHW', 'NCHW'),
                                         precision=HI)
        return y + b[None, :, None, None]

    def bn(z, g, bt):
        m = jnp.mean(z, axis=(0, 2, 3), keepdims=True)
        v = jnp.mean((z - m) ** 2, axis=(0, 2, 3), keepdims=True)
        return (z - m) * jax.lax.rsqrt(v + EPS) * g[None, :, None, None] \
            + bt[None, :, None, None]

    def lrelu(z, s):
        return jnp.where(z >= 0, z, s * z)

    s1 = lrelu(bn(conv3x3(skip, params['conv1_w'], params['conv1_b']),
                  params['conv1_gamma'], params['conv1_beta']), 0.0)
    cat = jnp.concatenate([x, s1], axis=1)
    c2 = lrelu(bn(conv3x3(cat, params['conv2_w'], params['conv2_b']),
                  params['conv2_gamma'], params['conv2_beta']), 0.0)
    w = params['deconv_w']
    N, _, H, W = c2.shape
    Co = w.shape[1]
    d = jnp.einsum('nihw,iokl->nohkwl', c2, w, precision=HI).reshape(N, Co, 2 * H, 2 * W)
    d = d + params['deconv_b'][None, :, None, None]
    d = lrelu(bn(d, params['deconv_gamma'], params['deconv_beta']), 0.01)
    Ah = jnp.asarray(_interp_matrix(output_lim[0], d.shape[2]))
    Aw = jnp.asarray(_interp_matrix(output_lim[1], d.shape[3]))
    o = jnp.einsum('oh,nchw->ncow', Ah, d, precision=HI)
    o = jnp.einsum('pw,ncow->ncop', Aw, o, precision=HI)
    return o


if __name__ == "__main__":
    key = jax.random.PRNGKey(0)
    in_fea, out_fea = 4, 8
    N, H, W = 2, 16, 16
    kx, ksk, kp = jax.random.split(key, 3)
    x = jax.random.normal(kx, (N, in_fea, H, W), jnp.float32)
    skip = jax.random.normal(ksk, (N, in_fea, H, W), jnp.float32)
    params = init_params(kp, in_fea, out_fea)

    out = deconv_block_skip_forward(x, skip, params, output_lim=(18, 18))
    out = jax.block_until_ready(out)
    assert out.shape == (N, out_fea, 18, 18), out.shape

    ref = jax.block_until_ready(_ref_forward(x, skip, params, (18, 18)))
    np.testing.assert_allclose(np.asarray(out), np.asarray(ref), rtol=2e-3, atol=2e-3)
    print("KERNEL_OK")
</pallas_src>

<mosaic_0001>
module attributes {stable_mosaic.version = 11 : i64} {
  func.func @_fused_kernel(%arg0: i32, %arg1: memref<2x18x64xf32, #tpu.memory_space<vmem>>, %arg2: memref<2x18x64xf32, #tpu.memory_space<vmem>>, %arg3: memref<9x64x64xf32, #tpu.memory_space<vmem>>, %arg4: memref<2x64x256xf32, #tpu.memory_space<vmem>>, %arg5: memref<256x144xf32, #tpu.memory_space<vmem>>, %arg6: memref<2x36x32xf32, #tpu.memory_space<vmem>>, %arg7: memref<4x64xf32, #tpu.memory_space<vmem>>, %arg8: memref<2x256xf32, #tpu.memory_space<vmem>>, %arg9: memref<64x64xf32, #tpu.memory_space<vmem>>, %arg10: memref<256x256xf32, #tpu.memory_space<vmem>>, %arg11: memref<36x144xf32, #tpu.memory_space<vmem>>, %arg12: memref<2x18x64xf32, #tpu.memory_space<vmem>>) attributes {dimension_semantics = [#tpu.dimension_semantics<arbitrary>], iteration_bounds = array<i64: 1>, scalar_prefetch = 0 : i64, scratch_operands = 1 : i64, tpu.core_type = #tpu.core_type<tc>, window_params = [{pipeline_mode = #tpu.pipeline_mode<synchronous>, transform_indices = @transform_0, window_bounds = array<i64: 2, 18, 64>}, {pipeline_mode = #tpu.pipeline_mode<synchronous>, transform_indices = @transform_1, window_bounds = array<i64: 2, 18, 64>}, {pipeline_mode = #tpu.pipeline_mode<synchronous>, transform_indices = @transform_2, window_bounds = array<i64: 9, 64, 64>}, {pipeline_mode = #tpu.pipeline_mode<synchronous>, transform_indices = @transform_3, window_bounds = array<i64: 2, 64, 256>}, {pipeline_mode = #tpu.pipeline_mode<synchronous>, transform_indices = @transform_4, window_bounds = array<i64: 256, 144>}, {pipeline_mode = #tpu.pipeline_mode<synchronous>, transform_indices = @transform_5, window_bounds = array<i64: 2, 36, 32>}, {pipeline_mode = #tpu.pipeline_mode<synchronous>, transform_indices = @transform_6, window_bounds = array<i64: 4, 64>}, {pipeline_mode = #tpu.pipeline_mode<synchronous>, transform_indices = @transform_7, window_bounds = array<i64: 2, 256>}, {pipeline_mode = #tpu.pipeline_mode<synchronous>, transform_indices = @transform_8, window_bounds = array<i64: 64, 64>}, {pipeline_mode = #tpu.pipeline_mode<synchronous>, transform_indices = @transform_9, window_bounds = array<i64: 256, 256>}, {pipeline_mode = #tpu.pipeline_mode<synchronous>, transform_indices = @transform_10, window_bounds = array<i64: 36, 144>}]} {
    %c0 = arith.constant 0 : index
    %c0_0 = arith.constant 0 : index
    %0 = vector.load %arg9[%c0, %c0_0] : memref<64x64xf32, #tpu.memory_space<vmem>>, vector<64x64xf32>
    %c0_1 = arith.constant 0 : index
    %c0_2 = arith.constant 0 : index
    %1 = vector.load %arg7[%c0_1, %c0_2] : memref<4x64xf32, #tpu.memory_space<vmem>>, vector<4x64xf32>
    %c0_3 = arith.constant 0 : index
    %c0_4 = arith.constant 0 : index
    %c0_5 = arith.constant 0 : index
    %2 = vector.load %arg2[%c0_3, %c0_4, %c0_5] : memref<2x18x64xf32, #tpu.memory_space<vmem>>, vector<2x16x64xf32>
    %3 = vector.shape_cast %2 : vector<2x16x64xf32> to vector<32x64xf32>
    %c0_6 = arith.constant 0 : index
    %c0_7 = arith.constant 0 : index
    %c0_8 = arith.constant 0 : index
    %4 = vector.load %arg3[%c0_6, %c0_7, %c0_8] : memref<9x64x64xf32, #tpu.memory_space<vmem>>, vector<1x64x64xf32>
    %5 = vector.shape_cast %4 : vector<1x64x64xf32> to vector<64x64xf32>
    %cst = arith.constant dense<0.000000e+00> : vector<32x64xf32>
    %6 = tpu.matmul %3, %5, %cst {dimension_numbers = #tpu.dot_dimension_numbers<[1], [0], [0], [1], [0, 0, 1, 1], [], []>} : vector<32x64xf32>, vector<64x64xf32>, vector<32x64xf32> -> vector<32x64xf32>
    %c0_9 = arith.constant 0 : index
    %c1 = arith.constant 1 : index
    %c0_10 = arith.constant 0 : index
    %7 = vector.load %arg2[%c0_9, %c1, %c0_10] : memref<2x18x64xf32, #tpu.memory_space<vmem>>, vector<2x16x64xf32>
    %8 = vector.shape_cast %7 : vector<2x16x64xf32> to vector<32x64xf32>
    %c1_11 = arith.constant 1 : index
    %c0_12 = arith.constant 0 : index
    %c0_13 = arith.constant 0 : index
    %9 = vector.load %arg3[%c1_11, %c0_12, %c0_13] : memref<9x64x64xf32, #tpu.memory_space<vmem>>, vector<1x64x64xf32>
    %10 = vector.shape_cast %9 : vector<1x64x64xf32> to vector<64x64xf32>
    %cst_14 = arith.constant dense<0.000000e+00> : vector<32x64xf32>
    %11 = tpu.matmul %8, %10, %cst_14 {dimension_numbers = #tpu.dot_dimension_numbers<[1], [0], [0], [1], [0, 0, 1, 1], [], []>} : vector<32x64xf32>, vector<64x64xf32>, vector<32x64xf32> -> vector<32x64xf32>
    %12 = arith.addf %6, %11 : vector<32x64xf32>
    %c0_15 = arith.constant 0 : index
    %c2 = arith.constant 2 : index
    %c0_16 = arith.constant 0 : index
    %13 = vector.load %arg2[%c0_15, %c2, %c0_16] : memref<2x18x64xf32, #tpu.memory_space<vmem>>, vector<2x16x64xf32>
    %14 = vector.shape_cast %13 : vector<2x16x64xf32> to vector<32x64xf32>
    %c2_17 = arith.constant 2 : index
    %c0_18 = arith.constant 0 : index
    %c0_19 = arith.constant 0 : index
    %15 = vector.load %arg3[%c2_17, %c0_18, %c0_19] : memref<9x64x64xf32, #tpu.memory_space<vmem>>, vector<1x64x64xf32>
    %16 = vector.shape_cast %15 : vector<1x64x64xf32> to vector<64x64xf32>
    %cst_20 = arith.constant dense<0.000000e+00> : vector<32x64xf32>
    %17 = tpu.matmul %14, %16, %cst_20 {dimension_numbers = #tpu.dot_dimension_numbers<[1], [0], [0], [1], [0, 0, 1, 1], [], []>} : vector<32x64xf32>, vector<64x64xf32>, vector<32x64xf32> -> vector<32x64xf32>
    %18 = arith.addf %12, %17 : vector<32x64xf32>
    %19 = vector.extract_strided_slice %1 {offsets = [0, 0], sizes = [1, 64], strides = [1, 1]} : vector<4x64xf32> to vector<1x64xf32>
    %20 = vector.extract_strided_slice %1 {offsets = [1, 0], sizes = [1, 64], strides = [1, 1]} : vector<4x64xf32> to vector<1x64xf32>
    %cst_21 = arith.constant dense<0.000000e+00> : vector<64xf32>
    %21 = vector.multi_reduction <add>, %18, %cst_21 [0] : vector<32x64xf32> to vector<64xf32>
    %22 = vector.shape_cast %21 : vector<64xf32> to vector<1x64xf32>
    %cst_22 = arith.constant dense<0.000000e+00> : vector<1x64xf32>
    %23 = tpu.matmul %22, %0, %cst_22 {dimension_numbers = #tpu.dot_dimension_numbers<[1], [0], [0], [1], [0, 0, 1, 1], [], []>} : vector<1x64xf32>, vector<64x64xf32>, vector<1x64xf32> -> vector<1x64xf32>
    %24 = vector.broadcast %23 : vector<1x64xf32> to vector<32x64xf32>
    %25 = arith.subf %18, %24 : vector<32x64xf32>
    %26 = arith.mulf %25, %25 : vector<32x64xf32>
    %cst_23 = arith.constant dense<0.000000e+00> : vector<64xf32>
    %27 = vector.multi_reduction <add>, %26, %cst_23 [0] : vector<32x64xf32> to vector<64xf32>
    %28 = vector.shape_cast %27 : vector<64xf32> to vector<1x64xf32>
    %cst_24 = arith.constant dense<0.000000e+00> : vector<1x64xf32>
    %29 = tpu.matmul %28, %0, %cst_24 {dimension_numbers = #tpu.dot_dimension_numbers<[1], [0], [0], [1], [0, 0, 1, 1], [], []>} : vector<1x64xf32>, vector<64x64xf32>, vector<1x64xf32> -> vector<1x64xf32>
    %cst_25 = arith.constant 9.99999974E-6 : f32
    %30 = vector.broadcast %cst_25 : f32 to vector<1x64xf32>
    %31 = arith.addf %29, %30 : vector<1x64xf32>
    %32 = math.rsqrt %31 : vector<1x64xf32>
    %33 = arith.mulf %32, %19 : vector<1x64xf32>
    %34 = vector.broadcast %33 : vector<1x64xf32> to vector<32x64xf32>
    %35 = arith.mulf %25, %34 : vector<32x64xf32>
    %36 = vector.broadcast %20 : vector<1x64xf32> to vector<32x64xf32>
    %37 = arith.addf %35, %36 : vector<32x64xf32>
    %cst_26 = arith.constant 0.000000e+00 : f32
    %38 = vector.broadcast %cst_26 : f32 to vector<32x64xf32>
    %39 = arith.maximumf %37, %38 : vector<32x64xf32>
    %cst_27 = arith.constant 0.000000e+00 : f32
    %40 = vector.broadcast %cst_27 : f32 to vector<2x1x64xf32>
    %c0_28 = arith.constant 0 : index
    %c0_29 = arith.constant 0 : index
    %c0_30 = arith.constant 0 : index
    %41 = vector.load %arg12[%c0_28, %c0_29, %c0_30] : memref<2x18x64xf32, #tpu.memory_space<vmem>>, vector<2x1x64xf32>
    tpu.vector_store %arg12[%c0_28, %c0_29, %c0_30], %40 {strides = array<i32>} : memref<2x18x64xf32, #tpu.memory_space<vmem>>, vector<2x1x64xf32>,
    %c0_31 = arith.constant 0 : index
    %c17 = arith.constant 17 : index
    %c0_32 = arith.constant 0 : index
    %42 = vector.load %arg12[%c0_31, %c17, %c0_32] : memref<2x18x64xf32, #tpu.memory_space<vmem>>, vector<2x1x64xf32>
    tpu.vector_store %arg12[%c0_31, %c17, %c0_32], %40 {strides = array<i32>} : memref<2x18x64xf32, #tpu.memory_space<vmem>>, vector<2x1x64xf32>,
    %43 = vector.shape_cast %39 : vector<32x64xf32> to vector<2x16x64xf32>
    %c0_33 = arith.constant 0 : index
    %c1_34 = arith.constant 1 : index
    %c0_35 = arith.constant 0 : index
    %44 = vector.load %arg12[%c0_33, %c1_34, %c0_35] : memref<2x18x64xf32, #tpu.memory_space<vmem>>, vector<2x16x64xf32>
    tpu.vector_store %arg12[%c0_33, %c1_34, %c0_35], %43 {strides = array<i32>} : memref<2x18x64xf32, #tpu.memory_space<vmem>>, vector<2x16x64xf32>,
    %c0_36 = arith.constant 0 : index
    %c0_37 = arith.constant 0 : index
    %c0_38 = arith.constant 0 : index
    %45 = vector.load %arg1[%c0_36, %c0_37, %c0_38] : memref<2x18x64xf32, #tpu.memory_space<vmem>>, vector<2x16x64xf32>
    %46 = vector.shape_cast %45 : vector<2x16x64xf32> to vector<32x64xf32>
    %c3 = arith.constant 3 : index
    %c0_39 = arith.constant 0 : index
    %c0_40 = arith.constant 0 : index
    %47 = vector.load %arg3[%c3, %c0_39, %c0_40] : memref<9x64x64xf32, #tpu.memory_space<vmem>>, vector<1x64x64xf32>
    %48 = vector.shape_cast %47 : vector<1x64x64xf32> to vector<64x64xf32>
    %cst_41 = arith.constant dense<0.000000e+00> : vector<32x64xf32>
    %49 = tpu.matmul %46, %48, %cst_41 {dimension_numbers = #tpu.dot_dimension_numbers<[1], [0], [0], [1], [0, 0, 1, 1], [], []>} : vector<32x64xf32>, vector<64x64xf32>, vector<32x64xf32> -> vector<32x64xf32>
    %c0_42 = arith.constant 0 : index
    %c1_43 = arith.constant 1 : index
    %c0_44 = arith.constant 0 : index
    %50 = vector.load %arg1[%c0_42, %c1_43, %c0_44] : memref<2x18x64xf32, #tpu.memory_space<vmem>>, vector<2x16x64xf32>
    %51 = vector.shape_cast %50 : vector<2x16x64xf32> to vector<32x64xf32>
    %c4 = arith.constant 4 : index
    %c0_45 = arith.constant 0 : index
    %c0_46 = arith.constant 0 : index
    %52 = vector.load %arg3[%c4, %c0_45, %c0_46] : memref<9x64x64xf32, #tpu.memory_space<vmem>>, vector<1x64x64xf32>
    %53 = vector.shape_cast %52 : vector<1x64x64xf32> to vector<64x64xf32>
    %cst_47 = arith.constant dense<0.000000e+00> : vector<32x64xf32>
    %54 = tpu.matmul %51, %53, %cst_47 {dimension_numbers = #tpu.dot_dimension_numbers<[1], [0], [0], [1], [0, 0, 1, 1], [], []>} : vector<32x64xf32>, vector<64x64xf32>, vector<32x64xf32> -> vector<32x64xf32>
    %55 = arith.addf %49, %54 : vector<32x64xf32>
    %c0_48 = arith.constant 0 : index
    %c2_49 = arith.constant 2 : index
    %c0_50 = arith.constant 0 : index
    %56 = vector.load %arg1[%c0_48, %c2_49, %c0_50] : memref<2x18x64xf32, #tpu.memory_space<vmem>>, vector<2x16x64xf32>
    %57 = vector.shape_cast %56 : vector<2x16x64xf32> to vector<32x64xf32>
    %c5 = arith.constant 5 : index
    %c0_51 = arith.constant 0 : index
    %c0_52 = arith.constant 0 : index
    %58 = vector.load %arg3[%c5, %c0_51, %c0_52] : memref<9x64x64xf32, #tpu.memory_space<vmem>>, vector<1x64x64xf32>
    %59 = vector.shape_cast %58 : vector<1x64x64xf32> to vector<64x64xf32>
    %cst_53 = arith.constant dense<0.000000e+00> : vector<32x64xf32>
    %60 = tpu.matmul %57, %59, %cst_53 {dimension_numbers = #tpu.dot_dimension_numbers<[1], [0], [0], [1], [0, 0, 1, 1], [], []>} : vector<32x64xf32>, vector<64x64xf32>, vector<32x64xf32> -> vector<32x64xf32>
    %61 = arith.addf %55, %60 : vector<32x64xf32>
    %c0_54 = arith.constant 0 : index
    %c0_55 = arith.constant 0 : index
    %c0_56 = arith.constant 0 : index
    %62 = vector.load %arg12[%c0_54, %c0_55, %c0_56] : memref<2x18x64xf32, #tpu.memory_space<vmem>>, vector<2x16x64xf32>
    %63 = vector.shape_cast %62 : vector<2x16x64xf32> to vector<32x64xf32>
    %c6 = arith.constant 6 : index
    %c0_57 = arith.constant 0 : index
    %c0_58 = arith.constant 0 : index
    %64 = vector.load %arg3[%c6, %c0_57, %c0_58] : memref<9x64x64xf32, #tpu.memory_space<vmem>>, vector<1x64x64xf32>
    %65 = vector.shape_cast %64 : vector<1x64x64xf32> to vector<64x64xf32>
    %cst_59 = arith.constant dense<0.000000e+00> : vector<32x64xf32>
    %66 = tpu.matmul %63, %65, %cst_59 {dimension_numbers = #tpu.dot_dimension_numbers<[1], [0], [0], [1], [0, 0, 1, 1], [], []>} : vector<32x64xf32>, vector<64x64xf32>, vector<32x64xf32> -> vector<32x64xf32>
    %c0_60 = arith.constant 0 : index
    %c1_61 = arith.constant 1 : index
    %c0_62 = arith.constant 0 : index
    %67 = vector.load %arg12[%c0_60, %c1_61, %c0_62] : memref<2x18x64xf32, #tpu.memory_space<vmem>>, vector<2x16x64xf32>
    %68 = vector.shape_cast %67 : vector<2x16x64xf32> to vector<32x64xf32>
    %c7 = arith.constant 7 : index
    %c0_63 = arith.constant 0 : index
    %c0_64 = arith.constant 0 : index
    %69 = vector.load %arg3[%c7, %c0_63, %c0_64] : memref<9x64x64xf32, #tpu.memory_space<vmem>>, vector<1x64x64xf32>
    %70 = vector.shape_cast %69 : vector<1x64x64xf32> to vector<64x64xf32>
    %cst_65 = arith.constant dense<0.000000e+00> : vector<32x64xf32>
    %71 = tpu.matmul %68, %70, %cst_65 {dimension_numbers = #tpu.dot_dimension_numbers<[1], [0], [0], [1], [0, 0, 1, 1], [], []>} : vector<32x64xf32>, vector<64x64xf32>, vector<32x64xf32> -> vector<32x64xf32>
    %72 = arith.addf %66, %71 : vector<32x64xf32>
    %c0_66 = arith.constant 0 : index
    %c2_67 = arith.constant 2 : index
    %c0_68 = arith.constant 0 : index
    %73 = vector.load %arg12[%c0_66, %c2_67, %c0_68] : memref<2x18x64xf32, #tpu.memory_space<vmem>>, vector<2x16x64xf32>
    %74 = vector.shape_cast %73 : vector<2x16x64xf32> to vector<32x64xf32>
    %c8 = arith.constant 8 : index
    %c0_69 = arith.constant 0 : index
    %c0_70 = arith.constant 0 : index
    %75 = vector.load %arg3[%c8, %c0_69, %c0_70] : memref<9x64x64xf32, #tpu.memory_space<vmem>>, vector<1x64x64xf32>
    %76 = vector.shape_cast %75 : vector<1x64x64xf32> to vector<64x64xf32>
    %cst_71 = arith.constant dense<0.000000e+00> : vector<32x64xf32>
    %77 = tpu.matmul %74, %76, %cst_71 {dimension_numbers = #tpu.dot_dimension_numbers<[1], [0], [0], [1], [0, 0, 1, 1], [], []>} : vector<32x64xf32>, vector<64x64xf32>, vector<32x64xf32> -> vector<32x64xf32>
    %78 = arith.addf %72, %77 : vector<32x64xf32>
    %79 = arith.addf %61, %78 : vector<32x64xf32>
    %80 = vector.extract_strided_slice %1 {offsets = [2, 0], sizes = [1, 64], strides = [1, 1]} : vector<4x64xf32> to vector<1x64xf32>
    %81 = vector.extract_strided_slice %1 {offsets = [3, 0], sizes = [1, 64], strides = [1, 1]} : vector<4x64xf32> to vector<1x64xf32>
    %cst_72 = arith.constant dense<0.000000e+00> : vector<64xf32>
    %82 = vector.multi_reduction <add>, %79, %cst_72 [0] : vector<32x64xf32> to vector<64xf32>
    %83 = vector.shape_cast %82 : vector<64xf32> to vector<1x64xf32>
    %cst_73 = arith.constant dense<0.000000e+00> : vector<1x64xf32>
    %84 = tpu.matmul %83, %0, %cst_73 {dimension_numbers = #tpu.dot_dimension_numbers<[1], [0], [0], [1], [0, 0, 1, 1], [], []>} : vector<1x64xf32>, vector<64x64xf32>, vector<1x64xf32> -> vector<1x64xf32>
    %85 = vector.broadcast %84 : vector<1x64xf32> to vector<32x64xf32>
    %86 = arith.subf %79, %85 : vector<32x64xf32>
    %87 = arith.mulf %86, %86 : vector<32x64xf32>
    %cst_74 = arith.constant dense<0.000000e+00> : vector<64xf32>
    %88 = vector.multi_reduction <add>, %87, %cst_74 [0] : vector<32x64xf32> to vector<64xf32>
    %89 = vector.shape_cast %88 : vector<64xf32> to vector<1x64xf32>
    %cst_75 = arith.constant dense<0.000000e+00> : vector<1x64xf32>
    %90 = tpu.matmul %89, %0, %cst_75 {dimension_numbers = #tpu.dot_dimension_numbers<[1], [0], [0], [1], [0, 0, 1, 1], [], []>} : vector<1x64xf32>, vector<64x64xf32>, vector<1x64xf32> -> vector<1x64xf32>
    %cst_76 = arith.constant 9.99999974E-6 : f32
    %91 = vector.broadcast %cst_76 : f32 to vector<1x64xf32>
    %92 = arith.addf %90, %91 : vector<1x64xf32>
    %93 = math.rsqrt %92 : vector<1x64xf32>
    %94 = arith.mulf %93, %80 : vector<1x64xf32>
    %95 = vector.broadcast %94 : vector<1x64xf32> to vector<32x64xf32>
    %96 = arith.mulf %86, %95 : vector<32x64xf32>
    %97 = vector.broadcast %81 : vector<1x64xf32> to vector<32x64xf32>
    %98 = arith.addf %96, %97 : vector<32x64xf32>
    %cst_77 = arith.constant 0.000000e+00 : f32
    %99 = vector.broadcast %cst_77 : f32 to vector<32x64xf32>
    %100 = arith.maximumf %98, %99 : vector<32x64xf32>
    %c0_78 = arith.constant 0 : index
    %c0_79 = arith.constant 0 : index
    %c0_80 = arith.constant 0 : index
    %101 = vector.load %arg4[%c0_78, %c0_79, %c0_80] : memref<2x64x256xf32, #tpu.memory_space<vmem>>, vector<1x64x256xf32>
    %102 = vector.shape_cast %101 : vector<1x64x256xf32> to vector<64x256xf32>
    %cst_81 = arith.constant dense<0.000000e+00> : vector<32x256xf32>
    %103 = tpu.matmul %100, %102, %cst_81 {dimension_numbers = #tpu.dot_dimension_numbers<[1], [0], [0], [1], [0, 0, 1, 1], [], []>} : vector<32x64xf32>, vector<64x256xf32>, vector<32x256xf32> -> vector<32x256xf32>
    %c1_82 = arith.constant 1 : index
    %c0_83 = arith.constant 0 : index
    %c0_84 = arith.constant 0 : index
    %104 = vector.load %arg4[%c1_82, %c0_83, %c0_84] : memref<2x64x256xf32, #tpu.memory_space<vmem>>, vector<1x64x256xf32>
    %105 = vector.shape_cast %104 : vector<1x64x256xf32> to vector<64x256xf32>
    %cst_85 = arith.constant dense<0.000000e+00> : vector<32x256xf32>
    %106 = tpu.matmul %100, %105, %cst_85 {dimension_numbers = #tpu.dot_dimension_numbers<[1], [0], [0], [1], [0, 0, 1, 1], [], []>} : vector<32x64xf32>, vector<64x256xf32>, vector<32x256xf32> -> vector<32x256xf32>
    %c0_86 = arith.constant 0 : index
    %c0_87 = arith.constant 0 : index
    %107 = vector.load %arg10[%c0_86, %c0_87] : memref<256x256xf32, #tpu.memory_space<vmem>>, vector<256x256xf32>
    %c0_88 = arith.constant 0 : index
    %c0_89 = arith.constant 0 : index
    %108 = vector.load %arg8[%c0_88, %c0_89] : memref<2x256xf32, #tpu.memory_space<vmem>>, vector<2x256xf32>
    %cst_90 = arith.constant dense<0.000000e+00> : vector<256xf32>
    %109 = vector.multi_reduction <add>, %103, %cst_90 [0] : vector<32x256xf32> to vector<256xf32>
    %110 = vector.shape_cast %109 : vector<256xf32> to vector<1x256xf32>
    %cst_91 = arith.constant dense<0.000000e+00> : vector<256xf32>
    %111 = vector.multi_reduction <add>, %106, %cst_91 [0] : vector<32x256xf32> to vector<256xf32>
    %112 = vector.shape_cast %111 : vector<256xf32> to vector<1x256xf32>
    %113 = arith.addf %110, %112 : vector<1x256xf32>
    %cst_92 = arith.constant dense<0.000000e+00> : vector<1x256xf32>
    %114 = tpu.matmul %113, %107, %cst_92 {dimension_numbers = #tpu.dot_dimension_numbers<[1], [0], [0], [1], [0, 0, 1, 1], [], []>} : vector<1x256xf32>, vector<256x256xf32>, vector<1x256xf32> -> vector<1x256xf32>
    %115 = vector.broadcast %114 : vector<1x256xf32> to vector<32x256xf32>
    %116 = arith.subf %103, %115 : vector<32x256xf32>
    %117 = vector.broadcast %114 : vector<1x256xf32> to vector<32x256xf32>
    %118 = arith.subf %106, %117 : vector<32x256xf32>
    %119 = arith.mulf %116, %116 : vector<32x256xf32>
    %cst_93 = arith.constant dense<0.000000e+00> : vector<256xf32>
    %120 = vector.multi_reduction <add>, %119, %cst_93 [0] : vector<32x256xf32> to vector<256xf32>
    %121 = vector.shape_cast %120 : vector<256xf32> to vector<1x256xf32>
    %122 = arith.mulf %118, %118 : vector<32x256xf32>
    %cst_94 = arith.constant dense<0.000000e+00> : vector<256xf32>
    %123 = vector.multi_reduction <add>, %122, %cst_94 [0] : vector<32x256xf32> to vector<256xf32>
    %124 = vector.shape_cast %123 : vector<256xf32> to vector<1x256xf32>
    %125 = arith.addf %121, %124 : vector<1x256xf32>
    %cst_95 = arith.constant dense<0.000000e+00> : vector<1x256xf32>
    %126 = tpu.matmul %125, %107, %cst_95 {dimension_numbers = #tpu.dot_dimension_numbers<[1], [0], [0], [1], [0, 0, 1, 1], [], []>} : vector<1x256xf32>, vector<256x256xf32>, vector<1x256xf32> -> vector<1x256xf32>
    %cst_96 = arith.constant 9.99999974E-6 : f32
    %127 = vector.broadcast %cst_96 : f32 to vector<1x256xf32>
    %128 = arith.addf %126, %127 : vector<1x256xf32>
    %129 = math.rsqrt %128 : vector<1x256xf32>
    %130 = vector.extract_strided_slice %108 {offsets = [0, 0], sizes = [1, 256], strides = [1, 1]} : vector<2x256xf32> to vector<1x256xf32>
    %131 = arith.mulf %129, %130 : vector<1x256xf32>
    %132 = vector.broadcast %131 : vector<1x256xf32> to vector<32x256xf32>
    %133 = arith.mulf %116, %132 : vector<32x256xf32>
    %134 = vector.extract_strided_slice %108 {offsets = [1, 0], sizes = [1, 256], strides = [1, 1]} : vector<2x256xf32> to vector<1x256xf32>
    %135 = vector.broadcast %134 : vector<1x256xf32> to vector<32x256xf32>
    %136 = arith.addf %133, %135 : vector<32x256xf32>
    %137 = vector.broadcast %131 : vector<1x256xf32> to vector<32x256xf32>
    %138 = arith.mulf %118, %137 : vector<32x256xf32>
    %139 = vector.extract_strided_slice %108 {offsets = [1, 0], sizes = [1, 256], strides = [1, 1]} : vector<2x256xf32> to vector<1x256xf32>
    %140 = vector.broadcast %139 : vector<1x256xf32> to vector<32x256xf32>
    %141 = arith.addf %138, %140 : vector<32x256xf32>
    %cst_97 = arith.constant 0.000000e+00 : f32
    %142 = vector.broadcast %cst_97 : f32 to vector<32x256xf32>
    %143 = arith.cmpf oge, %136, %142 : vector<32x256xf32>
    %cst_98 = arith.constant 0.00999999977 : f32
    %144 = vector.broadcast %cst_98 : f32 to vector<32x256xf32>
    %145 = arith.mulf %144, %136 : vector<32x256xf32>
    %146 = arith.select %143, %136, %145 : vector<32x256xi1>, vector<32x256xf32>
    %cst_99 = arith.constant 0.000000e+00 : f32
    %147 = vector.broadcast %cst_99 : f32 to vector<32x256xf32>
    %148 = arith.cmpf oge, %141, %147 : vector<32x256xf32>
    %cst_100 = arith.constant 0.00999999977 : f32
    %149 = vector.broadcast %cst_100 : f32 to vector<32x256xf32>
    %150 = arith.mulf %149, %141 : vector<32x256xf32>
    %151 = arith.select %148, %141, %150 : vector<32x256xi1>, vector<32x256xf32>
    %c0_101 = arith.constant 0 : index
    %c0_102 = arith.constant 0 : index
    %152 = vector.load %arg5[%c0_101, %c0_102] : memref<256x144xf32, #tpu.memory_space<vmem>>, vector<256x144xf32>
    %cst_103 = arith.constant dense<0.000000e+00> : vector<32x144xf32>
    %153 = tpu.matmul %146, %152, %cst_103 {dimension_numbers = #tpu.dot_dimension_numbers<[1], [0], [0], [1], [0, 0, 1, 1], [], []>} : vector<32x256xf32>, vector<256x144xf32>, vector<32x144xf32> -> vector<32x144xf32>
    %cst_104 = arith.constant dense<0.000000e+00> : vector<32x144xf32>
    %154 = tpu.matmul %151, %152, %cst_104 {dimension_numbers = #tpu.dot_dimension_numbers<[1], [0], [0], [1], [0, 0, 1, 1], [], []>} : vector<32x256xf32>, vector<256x144xf32>, vector<32x144xf32> -> vector<32x144xf32>
    %c0_105 = arith.constant 0 : index
    %c0_106 = arith.constant 0 : index
    %c0_107 = arith.constant 0 : index
    %155 = vector.load %arg6[%c0_105, %c0_106, %c0_107] : memref<2x36x32xf32, #tpu.memory_space<vmem>>, vector<1x36x32xf32>
    %156 = vector.shape_cast %155 : vector<1x36x32xf32> to vector<36x32xf32>
    %cst_108 = arith.constant dense<0.000000e+00> : vector<36x144xf32>
    %157 = tpu.matmul %156, %153, %cst_108 {dimension_numbers = #tpu.dot_dimension_numbers<[1], [0], [0], [1], [0, 0, 1, 1], [], []>} : vector<36x32xf32>, vector<32x144xf32>, vector<36x144xf32> -> vector<36x144xf32>
    %c1_109 = arith.constant 1 : index
    %c0_110 = arith.constant 0 : index
    %c0_111 = arith.constant 0 : index
    %158 = vector.load %arg6[%c1_109, %c0_110, %c0_111] : memref<2x36x32xf32, #tpu.memory_space<vmem>>, vector<1x36x32xf32>
    %159 = vector.shape_cast %158 : vector<1x36x32xf32> to vector<36x32xf32>
    %cst_112 = arith.constant dense<0.000000e+00> : vector<36x144xf32>
    %160 = tpu.matmul %159, %154, %cst_112 {dimension_numbers = #tpu.dot_dimension_numbers<[1], [0], [0], [1], [0, 0, 1, 1], [], []>} : vector<36x32xf32>, vector<32x144xf32>, vector<36x144xf32> -> vector<36x144xf32>
    %161 = arith.addf %157, %160 : vector<36x144xf32>
    %c0_113 = arith.constant 0 : index
    %c0_114 = arith.constant 0 : index
    %162 = vector.load %arg11[%c0_113, %c0_114] : memref<36x144xf32, #tpu.memory_space<vmem>>, vector<36x144xf32>
    tpu.vector_store %arg11[%c0_113, %c0_114], %161 {strides = array<i32>} : memref<36x144xf32, #tpu.memory_space<vmem>>, vector<36x144xf32>,
    return
  }
  func.func @transform_0(%arg0: i32) -> (i32, i32, i32) {
    %c0_i32 = arith.constant 0 : i32
    %c0_i32_0 = arith.constant 0 : i32
    %c0_i32_1 = arith.constant 0 : i32
    %c0_i32_2 = arith.constant 0 : i32
    return %c0_i32, %c0_i32_0, %c0_i32_1 : i32, i32, i32
  }
  func.func @transform_1(%arg0: i32) -> (i32, i32, i32) {
    %c0_i32 = arith.constant 0 : i32
    %c0_i32_0 = arith.constant 0 : i32
    %c0_i32_1 = arith.constant 0 : i32
    %c0_i32_2 = arith.constant 0 : i32
    return %c0_i32, %c0_i32_0, %c0_i32_1 : i32, i32, i32
  }
  func.func @transform_2(%arg0: i32) -> (i32, i32, i32) {
    %c0_i32 = arith.constant 0 : i32
    %c0_i32_0 = arith.constant 0 : i32
    %c0_i32_1 = arith.constant 0 : i32
    %c0_i32_2 = arith.constant 0 : i32
    return %c0_i32, %c0_i32_0, %c0_i32_1 : i32, i32, i32
  }
  func.func @transform_3(%arg0: i32) -> (i32, i32, i32) {
    %c0_i32 = arith.constant 0 : i32
    %c0_i32_0 = arith.constant 0 : i32
    %c0_i32_1 = arith.constant 0 : i32
    %c0_i32_2 = arith.constant 0 : i32
    return %c0_i32, %c0_i32_0, %c0_i32_1 : i32, i32, i32
  }
  func.func @transform_4(%arg0: i32) -> (i32, i32) {
    %c0_i32 = arith.constant 0 : i32
    %c0_i32_0 = arith.constant 0 : i32
    %c0_i32_1 = arith.constant 0 : i32
    return %c0_i32, %c0_i32_0 : i32, i32
  }
  func.func @transform_5(%arg0: i32) -> (i32, i32, i32) {
    %c0_i32 = arith.constant 0 : i32
    %c0_i32_0 = arith.constant 0 : i32
    %c0_i32_1 = arith.constant 0 : i32
    %c0_i32_2 = arith.constant 0 : i32
    return %c0_i32, %c0_i32_0, %c0_i32_1 : i32, i32, i32
  }
  func.func @transform_6(%arg0: i32) -> (i32, i32) {
    %c0_i32 = arith.constant 0 : i32
    %c0_i32_0 = arith.constant 0 : i32
    %c0_i32_1 = arith.constant 0 : i32
    return %c0_i32, %c0_i32_0 : i32, i32
  }
  func.func @transform_7(%arg0: i32) -> (i32, i32) {
    %c0_i32 = arith.constant 0 : i32
    %c0_i32_0 = arith.constant 0 : i32
    %c0_i32_1 = arith.constant 0 : i32
    return %c0_i32, %c0_i32_0 : i32, i32
  }
  func.func @transform_8(%arg0: i32) -> (i32, i32) {
    %c0_i32 = arith.constant 0 : i32
    %c0_i32_0 = arith.constant 0 : i32
    %c0_i32_1 = arith.constant 0 : i32
    return %c0_i32, %c0_i32_0 : i32, i32
  }
  func.func @transform_9(%arg0: i32) -> (i32, i32) {
    %c0_i32 = arith.constant 0 : i32
    %c0_i32_0 = arith.constant 0 : i32
    %c0_i32_1 = arith.constant 0 : i32
    return %c0_i32, %c0_i32_0 : i32, i32
  }
  func.func @transform_10(%arg0: i32) -> (i32, i32) {
    %c0_i32 = arith.constant 0 : i32
    %c0_i32_0 = arith.constant 0 : i32
    %c0_i32_1 = arith.constant 0 : i32
    return %c0_i32, %c0_i32_0 : i32, i32
  }
}

</mosaic_0001>

<llo_original>
// kernel: tile.33
$region0: #{tile.33}
  #allocation0 [shape = 's32[1]{0}', space=sflag, size = 0x4, scoped, tag = 'scoped memory for tile.33']
  %s0 = inlined_call_operand.vmem [shape: f32[4], index: 0, kind: input, shape index: {}]
  %s1 = inlined_call_operand.vmem [shape: f32[16,4], index: 1, kind: output, shape index: {}]
  // Predicated region
  $region2: #{tile.33} parent=0 // pred_check
    _
  $region3: #{tile.33} parent=0 // pred_check_branch
    %3 = sbr.rel (0) target = $region5
  $region4: #{tile.33} parent=0 // pred_region
    _
  $region5: #{tile.33} parent=0 // pred_fallthru
    _
  %v4 = vld [vmem:[%s0] ss:$0 sm:$0xff]
  %5 = vst [vmem:[%s1] sm:$0xff] %v4
  %s6 = scalar_lea.vmem %s1, 8
  %7 = vst [vmem:[%s6] sm:$0xff] %v4

// kernel: tile.46
$region0: #{tile.46}
  %s0 = inlined_call_operand.vmem [shape: f32[16,4], index: 0, kind: input, shape index: {}]
  %s1 = inlined_call_operand.vmem [shape: f32[1,64], index: 1, kind: output, shape index: {}]
  $region1: #{tile.46} parent=0
    #allocation0 [shape = 'u8[4096]{0}', space=vmem, size = 0x1000, scoped, tag = 'scoped mem for output reshape']
    %v2 = vld [vmem:[%s0] sm:$0x1]
    %vm3 = vcmask 31744
    %4 = vst.msk [vmem:[#allocation0] sm:$0x1] %vm3, %v2
    %s5 = scalar_lea.vmem %s0, 15
    %v6 = vld [vmem:[%s5] sm:$0x1]
    %7 = vrot.lane.b32.xlu0 %v6, 60
    %v8 = vpop.permute.xlu0 %7
    %vm9 = vcmask 523744
    %10 = vst.msk [vmem:[#allocation0] sm:$0x1] %vm9, %v8
    %s11 = scalar_lea.vmem %s0, 14
    %v12 = vld [vmem:[%s11] sm:$0x1]
    %13 = vrot.lane.b32.xlu0 %v12, 56
    %v14 = vpop.permute.xlu0 %13
    %vm15 = vcmask 490944
    %16 = vst.msk [vmem:[#allocation0] sm:$0x1] %vm15, %v14
    %s17 = scalar_lea.vmem %s0, 13
    %v18 = vld [vmem:[%s17] sm:$0x1]
    %19 = vrot.lane.b32.xlu0 %v18, 52
    %v20 = vpop.permute.xlu0 %19
    %vm21 = vcmask 458144
    %22 = vst.msk [vmem:[#allocation0] sm:$0x1] %vm21, %v20
    %s23 = scalar_lea.vmem %s0, 12
    %v24 = vld [vmem:[%s23] sm:$0x1]
    %25 = vrot.lane.b32.xlu0 %v24, 48
    %v26 = vpop.permute.xlu0 %25
    %vm27 = vcmask 425344
    %28 = vst.msk [vmem:[#allocation0] sm:$0x1] %vm27, %v26
    %s29 = scalar_lea.vmem %s0, 11
    %v30 = vld [vmem:[%s29] sm:$0x1]
    %31 = vrot.lane.b32.xlu0 %v30, 44
    %v32 = vpop.permute.xlu0 %31
    %vm33 = vcmask 392544
    %34 = vst.msk [vmem:[#allocation0] sm:$0x1] %vm33, %v32
    %s35 = scalar_lea.vmem %s0, 10
    %v36 = vld [vmem:[%s35] sm:$0x1]
    %37 = vrot.lane.b32.xlu0 %v36, 40
    %v38 = vpop.permute.xlu0 %37
    %vm39 = vcmask 359744
    %40 = vst.msk [vmem:[#allocation0] sm:$0x1] %vm39, %v38
    %s41 = scalar_lea.vmem %s0, 9
    %v42 = vld [vmem:[%s41] sm:$0x1]
    %43 = vrot.lane.b32.xlu0 %v42, 36
    %v44 = vpop.permute.xlu0 %43
    %vm45 = vcmask 326944
    %46 = vst.msk [vmem:[#allocation0] sm:$0x1] %vm45, %v44
    %s47 = scalar_lea.vmem %s0, 8
    %v48 = vld [vmem:[%s47] sm:$0x1]
    %49 = vrot.lane.b32.xlu0 %v48, 32
    %v50 = vpop.permute.xlu0 %49
    %vm51 = vcmask 294144
    %52 = vst.msk [vmem:[#allocation0] sm:$0x1] %vm51, %v50
    %s53 = scalar_lea.vmem %s0, 7
    %v54 = vld [vmem:[%s53] sm:$0x1]
    %55 = vrot.lane.b32.xlu0 %v54, 28
    %v56 = vpop.permute.xlu0 %55
    %vm57 = vcmask 261344
    %58 = vst.msk [vmem:[#allocation0] sm:$0x1] %vm57, %v56
    %s59 = scalar_lea.vmem %s0, 6
    %v60 = vld [vmem:[%s59] sm:$0x1]
    %61 = vrot.lane.b32.xlu0 %v60, 24
    %v62 = vpop.permute.xlu0 %61
    %vm63 = vcmask 228544
    %64 = vst.msk [vmem:[#allocation0] sm:$0x1] %vm63, %v62
    %s65 = scalar_lea.vmem %s0, 5
    %v66 = vld [vmem:[%s65] sm:$0x1]
    %67 = vrot.lane.b32.xlu0 %v66, 20
    %v68 = vpop.permute.xlu0 %67
    %vm69 = vcmask 195744
    %70 = vst.msk [vmem:[#allocation0] sm:$0x1] %vm69, %v68
    %s71 = scalar_lea.vmem %s0, 4
    %v72 = vld [vmem:[%s71] sm:$0x1]
    %73 = vrot.lane.b32.xlu0 %v72, 16
    %v74 = vpop.permute.xlu0 %73
    %vm75 = vcmask 162944
    %76 = vst.msk [vmem:[#allocation0] sm:$0x1] %vm75, %v74
    %s77 = scalar_lea.vmem %s0, 3
    %v78 = vld [vmem:[%s77] sm:$0x1]
    %79 = vrot.lane.b32.xlu0 %v78, 12
    %v80 = vpop.permute.xlu0 %79
    %vm81 = vcmask 130144
    %82 = vst.msk [vmem:[#allocation0] sm:$0x1] %vm81, %v80
    %s83 = scalar_lea.vmem %s0, 2
    %v84 = vld [vmem:[%s83] sm:$0x1]
    %85 = vrot.lane.b32.xlu0 %v84, 8
    %v86 = vpop.permute.xlu0 %85
    %vm87 = vcmask 97344
    %88 = vst.msk [vmem:[#allocation0] sm:$0x1] %vm87, %v86
    %s89 = scalar_lea.vmem %s0, 1
    %v90 = vld [vmem:[%s89] sm:$0x1]
    %91 = vrot.lane.b32.xlu0 %v90, 4
    %v92 = vpop.permute.xlu0 %91
    %vm93 = vcmask 64544
    %94 = vst.msk [vmem:[#allocation0] sm:$0x1] %vm93, %v92
    %s96 = sshllo.u32 0, 1
    %v98 = vld [vmem:[#allocation0] sm:%s96]
    %s99 = sshllo.u32 0, 1
    %100 = vst [vmem:[%s1] sm:%s99] %v98

// kernel: tile.53
$region0: #{tile.53}
  #allocation0 [shape = 's32[1]{0}', space=sflag, size = 0x4, scoped, tag = 'scoped memory for tile.53']
  %s0 = inlined_call_operand.vmem [shape: f32[8], index: 0, kind: input, shape index: {}]
  %s1 = inlined_call_operand.vmem [shape: f32[32,8], index: 1, kind: output, shape index: {}]
  // Predicated region
  $region2: #{tile.53} parent=0 // pred_check
    _
  $region3: #{tile.53} parent=0 // pred_check_branch
    %3 = sbr.rel (0) target = $region5
  $region4: #{tile.53} parent=0 // pred_region
    _
  $region5: #{tile.53} parent=0 // pred_fallthru
    _
  %v4 = vld [vmem:[%s0] ss:$0 sm:$0xff]
  %5 = vst [vmem:[%s1] sm:$0xff] %v4
  %s6 = scalar_lea.vmem %s1, 8
  %7 = vst [vmem:[%s6] sm:$0xff] %v4
  %s8 = scalar_lea.vmem %s1, 16
  %9 = vst [vmem:[%s8] sm:$0xff] %v4
  %s10 = scalar_lea.vmem %s1, 24
  %11 = vst [vmem:[%s10] sm:$0xff] %v4

// kernel: tile.58
$region0: #{tile.58}
  %s0 = inlined_call_operand.vmem [shape: f32[32,8], index: 0, kind: input, shape index: {}]
  %s1 = inlined_call_operand.vmem [shape: f32[1,256], index: 1, kind: output, shape index: {}]
  $region1: #{tile.58} parent=0
    #allocation0 [shape = 'u8[8192]{0}', space=vmem, size = 0x2000, scoped, tag = 'scoped mem for output reshape']
    %s2 = smov 3
    %v3 = vld [vmem:[%s0] ss:$16 sm:%s2]
    %vm4 = vcmask 64512
    %5 = vst.msk [vmem:[#allocation0] ss:$8 sm:$0x3] %vm4, %v3
    %s6 = scalar_lea.vmem %s0, 15
    %s7 = smov 3
    %v8 = vld [vmem:[%s6] ss:$16 sm:%s7]
    %9 = vrot.lane.b32.xlu0 %v8, 120
    %v10 = vpop.permute.xlu0 %9
    %vm11 = vcmask 1048512
    %12 = vst.msk [vmem:[#allocation0] ss:$8 sm:$0x3] %vm11, %v10
    %s13 = scalar_lea.vmem %s0, 14
    %s14 = smov 3
    %v15 = vld [vmem:[%s13] ss:$16 sm:%s14]
    %16 = vrot.lane.b32.xlu0 %v15, 112
    %v17 = vpop.permute.xlu0 %16
    %vm18 = vcmask 982912
    %19 = vst.msk [vmem:[#allocation0] ss:$8 sm:$0x3] %vm18, %v17
    %s20 = scalar_lea.vmem %s0, 13
    %s21 = smov 3
    %v22 = vld [vmem:[%s20] ss:$16 sm:%s21]
    %23 = vrot.lane.b32.xlu0 %v22, 104
    %v24 = vpop.permute.xlu0 %23
    %vm25 = vcmask 917312
    %26 = vst.msk [vmem:[#allocation0] ss:$8 sm:$0x3] %vm25, %v24
    %s27 = scalar_lea.vmem %s0, 12
    %s28 = smov 3
    %v29 = vld [vmem:[%s27] ss:$16 sm:%s28]
    %30 = vrot.lane.b32.xlu0 %v29, 96
    %v31 = vpop.permute.xlu0 %30
    %vm32 = vcmask 851712
    %33 = vst.msk [vmem:[#allocation0] ss:$8 sm:$0x3] %vm32, %v31
    %s34 = scalar_lea.vmem %s0, 11
    %s35 = smov 3
    %v36 = vld [vmem:[%s34] ss:$16 sm:%s35]
    %37 = vrot.lane.b32.xlu0 %v36, 88
    %v38 = vpop.permute.xlu0 %37
    %vm39 = vcmask 786112
    %40 = vst.msk [vmem:[#allocation0] ss:$8 sm:$0x3] %vm39, %v38
    %s41 = scalar_lea.vmem %s0, 10
    %s42 = smov 3
    %v43 = vld [vmem:[%s41] ss:$16 sm:%s42]
    %44 = vrot.lane.b32.xlu0 %v43, 80
    %v45 = vpop.permute.xlu0 %44
    %vm46 = vcmask 720512
    %47 = vst.msk [vmem:[#allocation0] ss:$8 sm:$0x3] %vm46, %v45
    %s48 = scalar_lea.vmem %s0, 9
    %s49 = smov 3
    %v50 = vld [vmem:[%s48] ss:$16 sm:%s49]
    %51 = vrot.lane.b32.xlu0 %v50, 72
    %v52 = vpop.permute.xlu0 %51
    %vm53 = vcmask 654912
    %54 = vst.msk [vmem:[#allocation0] ss:$8 sm:$0x3] %vm53, %v52
    %s55 = scalar_lea.vmem %s0, 8
    %s56 = smov 3
    %v57 = vld [vmem:[%s55] ss:$16 sm:%s56]
    %58 = vrot.lane.b32.xlu0 %v57, 64
    %v59 = vpop.permute.xlu0 %58
    %vm60 = vcmask 589312
    %61 = vst.msk [vmem:[#allocation0] ss:$8 sm:$0x3] %vm60, %v59
    %s62 = scalar_lea.vmem %s0, 7
    %s63 = smov 3
    %v64 = vld [vmem:[%s62] ss:$16 sm:%s63]
    %65 = vrot.lane.b32.xlu0 %v64, 56
    %v66 = vpop.permute.xlu0 %65
    %vm67 = vcmask 523712
    %68 = vst.msk [vmem:[#allocation0] ss:$8 sm:$0x3] %vm67, %v66
    %s69 = scalar_lea.vmem %s0, 6
    %s70 = smov 3
    %v71 = vld [vmem:[%s69] ss:$16 sm:%s70]
    %72 = vrot.lane.b32.xlu0 %v71, 48
    %v73 = vpop.permute.xlu0 %72
    %vm74 = vcmask 458112
    %75 = vst.msk [vmem:[#allocation0] ss:$8 sm:$0x3] %vm74, %v73
    %s76 = scalar_lea.vmem %s0, 5
    %s77 = smov 3
    %v78 = vld [vmem:[%s76] ss:$16 sm:%s77]
    %79 = vrot.lane.b32.xlu0 %v78, 40
    %v80 = vpop.permute.xlu0 %79
    %vm81 = vcmask 392512
    %82 = vst.msk [vmem:[#allocation0] ss:$8 sm:$0x3] %vm81, %v80
    %s83 = scalar_lea.vmem %s0, 4
    %s84 = smov 3
    %v85 = vld [vmem:[%s83] ss:$16 sm:%s84]
    %86 = vrot.lane.b32.xlu0 %v85, 32
    %v87 = vpop.permute.xlu0 %86
    %vm88 = vcmask 326912
    %89 = vst.msk [vmem:[#allocation0] ss:$8 sm:$0x3] %vm88, %v87
    %s90 = scalar_lea.vmem %s0, 3
    %s91 = smov 3
    %v92 = vld [vmem:[%s90] ss:$16 sm:%s91]
    %93 = vrot.lane.b32.xlu0 %v92, 24
    %v94 = vpop.permute.xlu0 %93
    %vm95 = vcmask 261312
    %96 = vst.msk [vmem:[#allocation0] ss:$8 sm:$0x3] %vm95, %v94
    %s97 = scalar_lea.vmem %s0, 2
    %s98 = smov 3
    %v99 = vld [vmem:[%s97] ss:$16 sm:%s98]
    %100 = vrot.lane.b32.xlu0 %v99, 16
    %v101 = vpop.permute.xlu0 %100
    %vm102 = vcmask 195712
    %103 = vst.msk [vmem:[#allocation0] ss:$8 sm:$0x3] %vm102, %v101
    %s104 = scalar_lea.vmem %s0, 1
    %s105 = smov 3
    %v106 = vld [vmem:[%s104] ss:$16 sm:%s105]
    %107 = vrot.lane.b32.xlu0 %v106, 8
    %v108 = vpop.permute.xlu0 %107
    %vm109 = vcmask 130112
    %110 = vst.msk [vmem:[#allocation0] ss:$8 sm:$0x3] %vm109, %v108
    %s112 = sshllo.u32 0, 1
    %v114 = vld [vmem:[#allocation0] sm:%s112]
    %s115 = sshllo.u32 0, 1
    %116 = vst [vmem:[%s1] sm:%s115] %v114
    %s117 = scalar_lea.vmem [#allocation0], 8
    %v118 = vld [vmem:[%s117] sm:%s112]
    %s119 = sshllo.u32 0, 1
    %s120 = scalar_lea.vmem %s1, 1
    %121 = vst [vmem:[%s120] sm:%s119] %v118

// kernel: deconv_block_skip_forward.1
$region0: #{deconv_block_skip_forward.1}
  #allocation0 [shape = 'u32[]', space=smem, size = 0x4, offset = 0x4, fixed_abs, tag = 'smem constant byte address 0x4 - core index']
  #allocation1 [shape = 'u32[144,128]{1,0:T(1,128)}', space=vmem, size = 0x12000, scoped, tag = 'internal scratch']
  #allocation2 [shape = 'f32[2,18,64]{2,1,0:T(8,128)}', space=vmem, size = 0x6000, scoped, tag = 'scratch operand']
  %s0 = inlined_call_operand.vmem [shape: f32[2,18,64], index: 0, kind: input, shape index: {}]
  %s1 = inlined_call_operand.vmem [shape: f32[2,18,64], index: 1, kind: input, shape index: {}]
  %s2 = inlined_call_operand.vmem [shape: f32[9,64,64], index: 2, kind: input, shape index: {}]
  %s3 = inlined_call_operand.vmem [shape: f32[2,64,256], index: 3, kind: input, shape index: {}]
  %s4 = inlined_call_operand.vmem [shape: f32[256,144], index: 4, kind: input, shape index: {}]
  %s5 = inlined_call_operand.vmem [shape: f32[2,36,32], index: 5, kind: input, shape index: {}]
  %s6 = inlined_call_operand.vmem [shape: f32[4,64], index: 6, kind: input, shape index: {}]
  %s7 = inlined_call_operand.vmem [shape: f32[2,256], index: 7, kind: input, shape index: {}]
  %s8 = inlined_call_operand.vmem [shape: f32[64,64], index: 8, kind: input, shape index: {}]
  %s9 = inlined_call_operand.vmem [shape: f32[256,256], index: 9, kind: input, shape index: {}]
  %s10 = inlined_call_operand.vmem [shape: f32[36,144], index: 10, kind: output, shape index: {}]
  %s11 = sld [smem:[#allocation0]]
  $region50: #{deconv_block_skip_forward.1} parent=0
    _
  %s13 = ssub.s32 1, %s11
  %s14 = scalar_select 0, %s13, %s11
  // Predicated region
  $region2: #{deconv_block_skip_forward.1} parent=0 // pred_check
    _
  $region3: #{deconv_block_skip_forward.1} parent=0 // pred_check_branch
    %16 = sbr.rel (0) target = $region5
  $region4: #{deconv_block_skip_forward.1} parent=0 // pred_region
    _
  $region5: #{deconv_block_skip_forward.1} parent=0 // pred_fallthru
    _
  // Predicated region
  $region6: #{deconv_block_skip_forward.1} parent=0 // pred_check
    _
  $region7: #{deconv_block_skip_forward.1} parent=0 // pred_check_branch
    %18 = sbr.rel (0) target = $region9
  $region8: #{deconv_block_skip_forward.1} parent=0 // pred_region
    _
  $region9: #{deconv_block_skip_forward.1} parent=0 // pred_fallthru
    _
  // Predicated region
  $region10: #{deconv_block_skip_forward.1} parent=0 // pred_check
    _
  $region11: #{deconv_block_skip_forward.1} parent=0 // pred_check_branch
    %20 = sbr.rel (0) target = $region13
  $region12: #{deconv_block_skip_forward.1} parent=0 // pred_region
    _
  $region13: #{deconv_block_skip_forward.1} parent=0 // pred_fallthru
    _
  // Predicated region
  $region14: #{deconv_block_skip_forward.1} parent=0 // pred_check
    _
  $region15: #{deconv_block_skip_forward.1} parent=0 // pred_check_branch
    %22 = sbr.rel (0) target = $region17
  $region16: #{deconv_block_skip_forward.1} parent=0 // pred_region
    _
  $region17: #{deconv_block_skip_forward.1} parent=0 // pred_fallthru
    _
  // Predicated region
  $region18: #{deconv_block_skip_forward.1} parent=0 // pred_check
    _
  $region19: #{deconv_block_skip_forward.1} parent=0 // pred_check_branch
    %24 = sbr.rel (0) target = $region21
  $region20: #{deconv_block_skip_forward.1} parent=0 // pred_region
    _
  $region21: #{deconv_block_skip_forward.1} parent=0 // pred_fallthru
    _
  // Predicated region
  $region22: #{deconv_block_skip_forward.1} parent=0 // pred_check
    _
  $region23: #{deconv_block_skip_forward.1} parent=0 // pred_check_branch
    %26 = sbr.rel (0) target = $region25
  $region24: #{deconv_block_skip_forward.1} parent=0 // pred_region
    _
  $region25: #{deconv_block_skip_forward.1} parent=0 // pred_fallthru
    _
  // Predicated region
  $region26: #{deconv_block_skip_forward.1} parent=0 // pred_check
    _
  $region27: #{deconv_block_skip_forward.1} parent=0 // pred_check_branch
    %28 = sbr.rel (0) target = $region29
  $region28: #{deconv_block_skip_forward.1} parent=0 // pred_region
    _
  $region29: #{deconv_block_skip_forward.1} parent=0 // pred_fallthru
    _
  // Predicated region
  $region30: #{deconv_block_skip_forward.1} parent=0 // pred_check
    _
  $region31: #{deconv_block_skip_forward.1} parent=0 // pred_check_branch
    %30 = sbr.rel (0) target = $region33
  $region32: #{deconv_block_skip_forward.1} parent=0 // pred_region
    _
  $region33: #{deconv_block_skip_forward.1} parent=0 // pred_fallthru
    _
  // Predicated region
  $region34: #{deconv_block_skip_forward.1} parent=0 // pred_check
    _
  $region35: #{deconv_block_skip_forward.1} parent=0 // pred_check_branch
    %32 = sbr.rel (0) target = $region37
  $region36: #{deconv_block_skip_forward.1} parent=0 // pred_region
    _
  $region37: #{deconv_block_skip_forward.1} parent=0 // pred_fallthru
    _
  // Predicated region
  $region38: #{deconv_block_skip_forward.1} parent=0 // pred_check
    _
  $region39: #{deconv_block_skip_forward.1} parent=0 // pred_check_branch
    %34 = sbr.rel (0) target = $region41
  $region40: #{deconv_block_skip_forward.1} parent=0 // pred_region
    _
  $region41: #{deconv_block_skip_forward.1} parent=0 // pred_fallthru
    _
  %v35 = vld [vmem:[%s8] sm:$0xff]
  %v36 = vld [vmem:[%s8 + $0x8] sm:$0xff]
  %v37 = vld [vmem:[%s8 + $0x10] sm:$0xff]
  %v38 = vld [vmem:[%s8 + $0x18] sm:$0xff]
  %v39 = vld [vmem:[%s8 + $0x20] sm:$0xff]
  %v40 = vld [vmem:[%s8 + $0x28] sm:$0xff]
  %v41 = vld [vmem:[%s8 + $0x30] sm:$0xff]
  %v42 = vld [vmem:[%s8 + $0x38] sm:$0xff]
  %v43 = vld [vmem:[%s6] sm:$0xf]
  %v44 = vld [vmem:[%s1] sm:$0xff]
  %v45 = vld [vmem:[%s1 + $0x8] sm:$0xff]
  %v46 = vld [vmem:[%s1 + $0x18] sm:$0xff]
  %v47 = vld [vmem:[%s1 + $0x20] sm:$0xff]
  %v48 = vld [vmem:[%s2] sm:$0xff]
  %v49 = vld [vmem:[%s2 + $0x8] sm:$0xff]
  %v50 = vld [vmem:[%s2 + $0x10] sm:$0xff]
  %v51 = vld [vmem:[%s2 + $0x18] sm:$0xff]
  %v52 = vld [vmem:[%s2 + $0x20] sm:$0xff]
  %v53 = vld [vmem:[%s2 + $0x28] sm:$0xff]
  %v54 = vld [vmem:[%s2 + $0x30] sm:$0xff]
  %v55 = vld [vmem:[%s2 + $0x38] sm:$0xff]
  %v56 = vld [vmem:[%s1 + $0x1] sm:$0xff]
  %v57 = vld [vmem:[%s1 + $0x9] sm:$0xff]
  %v58 = vld [vmem:[%s1 + $0x19] sm:$0xff]
  %v59 = vld [vmem:[%s1 + $0x21] sm:$0xff]
  %s60 = scalar_lea.vmem %s2, 64
  %v61 = vld [vmem:[%s60] sm:$0xff]
  %v62 = vld [vmem:[%s60 + $0x8] sm:$0xff]
  %v63 = vld [vmem:[%s60 + $0x10] sm:$0xff]
  %v64 = vld [vmem:[%s60 + $0x18] sm:$0xff]
  %v65 = vld [vmem:[%s60 + $0x20] sm:$0xff]
  %v66 = vld [vmem:[%s60 + $0x28] sm:$0xff]
  %v67 = vld [vmem:[%s60 + $0x30] sm:$0xff]
  %v68 = vld [vmem:[%s60 + $0x38] sm:$0xff]
  %vm69 = vcmask 523264
  %v71 = vsel %vm69, %v56, 0
  %v74 = vsel %vm69, %v57, 0
  %v77 = vsel %vm69, %v58, 0
  %v80 = vsel %vm69, %v59, 0
  %82 = vmatprep.subr.mxu0 0.0
  %83 = vmatpush1.msra.mxu0 %v61
  %84 = vmatprep.subr.mxu0 0.0
  %85 = vmatpush1.msra.mxu0 %v62
  %86 = vmatprep.subr.mxu0 0.0
  %87 = vmatpush1.msra.mxu0 %v63
  %88 = vmatprep.subr.mxu0 0.0
  %89 = vmatpush1.msra.mxu0 %v64
  %90 = vmatprep.subr.mxu0 0.0
  %91 = vmatpush1.msra.mxu0 %v65
  %92 = vmatprep.subr.mxu0 0.0
  %93 = vmatpush1.msra.mxu0 %v66
  %94 = vmatprep.subr.mxu0 0.0
  %95 = vmatpush1.msra.mxu0 %v67
  %96 = vmatprep.subr.mxu0 0.0
  %97 = vmatpush1.msra.mxu0 %v68
  %98 = vmatprep.subr.mxu0 0.0
  %99 = vmatpush1.msra.mxu0 0.0
  %100 = vmatprep.subr.mxu0 0.0
  %101 = vmatpush1.msra.mxu0 0.0
  %102 = vmatprep.subr.mxu0 0.0
  %103 = vmatpush1.msra.mxu0 0.0
  %104 = vmatprep.subr.mxu0 0.0
  %105 = vmatpush1.msra.mxu0 0.0
  %106 = vmatprep.subr.mxu0 0.0
  %107 = vmatpush1.msra.mxu0 0.0
  %108 = vmatprep.subr.mxu0 0.0
  %109 = vmatpush1.msra.mxu0 0.0
  %110 = vmatprep.subr.mxu0 0.0
  %111 = vmatpush1.msra.mxu0 0.0
  %112 = vmatprep.subr.mxu0 0.0
  %113 = vmatpush1.msra.mxu0 0.0
  %114 = vmatprep.subr.mxu0 0.0
  %115 = vmatpush1.msra.mxu0 0.0
  %116 = vmatprep.subr.mxu0 0.0
  %117 = vmatpush1.msra.mxu0 0.0
  %118 = vmatprep.subr.mxu0 0.0
  %119 = vmatpush1.msra.mxu0 0.0
  %120 = vmatprep.subr.mxu0 0.0
  %121 = vmatpush1.msra.mxu0 0.0
  %122 = vmatprep.subr.mxu0 0.0
  %123 = vmatpush1.msra.mxu0 0.0
  %124 = vmatprep.subr.mxu0 0.0
  %125 = vmatpush1.msra.mxu0 0.0
  %126 = vmatprep.subr.mxu0 0.0
  %127 = vmatpush1.msra.mxu0 0.0
  %128 = vmatprep.subr.mxu0 0.0
  %129 = vmatpush1.msra.mxu0 0.0
  %130 = vmatprep.subr.mxu0 0.0
  %131 = vmatpush1.msra.mxu0 0.0
  %132 = vmatprep.subr.mxu0 0.0
  %133 = vmatpush1.msra.mxu0 0.0
  %134 = vmatprep.subr.mxu0 0.0
  %135 = vmatpush1.msra.mxu0 0.0
  %136 = vmatprep.subr.mxu0 0.0
  %137 = vmatpush1.msra.mxu0 0.0
  %138 = vmatprep.subr.mxu0 0.0
  %139 = vmatpush1.msra.mxu0 0.0
  %140 = vmatprep.subr.mxu0 0.0
  %141 = vmatpush1.msra.mxu0 0.0
  %142 = vmatprep.subr.mxu0 0.0
  %143 = vmatpush1.msra.mxu0 0.0
  %144 = vmatprep.subr.mxu0 0.0
  %145 = vmatpush1.msra.mxu0 0.0
  %146 = vmatprep.mubr.f32.mxu0 0.0
  %147 = vmatmul.mubr.f32.gmra.mrb[0].mxu0 %v71
  %v148 = vpop.f32.mrb[0].mxu0
  %v149 = vadd.f32 0.0, %v148
  %v150 = vpop.f32.mrb[0].mxu0
  %151 = vmatprep.mubr.f32.mxu0 0.0
  %152 = vmatmul.mubr.f32.gmra.mrb[0].mxu0 %v74
  %v153 = vpop.f32.mrb[0].mxu0
  %v154 = vadd.f32 0.0, %v153
  %v155 = vpop.f32.mrb[0].mxu0
  %156 = vmatprep.mubr.f32.mxu0 0.0
  %157 = vmatmul.mubr.f32.gmra.mrb[0].mxu0 %v77
  %v158 = vpop.f32.mrb[0].mxu0
  %v159 = vadd.f32 0.0, %v158
  %v160 = vpop.f32.mrb[0].mxu0
  %161 = vmatprep.mubr.f32.mxu0 0.0
  %162 = vmatmul.mubr.f32.gmra.mrb[0].mxu0 %v80
  %v163 = vpop.f32.mrb[0].mxu0
  %v164 = vadd.f32 0.0, %v163
  %v165 = vpop.f32.mrb[0].mxu0
  %166 = vdwg.mxu0
  %v168 = vsel %vm69, %v44, 0
  %v171 = vsel %vm69, %v45, 0
  %v174 = vsel %vm69, %v46, 0
  %v177 = vsel %vm69, %v47, 0
  %179 = vmatprep.subr.mxu0 0.0
  %180 = vmatpush1.msra.mxu0 %v48
  %181 = vmatprep.subr.mxu0 0.0
  %182 = vmatpush1.msra.mxu0 %v49
  %183 = vmatprep.subr.mxu0 0.0
  %184 = vmatpush1.msra.mxu0 %v50
  %185 = vmatprep.subr.mxu0 0.0
  %186 = vmatpush1.msra.mxu0 %v51
  %187 = vmatprep.subr.mxu0 0.0
  %188 = vmatpush1.msra.mxu0 %v52
  %189 = vmatprep.subr.mxu0 0.0
  %190 = vmatpush1.msra.mxu0 %v53
  %191 = vmatprep.subr.mxu0 0.0
  %192 = vmatpush1.msra.mxu0 %v54
  %193 = vmatprep.subr.mxu0 0.0
  %194 = vmatpush1.msra.mxu0 %v55
  %195 = vmatprep.subr.mxu0 0.0
  %196 = vmatpush1.msra.mxu0 0.0
  %197 = vmatprep.subr.mxu0 0.0
  %198 = vmatpush1.msra.mxu0 0.0
  %199 = vmatprep.subr.mxu0 0.0
  %200 = vmatpush1.msra.mxu0 0.0
  %201 = vmatprep.subr.mxu0 0.0
  %202 = vmatpush1.msra.mxu0 0.0
  %203 = vmatprep.subr.mxu0 0.0
  %204 = vmatpush1.msra.mxu0 0.0
  %205 = vmatprep.subr.mxu0 0.0
  %206 = vmatpush1.msra.mxu0 0.0
  %207 = vmatprep.subr.mxu0 0.0
  %208 = vmatpush1.msra.mxu0 0.0
  %209 = vmatprep.subr.mxu0 0.0
  %210 = vmatpush1.msra.mxu0 0.0
  %211 = vmatprep.subr.mxu0 0.0
  %212 = vmatpush1.msra.mxu0 0.0
  %213 = vmatprep.subr.mxu0 0.0
  %214 = vmatpush1.msra.mxu0 0.0
  %215 = vmatprep.subr.mxu0 0.0
  %216 = vmatpush1.msra.mxu0 0.0
  %217 = vmatprep.subr.mxu0 0.0
  %218 = vmatpush1.msra.mxu0 0.0
  %219 = vmatprep.subr.mxu0 0.0
  %220 = vmatpush1.msra.mxu0 0.0
  %221 = vmatprep.subr.mxu0 0.0
  %222 = vmatpush1.msra.mxu0 0.0
  %223 = vmatprep.subr.mxu0 0.0
  %224 = vmatpush1.msra.mxu0 0.0
  %225 = vmatprep.subr.mxu0 0.0
  %226 = vmatpush1.msra.mxu0 0.0
  %227 = vmatprep.subr.mxu0 0.0
  %228 = vmatpush1.msra.mxu0 0.0
  %229 = vmatprep.subr.mxu0 0.0
  %230 = vmatpush1.msra.mxu0 0.0
  %231 = vmatprep.subr.mxu0 0.0
  %232 = vmatpush1.msra.mxu0 0.0
  %233 = vmatprep.subr.mxu0 0.0
  %234 = vmatpush1.msra.mxu0 0.0
  %235 = vmatprep.subr.mxu0 0.0
  %236 = vmatpush1.msra.mxu0 0.0
  %237 = vmatprep.subr.mxu0 0.0
  %238 = vmatpush1.msra.mxu0 0.0
  %239 = vmatprep.subr.mxu0 0.0
  %240 = vmatpush1.msra.mxu0 0.0
  %241 = vmatprep.subr.mxu0 0.0
  %242 = vmatpush1.msra.mxu0 0.0
  %243 = vmatprep.mubr.f32.mxu0 0.0
  %244 = vmatmul.mubr.f32.gmra.mrb[0].mxu0 %v168
  %v245 = vpop.f32.mrb[0].mxu0
  %v246 = vadd.f32 %v149, %v245
  %v247 = vpop.f32.mrb[0].mxu0
  %248 = vmatprep.mubr.f32.mxu0 0.0
  %249 = vmatmul.mubr.f32.gmra.mrb[0].mxu0 %v171
  %v250 = vpop.f32.mrb[0].mxu0
  %v251 = vadd.f32 %v154, %v250
  %v252 = vpop.f32.mrb[0].mxu0
  %253 = vmatprep.mubr.f32.mxu0 0.0
  %254 = vmatmul.mubr.f32.gmra.mrb[0].mxu0 %v174
  %v255 = vpop.f32.mrb[0].mxu0
  %v256 = vadd.f32 %v159, %v255
  %v257 = vpop.f32.mrb[0].mxu0
  %258 = vmatprep.mubr.f32.mxu0 0.0
  %259 = vmatmul.mubr.f32.gmra.mrb[0].mxu0 %v177
  %v260 = vpop.f32.mrb[0].mxu0
  %v261 = vadd.f32 %v164, %v260
  %v262 = vpop.f32.mrb[0].mxu0
  %263 = vdwg.mxu0
  %v264 = vld [vmem:[%s1 + $0x2] sm:$0xff]
  %v265 = vld [vmem:[%s1 + $0xa] sm:$0xff]
  %v266 = vld [vmem:[%s1 + $0x1a] sm:$0xff]
  %v267 = vld [vmem:[%s1 + $0x22] sm:$0xff]
  %s268 = scalar_lea.vmem %s2, 128
  %v269 = vld [vmem:[%s268] sm:$0xff]
  %v270 = vld [vmem:[%s268 + $0x8] sm:$0xff]
  %v271 = vld [vmem:[%s268 + $0x10] sm:$0xff]
  %v272 = vld [vmem:[%s268 + $0x18] sm:$0xff]
  %v273 = vld [vmem:[%s268 + $0x20] sm:$0xff]
  %v274 = vld [vmem:[%s268 + $0x28] sm:$0xff]
  %v275 = vld [vmem:[%s268 + $0x30] sm:$0xff]
  %v276 = vld [vmem:[%s268 + $0x38] sm:$0xff]
  %v278 = vsel %vm69, %v264, 0
  %v281 = vsel %vm69, %v265, 0
  %v284 = vsel %vm69, %v266, 0
  %v287 = vsel %vm69, %v267, 0
  %289 = vmatprep.subr.mxu0 0.0
  %290 = vmatpush1.msra.mxu0 %v269
  %291 = vmatprep.subr.mxu0 0.0
  %292 = vmatpush1.msra.mxu0 %v270
  %293 = vmatprep.subr.mxu0 0.0
  %294 = vmatpush1.msra.mxu0 %v271
  %295 = vmatprep.subr.mxu0 0.0
  %296 = vmatpush1.msra.mxu0 %v272
  %297 = vmatprep.subr.mxu0 0.0
  %298 = vmatpush1.msra.mxu0 %v273
  %299 = vmatprep.subr.mxu0 0.0
  %300 = vmatpush1.msra.mxu0 %v274
  %301 = vmatprep.subr.mxu0 0.0
  %302 = vmatpush1.msra.mxu0 %v275
  %303 = vmatprep.subr.mxu0 0.0
  %304 = vmatpush1.msra.mxu0 %v276
  %305 = vmatprep.subr.mxu0 0.0
  %306 = vmatpush1.msra.mxu0 0.0
  %307 = vmatprep.subr.mxu0 0.0
  %308 = vmatpush1.msra.mxu0 0.0
  %309 = vmatprep.subr.mxu0 0.0
  %310 = vmatpush1.msra.mxu0 0.0
  %311 = vmatprep.subr.mxu0 0.0
  %312 = vmatpush1.msra.mxu0 0.0
  %313 = vmatprep.subr.mxu0 0.0
  %314 = vmatpush1.msra.mxu0 0.0
  %315 = vmatprep.subr.mxu0 0.0
  %316 = vmatpush1.msra.mxu0 0.0
  %317 = vmatprep.subr.mxu0 0.0
  %318 = vmatpush1.msra.mxu0 0.0
  %319 = vmatprep.subr.mxu0 0.0
  %320 = vmatpush1.msra.mxu0 0.0
  %321 = vmatprep.subr.mxu0 0.0
  %322 = vmatpush1.msra.mxu0 0.0
  %323 = vmatprep.subr.mxu0 0.0
  %324 = vmatpush1.msra.mxu0 0.0
  %325 = vmatprep.subr.mxu0 0.0
  %326 = vmatpush1.msra.mxu0 0.0
  %327 = vmatprep.subr.mxu0 0.0
  %328 = vmatpush1.msra.mxu0 0.0
  %329 = vmatprep.subr.mxu0 0.0
  %330 = vmatpush1.msra.mxu0 0.0
  %331 = vmatprep.subr.mxu0 0.0
  %332 = vmatpush1.msra.mxu0 0.0
  %333 = vmatprep.subr.mxu0 0.0
  %334 = vmatpush1.msra.mxu0 0.0
  %335 = vmatprep.subr.mxu0 0.0
  %336 = vmatpush1.msra.mxu0 0.0
  %337 = vmatprep.subr.mxu0 0.0
  %338 = vmatpush1.msra.mxu0 0.0
  %339 = vmatprep.subr.mxu0 0.0
  %340 = vmatpush1.msra.mxu0 0.0
  %341 = vmatprep.subr.mxu0 0.0
  %342 = vmatpush1.msra.mxu0 0.0
  %343 = vmatprep.subr.mxu0 0.0
  %344 = vmatpush1.msra.mxu0 0.0
  %345 = vmatprep.subr.mxu0 0.0
  %346 = vmatpush1.msra.mxu0 0.0
  %347 = vmatprep.subr.mxu0 0.0
  %348 = vmatpush1.msra.mxu0 0.0
  %349 = vmatprep.subr.mxu0 0.0
  %350 = vmatpush1.msra.mxu0 0.0
  %351 = vmatprep.subr.mxu0 0.0
  %352 = vmatpush1.msra.mxu0 0.0
  %353 = vmatprep.mubr.f32.mxu0 0.0
  %354 = vmatmul.mubr.f32.gmra.mrb[0].mxu0 %v278
  %v355 = vpop.f32.mrb[0].mxu0
  %v356 = vadd.f32 0.0, %v355
  %v357 = vpop.f32.mrb[0].mxu0
  %358 = vmatprep.mubr.f32.mxu0 0.0
  %359 = vmatmul.mubr.f32.gmra.mrb[0].mxu0 %v281
  %v360 = vpop.f32.mrb[0].mxu0
  %v361 = vadd.f32 0.0, %v360
  %v362 = vpop.f32.mrb[0].mxu0
  %363 = vmatprep.mubr.f32.mxu0 0.0
  %364 = vmatmul.mubr.f32.gmra.mrb[0].mxu0 %v284
  %v365 = vpop.f32.mrb[0].mxu0
  %v366 = vadd.f32 0.0, %v365
  %v367 = vpop.f32.mrb[0].mxu0
  %368 = vmatprep.mubr.f32.mxu0 0.0
  %369 = vmatmul.mubr.f32.gmra.mrb[0].mxu0 %v287
  %v370 = vpop.f32.mrb[0].mxu0
  %v371 = vadd.f32 0.0, %v370
  %v372 = vpop.f32.mrb[0].mxu0
  %373 = vdwg.mxu0
  %v374 = vadd.f32 %v246, %v356
  %v375 = vadd.f32 %v251, %v361
  %v376 = vadd.f32 %v256, %v366
  %v377 = vadd.f32 %v261, %v371
  %v378 = vsel %vm69, %v374, 0.0
  %v379 = vsel %vm69, %v375, 0.0
  %v380 = vadd.f32 %v378, %v379
  %v381 = vsel %vm69, %v376, 0.0
  %v382 = vadd.f32 %v380, %v381
  %v383 = vsel %vm69, %v377, 0.0
  %v384 = vadd.f32 %v382, %v383
  %v385 = vrot.slane %v384, 4
  %v386 = vadd.f32 %v384, %v385
  %v387 = vrot.slane %v386, 2
  %v388 = vadd.f32 %v386, %v387
  %v389 = vrot.slane %v388, 1
  %v390 = vadd.f32 %v388, %v389
  %v392 = vsel %vm69, %v390, 0
  %394 = vmatprep.subr.mxu0 0.0
  %395 = vmatpush1.msra.mxu0 %v35
  %396 = vmatprep.subr.mxu0 0.0
  %397 = vmatpush1.msra.mxu0 %v36
  %398 = vmatprep.subr.mxu0 0.0
  %399 = vmatpush1.msra.mxu0 %v37
  %400 = vmatprep.subr.mxu0 0.0
  %401 = vmatpush1.msra.mxu0 %v38
  %402 = vmatprep.subr.mxu0 0.0
  %403 = vmatpush1.msra.mxu0 %v39
  %404 = vmatprep.subr.mxu0 0.0
  %405 = vmatpush1.msra.mxu0 %v40
  %406 = vmatprep.subr.mxu0 0.0
  %407 = vmatpush1.msra.mxu0 %v41
  %408 = vmatprep.subr.mxu0 0.0
  %409 = vmatpush1.msra.mxu0 %v42
  %410 = vmatprep.subr.mxu0 0.0
  %411 = vmatpush1.msra.mxu0 0.0
  %412 = vmatprep.subr.mxu0 0.0
  %413 = vmatpush1.msra.mxu0 0.0
  %414 = vmatprep.subr.mxu0 0.0
  %415 = vmatpush1.msra.mxu0 0.0
  %416 = vmatprep.subr.mxu0 0.0
  %417 = vmatpush1.msra.mxu0 0.0
  %418 = vmatprep.subr.mxu0 0.0
  %419 = vmatpush1.msra.mxu0 0.0
  %420 = vmatprep.subr.mxu0 0.0
  %421 = vmatpush1.msra.mxu0 0.0
  %422 = vmatprep.subr.mxu0 0.0
  %423 = vmatpush1.msra.mxu0 0.0
  %424 = vmatprep.subr.mxu0 0.0
  %425 = vmatpush1.msra.mxu0 0.0
  %426 = vmatprep.subr.mxu0 0.0
  %427 = vmatpush1.msra.mxu0 0.0
  %428 = vmatprep.subr.mxu0 0.0
  %429 = vmatpush1.msra.mxu0 0.0
  %430 = vmatprep.subr.mxu0 0.0
  %431 = vmatpush1.msra.mxu0 0.0
  %432 = vmatprep.subr.mxu0 0.0
  %433 = vmatpush1.msra.mxu0 0.0
  %434 = vmatprep.subr.mxu0 0.0
  %435 = vmatpush1.msra.mxu0 0.0
  %436 = vmatprep.subr.mxu0 0.0
  %437 = vmatpush1.msra.mxu0 0.0
  %438 = vmatprep.subr.mxu0 0.0
  %439 = vmatpush1.msra.mxu0 0.0
  %440 = vmatprep.subr.mxu0 0.0
  %441 = vmatpush1.msra.mxu0 0.0
  %442 = vmatprep.subr.mxu0 0.0
  %443 = vmatpush1.msra.mxu0 0.0
  %444 = vmatprep.subr.mxu0 0.0
  %445 = vmatpush1.msra.mxu0 0.0
  %446 = vmatprep.subr.mxu0 0.0
  %447 = vmatpush1.msra.mxu0 0.0
  %448 = vmatprep.subr.mxu0 0.0
  %449 = vmatpush1.msra.mxu0 0.0
  %450 = vmatprep.subr.mxu0 0.0
  %451 = vmatpush1.msra.mxu0 0.0
  %452 = vmatprep.subr.mxu0 0.0
  %453 = vmatpush1.msra.mxu0 0.0
  %454 = vmatprep.subr.mxu0 0.0
  %455 = vmatpush1.msra.mxu0 0.0
  %456 = vmatprep.subr.mxu0 0.0
  %457 = vmatpush1.msra.mxu0 0.0
  %458 = vmatprep.mubr.f32.mxu0 0.0
  %459 = vmatmul.mubr.f32.gmra.mrb[0].mxu0 %v392
  %v460 = vpop.f32.mrb[0].mxu0
  %v461 = vadd.f32 0.0, %v460
  %v462 = vpop.f32.mrb[0].mxu0
  %463 = vdwg.mxu0
  %v464 = vlaneseq
  %v465 = vshrl.u32 %v464, 7
  %v466 = vsub.s32 0, %v465
  %v467 = vrot.slane %v461, %v466
  %v468 = vsub.f32 %v374, %v467
  %v469 = vsub.f32 %v375, %v467
  %v470 = vsub.f32 %v376, %v467
  %v471 = vsub.f32 %v377, %v467
  %v472 = vmul.f32 %v468, %v468
  %v473 = vmul.f32 %v469, %v469
  %v474 = vmul.f32 %v470, %v470
  %v475 = vmul.f32 %v471, %v471
  %v476 = vsel %vm69, %v472, 0.0
  %v477 = vsel %vm69, %v473, 0.0
  %v478 = vadd.f32 %v476, %v477
  %v479 = vsel %vm69, %v474, 0.0
  %v480 = vadd.f32 %v478, %v479
  %v481 = vsel %vm69, %v475, 0.0
  %v482 = vadd.f32 %v480, %v481
  %v483 = vrot.slane %v482, 4
  %v484 = vadd.f32 %v482, %v483
  %v485 = vrot.slane %v484, 2
  %v486 = vadd.f32 %v484, %v485
  %v487 = vrot.slane %v486, 1
  %v488 = vadd.f32 %v486, %v487
  %v490 = vsel %vm69, %v488, 0
  %492 = vmatprep.subr.mxu0 0.0
  %493 = vmatpush1.msra.mxu0 %v35
  %494 = vmatprep.subr.mxu0 0.0
  %495 = vmatpush1.msra.mxu0 %v36
  %496 = vmatprep.subr.mxu0 0.0
  %497 = vmatpush1.msra.mxu0 %v37
  %498 = vmatprep.subr.mxu0 0.0
  %499 = vmatpush1.msra.mxu0 %v38
  %500 = vmatprep.subr.mxu0 0.0
  %501 = vmatpush1.msra.mxu0 %v39
  %502 = vmatprep.subr.mxu0 0.0
  %503 = vmatpush1.msra.mxu0 %v40
  %504 = vmatprep.subr.mxu0 0.0
  %505 = vmatpush1.msra.mxu0 %v41
  %506 = vmatprep.subr.mxu0 0.0
  %507 = vmatpush1.msra.mxu0 %v42
  %508 = vmatprep.subr.mxu0 0.0
  %509 = vmatpush1.msra.mxu0 0.0
  %510 = vmatprep.subr.mxu0 0.0
  %511 = vmatpush1.msra.mxu0 0.0
  %512 = vmatprep.subr.mxu0 0.0
  %513 = vmatpush1.msra.mxu0 0.0
  %514 = vmatprep.subr.mxu0 0.0
  %515 = vmatpush1.msra.mxu0 0.0
  %516 = vmatprep.subr.mxu0 0.0
  %517 = vmatpush1.msra.mxu0 0.0
  %518 = vmatprep.subr.mxu0 0.0
  %519 = vmatpush1.msra.mxu0 0.0
  %520 = vmatprep.subr.mxu0 0.0
  %521 = vmatpush1.msra.mxu0 0.0
  %522 = vmatprep.subr.mxu0 0.0
  %523 = vmatpush1.msra.mxu0 0.0
  %524 = vmatprep.subr.mxu0 0.0
  %525 = vmatpush1.msra.mxu0 0.0
  %526 = vmatprep.subr.mxu0 0.0
  %527 = vmatpush1.msra.mxu0 0.0
  %528 = vmatprep.subr.mxu0 0.0
  %529 = vmatpush1.msra.mxu0 0.0
  %530 = vmatprep.subr.mxu0 0.0
  %531 = vmatpush1.msra.mxu0 0.0
  %532 = vmatprep.subr.mxu0 0.0
  %533 = vmatpush1.msra.mxu0 0.0
  %534 = vmatprep.subr.mxu0 0.0
  %535 = vmatpush1.msra.mxu0 0.0
  %536 = vmatprep.subr.mxu0 0.0
  %537 = vmatpush1.msra.mxu0 0.0
  %538 = vmatprep.subr.mxu0 0.0
  %539 = vmatpush1.msra.mxu0 0.0
  %540 = vmatprep.subr.mxu0 0.0
  %541 = vmatpush1.msra.mxu0 0.0
  %542 = vmatprep.subr.mxu0 0.0
  %543 = vmatpush1.msra.mxu0 0.0
  %544 = vmatprep.subr.mxu0 0.0
  %545 = vmatpush1.msra.mxu0 0.0
  %546 = vmatprep.subr.mxu0 0.0
  %547 = vmatpush1.msra.mxu0 0.0
  %548 = vmatprep.subr.mxu0 0.0
  %549 = vmatpush1.msra.mxu0 0.0
  %550 = vmatprep.subr.mxu0 0.0
  %551 = vmatpush1.msra.mxu0 0.0
  %552 = vmatprep.subr.mxu0 0.0
  %553 = vmatpush1.msra.mxu0 0.0
  %554 = vmatprep.subr.mxu0 0.0
  %555 = vmatpush1.msra.mxu0 0.0
  %556 = vmatprep.mubr.f32.mxu0 0.0
  %557 = vmatmul.mubr.f32.gmra.mrb[0].mxu0 %v490
  %v558 = vpop.f32.mrb[0].mxu0
  %v559 = vadd.f32 1e-05, %v558
  %v560 = vpop.f32.mrb[0].mxu0
  %561 = vdwg.mxu0
  %v562 = vrsqrt.pop %v559
  %v563 = vmul.f32 %v562, %v43
  %v564 = vlaneseq
  %v565 = vshrl.u32 %v564, 7
  %v566 = vsub.s32 0, %v565
  %v567 = vrot.slane %v563, %v566
  %v568 = vmul.f32 %v468, %v567
  %v569 = vmul.f32 %v469, %v567
  %v570 = vmul.f32 %v470, %v567
  %v571 = vmul.f32 %v471, %v567
  %v572 = vlaneseq
  %v573 = vshrl.u32 %v572, 7
  %v574 = vsub.s32 1, %v573
  %v575 = vrot.slane %v43, %v574
  %v576 = vadd.f32 %v568, %v575
  %v577 = vadd.f32 %v569, %v575
  %v578 = vadd.f32 %v570, %v575
  %v579 = vadd.f32 %v571, %v575
  %v580 = vmax.f32 %v576, 0.0
  %v581 = vmax.f32 %v577, 0.0
  %v582 = vmax.f32 %v578, 0.0
  %v583 = vmax.f32 %v579, 0.0
  %vm584 = vcmask 516096
  %585 = vst.msk [vmem:[#allocation2] sm:$0x1] %vm584, 0.0
  %586 = vst.msk [vmem:[#allocation2 + $0x18] sm:$0x1] %vm584, 0.0
  %587 = vst.msk [vmem:[#allocation2 + $0x11] sm:$0x1] %vm584, 0.0
  %588 = vst.msk [vmem:[#allocation2 + $0x29] sm:$0x1] %vm584, 0.0
  %589 = vst.msk [vmem:[#allocation2 + $0x1] sm:$0xff] %vm69, %v580
  %590 = vst.msk [vmem:[#allocation2 + $0x9] sm:$0xff] %vm69, %v581
  %591 = vst.msk [vmem:[#allocation2 + $0x19] sm:$0xff] %vm69, %v582
  %592 = vst.msk [vmem:[#allocation2 + $0x21] sm:$0xff] %vm69, %v583
  %v593 = vld [vmem:[%s0] sm:$0xff]
  %v594 = vld [vmem:[%s0 + $0x8] sm:$0xff]
  %v595 = vld [vmem:[%s0 + $0x18] sm:$0xff]
  %v596 = vld [vmem:[%s0 + $0x20] sm:$0xff]
  %s597 = scalar_lea.vmem %s2, 192
  %v598 = vld [vmem:[%s597] sm:$0xff]
  %v599 = vld [vmem:[%s597 + $0x8] sm:$0xff]
  %v600 = vld [vmem:[%s597 + $0x10] sm:$0xff]
  %v601 = vld [vmem:[%s597 + $0x18] sm:$0xff]
  %v602 = vld [vmem:[%s597 + $0x20] sm:$0xff]
  %v603 = vld [vmem:[%s597 + $0x28] sm:$0xff]
  %v604 = vld [vmem:[%s597 + $0x30] sm:$0xff]
  %v605 = vld [vmem:[%s597 + $0x38] sm:$0xff]
  %v606 = vld [vmem:[%s0 + $0x1] sm:$0xff]
  %v607 = vld [vmem:[%s0 + $0x9] sm:$0xff]
  %v608 = vld [vmem:[%s0 + $0x19] sm:$0xff]
  %v609 = vld [vmem:[%s0 + $0x21] sm:$0xff]
  %s610 = scalar_lea.vmem %s2, 256
  %v611 = vld [vmem:[%s610] sm:$0xff]
  %v612 = vld [vmem:[%s610 + $0x8] sm:$0xff]
  %v613 = vld [vmem:[%s610 + $0x10] sm:$0xff]
  %v614 = vld [vmem:[%s610 + $0x18] sm:$0xff]
  %v615 = vld [vmem:[%s610 + $0x20] sm:$0xff]
  %v616 = vld [vmem:[%s610 + $0x28] sm:$0xff]
  %v617 = vld [vmem:[%s610 + $0x30] sm:$0xff]
  %v618 = vld [vmem:[%s610 + $0x38] sm:$0xff]
  %v620 = vsel %vm69, %v606, 0
  %v623 = vsel %vm69, %v607, 0
  %v626 = vsel %vm69, %v608, 0
  %v629 = vsel %vm69, %v609, 0
  %631 = vmatprep.subr.mxu0 0.0
  %632 = vmatpush1.msra.mxu0 %v611
  %633 = vmatprep.subr.mxu0 0.0
  %634 = vmatpush1.msra.mxu0 %v612
  %635 = vmatprep.subr.mxu0 0.0
  %636 = vmatpush1.msra.mxu0 %v613
  %637 = vmatprep.subr.mxu0 0.0
  %638 = vmatpush1.msra.mxu0 %v614
  %639 = vmatprep.subr.mxu0 0.0
  %640 = vmatpush1.msra.mxu0 %v615
  %641 = vmatprep.subr.mxu0 0.0
  %642 = vmatpush1.msra.mxu0 %v616
  %643 = vmatprep.subr.mxu0 0.0
  %644 = vmatpush1.msra.mxu0 %v617
  %645 = vmatprep.subr.mxu0 0.0
  %646 = vmatpush1.msra.mxu0 %v618
  %647 = vmatprep.subr.mxu0 0.0
  %648 = vmatpush1.msra.mxu0 0.0
  %649 = vmatprep.subr.mxu0 0.0
  %650 = vmatpush1.msra.mxu0 0.0
  %651 = vmatprep.subr.mxu0 0.0
  %652 = vmatpush1.msra.mxu0 0.0
  %653 = vmatprep.subr.mxu0 0.0
  %654 = vmatpush1.msra.mxu0 0.0
  %655 = vmatprep.subr.mxu0 0.0
  %656 = vmatpush1.msra.mxu0 0.0
  %657 = vmatprep.subr.mxu0 0.0
  %658 = vmatpush1.msra.mxu0 0.0
  %659 = vmatprep.subr.mxu0 0.0
  %660 = vmatpush1.msra.mxu0 0.0
  %661 = vmatprep.subr.mxu0 0.0
  %662 = vmatpush1.msra.mxu0 0.0
  %663 = vmatprep.subr.mxu0 0.0
  %664 = vmatpush1.msra.mxu0 0.0
  %665 = vmatprep.subr.mxu0 0.0
  %666 = vmatpush1.msra.mxu0 0.0
  %667 = vmatprep.subr.mxu0 0.0
  %668 = vmatpush1.msra.mxu0 0.0
  %669 = vmatprep.subr.mxu0 0.0
  %670 = vmatpush1.msra.mxu0 0.0
  %671 = vmatprep.subr.mxu0 0.0
  %672 = vmatpush1.msra.mxu0 0.0
  %673 = vmatprep.subr.mxu0 0.0
  %674 = vmatpush1.msra.mxu0 0.0
  %675 = vmatprep.subr.mxu0 0.0
  %676 = vmatpush1.msra.mxu0 0.0
  %677 = vmatprep.subr.mxu0 0.0
  %678 = vmatpush1.msra.mxu0 0.0
  %679 = vmatprep.subr.mxu0 0.0
  %680 = vmatpush1.msra.mxu0 0.0
  %681 = vmatprep.subr.mxu0 0.0
  %682 = vmatpush1.msra.mxu0 0.0
  %683 = vmatprep.subr.mxu0 0.0
  %684 = vmatpush1.msra.mxu0 0.0
  %685 = vmatprep.subr.mxu0 0.0
  %686 = vmatpush1.msra.mxu0 0.0
  %687 = vmatprep.subr.mxu0 0.0
  %688 = vmatpush1.msra.mxu0 0.0
  %689 = vmatprep.subr.mxu0 0.0
  %690 = vmatpush1.msra.mxu0 0.0
  %691 = vmatprep.subr.mxu0 0.0
  %692 = vmatpush1.msra.mxu0 0.0
  %693 = vmatprep.subr.mxu0 0.0
  %694 = vmatpush1.msra.mxu0 0.0
  %695 = vmatprep.mubr.f32.mxu0 0.0
  %696 = vmatmul.mubr.f32.gmra.mrb[0].mxu0 %v620
  %v697 = vpop.f32.mrb[0].mxu0
  %v698 = vadd.f32 0.0, %v697
  %v699 = vpop.f32.mrb[0].mxu0
  %700 = vmatprep.mubr.f32.mxu0 0.0
  %701 = vmatmul.mubr.f32.gmra.mrb[0].mxu0 %v623
  %v702 = vpop.f32.mrb[0].mxu0
  %v703 = vadd.f32 0.0, %v702
  %v704 = vpop.f32.mrb[0].mxu0
  %705 = vmatprep.mubr.f32.mxu0 0.0
  %706 = vmatmul.mubr.f32.gmra.mrb[0].mxu0 %v626
  %v707 = vpop.f32.mrb[0].mxu0
  %v708 = vadd.f32 0.0, %v707
  %v709 = vpop.f32.mrb[0].mxu0
  %710 = vmatprep.mubr.f32.mxu0 0.0
  %711 = vmatmul.mubr.f32.gmra.mrb[0].mxu0 %v629
  %v712 = vpop.f32.mrb[0].mxu0
  %v713 = vadd.f32 0.0, %v712
  %v714 = vpop.f32.mrb[0].mxu0
  %715 = vdwg.mxu0
  %v717 = vsel %vm69, %v593, 0
  %v720 = vsel %vm69, %v594, 0
  %v723 = vsel %vm69, %v595, 0
  %v726 = vsel %vm69, %v596, 0
  %728 = vmatprep.subr.mxu0 0.0
  %729 = vmatpush1.msra.mxu0 %v598
  %730 = vmatprep.subr.mxu0 0.0
  %731 = vmatpush1.msra.mxu0 %v599
  %732 = vmatprep.subr.mxu0 0.0
  %733 = vmatpush1.msra.mxu0 %v600
  %734 = vmatprep.subr.mxu0 0.0
  %735 = vmatpush1.msra.mxu0 %v601
  %736 = vmatprep.subr.mxu0 0.0
  %737 = vmatpush1.msra.mxu0 %v602
  %738 = vmatprep.subr.mxu0 0.0
  %739 = vmatpush1.msra.mxu0 %v603
  %740 = vmatprep.subr.mxu0 0.0
  %741 = vmatpush1.msra.mxu0 %v604
  %742 = vmatprep.subr.mxu0 0.0
  %743 = vmatpush1.msra.mxu0 %v605
  %744 = vmatprep.subr.mxu0 0.0
  %745 = vmatpush1.msra.mxu0 0.0
  %746 = vmatprep.subr.mxu0 0.0
  %747 = vmatpush1.msra.mxu0 0.0
  %748 = vmatprep.subr.mxu0 0.0
  %749 = vmatpush1.msra.mxu0 0.0
  %750 = vmatprep.subr.mxu0 0.0
  %751 = vmatpush1.msra.mxu0 0.0
  %752 = vmatprep.subr.mxu0 0.0
  %753 = vmatpush1.msra.mxu0 0.0
  %754 = vmatprep.subr.mxu0 0.0
  %755 = vmatpush1.msra.mxu0 0.0
  %756 = vmatprep.subr.mxu0 0.0
  %757 = vmatpush1.msra.mxu0 0.0
  %758 = vmatprep.subr.mxu0 0.0
  %759 = vmatpush1.msra.mxu0 0.0
  %760 = vmatprep.subr.mxu0 0.0
  %761 = vmatpush1.msra.mxu0 0.0
  %762 = vmatprep.subr.mxu0 0.0
  %763 = vmatpush1.msra.mxu0 0.0
  %764 = vmatprep.subr.mxu0 0.0
  %765 = vmatpush1.msra.mxu0 0.0
  %766 = vmatprep.subr.mxu0 0.0
  %767 = vmatpush1.msra.mxu0 0.0
  %768 = vmatprep.subr.mxu0 0.0
  %769 = vmatpush1.msra.mxu0 0.0
  %770 = vmatprep.subr.mxu0 0.0
  %771 = vmatpush1.msra.mxu0 0.0
  %772 = vmatprep.subr.mxu0 0.0
  %773 = vmatpush1.msra.mxu0 0.0
  %774 = vmatprep.subr.mxu0 0.0
  %775 = vmatpush1.msra.mxu0 0.0
  %776 = vmatprep.subr.mxu0 0.0
  %777 = vmatpush1.msra.mxu0 0.0
  %778 = vmatprep.subr.mxu0 0.0
  %779 = vmatpush1.msra.mxu0 0.0
  %780 = vmatprep.subr.mxu0 0.0
  %781 = vmatpush1.msra.mxu0 0.0
  %782 = vmatprep.subr.mxu0 0.0
  %783 = vmatpush1.msra.mxu0 0.0
  %784 = vmatprep.subr.mxu0 0.0
  %785 = vmatpush1.msra.mxu0 0.0
  %786 = vmatprep.subr.mxu0 0.0
  %787 = vmatpush1.msra.mxu0 0.0
  %788 = vmatprep.subr.mxu0 0.0
  %789 = vmatpush1.msra.mxu0 0.0
  %790 = vmatprep.subr.mxu0 0.0
  %791 = vmatpush1.msra.mxu0 0.0
  %792 = vmatprep.mubr.f32.mxu0 0.0
  %793 = vmatmul.mubr.f32.gmra.mrb[0].mxu0 %v717
  %v794 = vpop.f32.mrb[0].mxu0
  %v795 = vadd.f32 %v698, %v794
  %v796 = vpop.f32.mrb[0].mxu0
  %797 = vmatprep.mubr.f32.mxu0 0.0
  %798 = vmatmul.mubr.f32.gmra.mrb[0].mxu0 %v720
  %v799 = vpop.f32.mrb[0].mxu0
  %v800 = vadd.f32 %v703, %v799
  %v801 = vpop.f32.mrb[0].mxu0
  %802 = vmatprep.mubr.f32.mxu0 0.0
  %803 = vmatmul.mubr.f32.gmra.mrb[0].mxu0 %v723
  %v804 = vpop.f32.mrb[0].mxu0
  %v805 = vadd.f32 %v708, %v804
  %v806 = vpop.f32.mrb[0].mxu0
  %807 = vmatprep.mubr.f32.mxu0 0.0
  %808 = vmatmul.mubr.f32.gmra.mrb[0].mxu0 %v726
  %v809 = vpop.f32.mrb[0].mxu0
  %v810 = vadd.f32 %v713, %v809
  %v811 = vpop.f32.mrb[0].mxu0
  %812 = vdwg.mxu0
  %v813 = vld [vmem:[%s0 + $0x2] sm:$0xff]
  %v814 = vld [vmem:[%s0 + $0xa] sm:$0xff]
  %v815 = vld [vmem:[%s0 + $0x1a] sm:$0xff]
  %v816 = vld [vmem:[%s0 + $0x22] sm:$0xff]
  %s817 = scalar_lea.vmem %s2, 320
  %v818 = vld [vmem:[%s817] sm:$0xff]
  %v819 = vld [vmem:[%s817 + $0x8] sm:$0xff]
  %v820 = vld [vmem:[%s817 + $0x10] sm:$0xff]
  %v821 = vld [vmem:[%s817 + $0x18] sm:$0xff]
  %v822 = vld [vmem:[%s817 + $0x20] sm:$0xff]
  %v823 = vld [vmem:[%s817 + $0x28] sm:$0xff]
  %v824 = vld [vmem:[%s817 + $0x30] sm:$0xff]
  %v825 = vld [vmem:[%s817 + $0x38] sm:$0xff]
  %v827 = vsel %vm69, %v813, 0
  %v830 = vsel %vm69, %v814, 0
  %v833 = vsel %vm69, %v815, 0
  %v836 = vsel %vm69, %v816, 0
  %838 = vmatprep.subr.mxu0 0.0
  %839 = vmatpush1.msra.mxu0 %v818
  %840 = vmatprep.subr.mxu0 0.0
  %841 = vmatpush1.msra.mxu0 %v819
  %842 = vmatprep.subr.mxu0 0.0
  %843 = vmatpush1.msra.mxu0 %v820
  %844 = vmatprep.subr.mxu0 0.0
  %845 = vmatpush1.msra.mxu0 %v821
  %846 = vmatprep.subr.mxu0 0.0
  %847 = vmatpush1.msra.mxu0 %v822
  %848 = vmatprep.subr.mxu0 0.0
  %849 = vmatpush1.msra.mxu0 %v823
  %850 = vmatprep.subr.mxu0 0.0
  %851 = vmatpush1.msra.mxu0 %v824
  %852 = vmatprep.subr.mxu0 0.0
  %853 = vmatpush1.msra.mxu0 %v825
  %854 = vmatprep.subr.mxu0 0.0
  %855 = vmatpush1.msra.mxu0 0.0
  %856 = vmatprep.subr.mxu0 0.0
  %857 = vmatpush1.msra.mxu0 0.0
  %858 = vmatprep.subr.mxu0 0.0
  %859 = vmatpush1.msra.mxu0 0.0
  %860 = vmatprep.subr.mxu0 0.0
  %861 = vmatpush1.msra.mxu0 0.0
  %862 = vmatprep.subr.mxu0 0.0
  %863 = vmatpush1.msra.mxu0 0.0
  %864 = vmatprep.subr.mxu0 0.0
  %865 = vmatpush1.msra.mxu0 0.0
  %866 = vmatprep.subr.mxu0 0.0
  %867 = vmatpush1.msra.mxu0 0.0
  %868 = vmatprep.subr.mxu0 0.0
  %869 = vmatpush1.msra.mxu0 0.0
  %870 = vmatprep.subr.mxu0 0.0
  %871 = vmatpush1.msra.mxu0 0.0
  %872 = vmatprep.subr.mxu0 0.0
  %873 = vmatpush1.msra.mxu0 0.0
  %874 = vmatprep.subr.mxu0 0.0
  %875 = vmatpush1.msra.mxu0 0.0
  %876 = vmatprep.subr.mxu0 0.0
  %877 = vmatpush1.msra.mxu0 0.0
  %878 = vmatprep.subr.mxu0 0.0
  %879 = vmatpush1.msra.mxu0 0.0
  %880 = vmatprep.subr.mxu0 0.0
  %881 = vmatpush1.msra.mxu0 0.0
  %882 = vmatprep.subr.mxu0 0.0
  %883 = vmatpush1.msra.mxu0 0.0
  %884 = vmatprep.subr.mxu0 0.0
  %885 = vmatpush1.msra.mxu0 0.0
  %886 = vmatprep.subr.mxu0 0.0
  %887 = vmatpush1.msra.mxu0 0.0
  %888 = vmatprep.subr.mxu0 0.0
  %889 = vmatpush1.msra.mxu0 0.0
  %890 = vmatprep.subr.mxu0 0.0
  %891 = vmatpush1.msra.mxu0 0.0
  %892 = vmatprep.subr.mxu0 0.0
  %893 = vmatpush1.msra.mxu0 0.0
  %894 = vmatprep.subr.mxu0 0.0
  %895 = vmatpush1.msra.mxu0 0.0
  %896 = vmatprep.subr.mxu0 0.0
  %897 = vmatpush1.msra.mxu0 0.0
  %898 = vmatprep.subr.mxu0 0.0
  %899 = vmatpush1.msra.mxu0 0.0
  %900 = vmatprep.subr.mxu0 0.0
  %901 = vmatpush1.msra.mxu0 0.0
  %902 = vmatprep.mubr.f32.mxu0 0.0
  %903 = vmatmul.mubr.f32.gmra.mrb[0].mxu0 %v827
  %v904 = vpop.f32.mrb[0].mxu0
  %v905 = vadd.f32 0.0, %v904
  %v906 = vpop.f32.mrb[0].mxu0
  %907 = vmatprep.mubr.f32.mxu0 0.0
  %908 = vmatmul.mubr.f32.gmra.mrb[0].mxu0 %v830
  %v909 = vpop.f32.mrb[0].mxu0
  %v910 = vadd.f32 0.0, %v909
  %v911 = vpop.f32.mrb[0].mxu0
  %912 = vmatprep.mubr.f32.mxu0 0.0
  %913 = vmatmul.mubr.f32.gmra.mrb[0].mxu0 %v833
  %v914 = vpop.f32.mrb[0].mxu0
  %v915 = vadd.f32 0.0, %v914
  %v916 = vpop.f32.mrb[0].mxu0
  %917 = vmatprep.mubr.f32.mxu0 0.0
  %918 = vmatmul.mubr.f32.gmra.mrb[0].mxu0 %v836
  %v919 = vpop.f32.mrb[0].mxu0
  %v920 = vadd.f32 0.0, %v919
  %v921 = vpop.f32.mrb[0].mxu0
  %922 = vdwg.mxu0
  %v923 = vadd.f32 %v795, %v905
  %v924 = vadd.f32 %v800, %v910
  %v925 = vadd.f32 %v805, %v915
  %v926 = vadd.f32 %v810, %v920
  %v927 = vld [vmem:[#allocation2] sm:$0xff]
  %v928 = vld [vmem:[#allocation2 + $0x8] sm:$0xff]
  %v929 = vld [vmem:[#allocation2 + $0x18] sm:$0xff]
  %v930 = vld [vmem:[#allocation2 + $0x20] sm:$0xff]
  %s931 = scalar_lea.vmem %s2, 384
  %v932 = vld [vmem:[%s931] sm:$0xff]
  %v933 = vld [vmem:[%s931 + $0x8] sm:$0xff]
  %v934 = vld [vmem:[%s931 + $0x10] sm:$0xff]
  %v935 = vld [vmem:[%s931 + $0x18] sm:$0xff]
  %v936 = vld [vmem:[%s931 + $0x20] sm:$0xff]
  %v937 = vld [vmem:[%s931 + $0x28] sm:$0xff]
  %v938 = vld [vmem:[%s931 + $0x30] sm:$0xff]
  %v939 = vld [vmem:[%s931 + $0x38] sm:$0xff]
  %v940 = vld [vmem:[#allocation2 + $0x1] sm:$0xff]
  %v941 = vld [vmem:[#allocation2 + $0x9] sm:$0xff]
  %v942 = vld [vmem:[#allocation2 + $0x19] sm:$0xff]
  %v943 = vld [vmem:[#allocation2 + $0x21] sm:$0xff]
  %s944 = scalar_lea.vmem %s2, 448
  %v945 = vld [vmem:[%s944] sm:$0xff]
  %v946 = vld [vmem:[%s944 + $0x8] sm:$0xff]
  %v947 = vld [vmem:[%s944 + $0x10] sm:$0xff]
  %v948 = vld [vmem:[%s944 + $0x18] sm:$0xff]
  %v949 = vld [vmem:[%s944 + $0x20] sm:$0xff]
  %v950 = vld [vmem:[%s944 + $0x28] sm:$0xff]
  %v951 = vld [vmem:[%s944 + $0x30] sm:$0xff]
  %v952 = vld [vmem:[%s944 + $0x38] sm:$0xff]
  %v954 = vsel %vm69, %v940, 0
  %v957 = vsel %vm69, %v941, 0
  %v960 = vsel %vm69, %v942, 0
  %v963 = vsel %vm69, %v943, 0
  %965 = vmatprep.subr.mxu0 0.0
  %966 = vmatpush1.msra.mxu0 %v945
  %967 = vmatprep.subr.mxu0 0.0
  %968 = vmatpush1.msra.mxu0 %v946
  %969 = vmatprep.subr.mxu0 0.0
  %970 = vmatpush1.msra.mxu0 %v947
  %971 = vmatprep.subr.mxu0 0.0
  %972 = vmatpush1.msra.mxu0 %v948
  %973 = vmatprep.subr.mxu0 0.0
  %974 = vmatpush1.msra.mxu0 %v949
  %975 = vmatprep.subr.mxu0 0.0
  %976 = vmatpush1.msra.mxu0 %v950
  %977 = vmatprep.subr.mxu0 0.0
  %978 = vmatpush1.msra.mxu0 %v951
  %979 = vmatprep.subr.mxu0 0.0
  %980 = vmatpush1.msra.mxu0 %v952
  %981 = vmatprep.subr.mxu0 0.0
  %982 = vmatpush1.msra.mxu0 0.0
  %983 = vmatprep.subr.mxu0 0.0
  %984 = vmatpush1.msra.mxu0 0.0
  %985 = vmatprep.subr.mxu0 0.0
  %986 = vmatpush1.msra.mxu0 0.0
  %987 = vmatprep.subr.mxu0 0.0
  %988 = vmatpush1.msra.mxu0 0.0
  %989 = vmatprep.subr.mxu0 0.0
  %990 = vmatpush1.msra.mxu0 0.0
  %991 = vmatprep.subr.mxu0 0.0
  %992 = vmatpush1.msra.mxu0 0.0
  %993 = vmatprep.subr.mxu0 0.0
  %994 = vmatpush1.msra.mxu0 0.0
  %995 = vmatprep.subr.mxu0 0.0
  %996 = vmatpush1.msra.mxu0 0.0
  %997 = vmatprep.subr.mxu0 0.0
  %998 = vmatpush1.msra.mxu0 0.0
  %999 = vmatprep.subr.mxu0 0.0
  %1000 = vmatpush1.msra.mxu0 0.0
  %1001 = vmatprep.subr.mxu0 0.0
  %1002 = vmatpush1.msra.mxu0 0.0
  %1003 = vmatprep.subr.mxu0 0.0
  %1004 = vmatpush1.msra.mxu0 0.0
  %1005 = vmatprep.subr.mxu0 0.0
  %1006 = vmatpush1.msra.mxu0 0.0
  %1007 = vmatprep.subr.mxu0 0.0
  %1008 = vmatpush1.msra.mxu0 0.0
  %1009 = vmatprep.subr.mxu0 0.0
  %1010 = vmatpush1.msra.mxu0 0.0
  %1011 = vmatprep.subr.mxu0 0.0
  %1012 = vmatpush1.msra.mxu0 0.0
  %1013 = vmatprep.subr.mxu0 0.0
  %1014 = vmatpush1.msra.mxu0 0.0
  %1015 = vmatprep.subr.mxu0 0.0
  %1016 = vmatpush1.msra.mxu0 0.0
  %1017 = vmatprep.subr.mxu0 0.0
  %1018 = vmatpush1.msra.mxu0 0.0
  %1019 = vmatprep.subr.mxu0 0.0
  %1020 = vmatpush1.msra.mxu0 0.0
  %1021 = vmatprep.subr.mxu0 0.0
  %1022 = vmatpush1.msra.mxu0 0.0
  %1023 = vmatprep.subr.mxu0 0.0
  %1024 = vmatpush1.msra.mxu0 0.0
  %1025 = vmatprep.subr.mxu0 0.0
  %1026 = vmatpush1.msra.mxu0 0.0
  %1027 = vmatprep.subr.mxu0 0.0
  %1028 = vmatpush1.msra.mxu0 0.0
  %1029 = vmatprep.mubr.f32.mxu0 0.0
  %1030 = vmatmul.mubr.f32.gmra.mrb[0].mxu0 %v954
  %v1031 = vpop.f32.mrb[0].mxu0
  %v1032 = vadd.f32 0.0, %v1031
  %v1033 = vpop.f32.mrb[0].mxu0
  %1034 = vmatprep.mubr.f32.mxu0 0.0
  %1035 = vmatmul.mubr.f32.gmra.mrb[0].mxu0 %v957
  %v1036 = vpop.f32.mrb[0].mxu0
  %v1037 = vadd.f32 0.0, %v1036
  %v1038 = vpop.f32.mrb[0].mxu0
  %1039 = vmatprep.mubr.f32.mxu0 0.0
  %1040 = vmatmul.mubr.f32.gmra.mrb[0].mxu0 %v960
  %v1041 = vpop.f32.mrb[0].mxu0
  %v1042 = vadd.f32 0.0, %v1041
  %v1043 = vpop.f32.mrb[0].mxu0
  %1044 = vmatprep.mubr.f32.mxu0 0.0
  %1045 = vmatmul.mubr.f32.gmra.mrb[0].mxu0 %v963
  %v1046 = vpop.f32.mrb[0].mxu0
  %v1047 = vadd.f32 0.0, %v1046
  %v1048 = vpop.f32.mrb[0].mxu0
  %1049 = vdwg.mxu0
  %v1051 = vsel %vm69, %v927, 0
  %v1054 = vsel %vm69, %v928, 0
  %v1057 = vsel %vm69, %v929, 0
  %v1060 = vsel %vm69, %v930, 0
  %1062 = vmatprep.subr.mxu0 0.0
  %1063 = vmatpush1.msra.mxu0 %v932
  %1064 = vmatprep.subr.mxu0 0.0
  %1065 = vmatpush1.msra.mxu0 %v933
  %1066 = vmatprep.subr.mxu0 0.0
  %1067 = vmatpush1.msra.mxu0 %v934
  %1068 = vmatprep.subr.mxu0 0.0
  %1069 = vmatpush1.msra.mxu0 %v935
  %1070 = vmatprep.subr.mxu0 0.0
  %1071 = vmatpush1.msra.mxu0 %v936
  %1072 = vmatprep.subr.mxu0 0.0
  %1073 = vmatpush1.msra.mxu0 %v937
  %1074 = vmatprep.subr.mxu0 0.0
  %1075 = vmatpush1.msra.mxu0 %v938
  %1076 = vmatprep.subr.mxu0 0.0
  %1077 = vmatpush1.msra.mxu0 %v939
  %1078 = vmatprep.subr.mxu0 0.0
  %1079 = vmatpush1.msra.mxu0 0.0
  %1080 = vmatprep.subr.mxu0 0.0
  %1081 = vmatpush1.msra.mxu0 0.0
  %1082 = vmatprep.subr.mxu0 0.0
  %1083 = vmatpush1.msra.mxu0 0.0
  %1084 = vmatprep.subr.mxu0 0.0
  %1085 = vmatpush1.msra.mxu0 0.0
  %1086 = vmatprep.subr.mxu0 0.0
  %1087 = vmatpush1.msra.mxu0 0.0
  %1088 = vmatprep.subr.mxu0 0.0
  %1089 = vmatpush1.msra.mxu0 0.0
  %1090 = vmatprep.subr.mxu0 0.0
  %1091 = vmatpush1.msra.mxu0 0.0
  %1092 = vmatprep.subr.mxu0 0.0
  %1093 = vmatpush1.msra.mxu0 0.0
  %1094 = vmatprep.subr.mxu0 0.0
  %1095 = vmatpush1.msra.mxu0 0.0
  %1096 = vmatprep.subr.mxu0 0.0
  %1097 = vmatpush1.msra.mxu0 0.0
  %1098 = vmatprep.subr.mxu0 0.0
  %1099 = vmatpush1.msra.mxu0 0.0
  %1100 = vmatprep.subr.mxu0 0.0
  %1101 = vmatpush1.msra.mxu0 0.0
  %1102 = vmatprep.subr.mxu0 0.0
  %1103 = vmatpush1.msra.mxu0 0.0
  %1104 = vmatprep.subr.mxu0 0.0
  %1105 = vmatpush1.msra.mxu0 0.0
  %1106 = vmatprep.subr.mxu0 0.0
  %1107 = vmatpush1.msra.mxu0 0.0
  %1108 = vmatprep.subr.mxu0 0.0
  %1109 = vmatpush1.msra.mxu0 0.0
  %1110 = vmatprep.subr.mxu0 0.0
  %1111 = vmatpush1.msra.mxu0 0.0
  %1112 = vmatprep.subr.mxu0 0.0
  %1113 = vmatpush1.msra.mxu0 0.0
  %1114 = vmatprep.subr.mxu0 0.0
  %1115 = vmatpush1.msra.mxu0 0.0
  %1116 = vmatprep.subr.mxu0 0.0
  %1117 = vmatpush1.msra.mxu0 0.0
  %1118 = vmatprep.subr.mxu0 0.0
  %1119 = vmatpush1.msra.mxu0 0.0
  %1120 = vmatprep.subr.mxu0 0.0
  %1121 = vmatpush1.msra.mxu0 0.0
  %1122 = vmatprep.subr.mxu0 0.0
  %1123 = vmatpush1.msra.mxu0 0.0
  %1124 = vmatprep.subr.mxu0 0.0
  %1125 = vmatpush1.msra.mxu0 0.0
  %1126 = vmatprep.mubr.f32.mxu0 0.0
  %1127 = vmatmul.mubr.f32.gmra.mrb[0].mxu0 %v1051
  %v1128 = vpop.f32.mrb[0].mxu0
  %v1129 = vadd.f32 %v1032, %v1128
  %v1130 = vpop.f32.mrb[0].mxu0
  %1131 = vmatprep.mubr.f32.mxu0 0.0
  %1132 = vmatmul.mubr.f32.gmra.mrb[0].mxu0 %v1054
  %v1133 = vpop.f32.mrb[0].mxu0
  %v1134 = vadd.f32 %v1037, %v1133
  %v1135 = vpop.f32.mrb[0].mxu0
  %1136 = vmatprep.mubr.f32.mxu0 0.0
  %1137 = vmatmul.mubr.f32.gmra.mrb[0].mxu0 %v1057
  %v1138 = vpop.f32.mrb[0].mxu0
  %v1139 = vadd.f32 %v1042, %v1138
  %v1140 = vpop.f32.mrb[0].mxu0
  %1141 = vmatprep.mubr.f32.mxu0 0.0
  %1142 = vmatmul.mubr.f32.gmra.mrb[0].mxu0 %v1060
  %v1143 = vpop.f32.mrb[0].mxu0
  %v1144 = vadd.f32 %v1047, %v1143
  %v1145 = vpop.f32.mrb[0].mxu0
  %1146 = vdwg.mxu0
  %v1147 = vld [vmem:[#allocation2 + $0x2] sm:$0xff]
  %v1148 = vld [vmem:[#allocation2 + $0xa] sm:$0xff]
  %v1149 = vld [vmem:[#allocation2 + $0x1a] sm:$0xff]
  %v1150 = vld [vmem:[#allocation2 + $0x22] sm:$0xff]
  %s1151 = scalar_lea.vmem %s2, 512
  %v1152 = vld [vmem:[%s1151] sm:$0xff]
  %v1153 = vld [vmem:[%s1151 + $0x8] sm:$0xff]
  %v1154 = vld [vmem:[%s1151 + $0x10] sm:$0xff]
  %v1155 = vld [vmem:[%s1151 + $0x18] sm:$0xff]
  %v1156 = vld [vmem:[%s1151 + $0x20] sm:$0xff]
  %v1157 = vld [vmem:[%s1151 + $0x28] sm:$0xff]
  %v1158 = vld [vmem:[%s1151 + $0x30] sm:$0xff]
  %v1159 = vld [vmem:[%s1151 + $0x38] sm:$0xff]
  %v1161 = vsel %vm69, %v1147, 0
  %v1164 = vsel %vm69, %v1148, 0
  %v1167 = vsel %vm69, %v1149, 0
  %v1170 = vsel %vm69, %v1150, 0
  %1172 = vmatprep.subr.mxu0 0.0
  %1173 = vmatpush1.msra.mxu0 %v1152
  %1174 = vmatprep.subr.mxu0 0.0
  %1175 = vmatpush1.msra.mxu0 %v1153
  %1176 = vmatprep.subr.mxu0 0.0
  %1177 = vmatpush1.msra.mxu0 %v1154
  %1178 = vmatprep.subr.mxu0 0.0
  %1179 = vmatpush1.msra.mxu0 %v1155
  %1180 = vmatprep.subr.mxu0 0.0
  %1181 = vmatpush1.msra.mxu0 %v1156
  %1182 = vmatprep.subr.mxu0 0.0
  %1183 = vmatpush1.msra.mxu0 %v1157
  %1184 = vmatprep.subr.mxu0 0.0
  %1185 = vmatpush1.msra.mxu0 %v1158
  %1186 = vmatprep.subr.mxu0 0.0
  %1187 = vmatpush1.msra.mxu0 %v1159
  %1188 = vmatprep.subr.mxu0 0.0
  %1189 = vmatpush1.msra.mxu0 0.0
  %1190 = vmatprep.subr.mxu0 0.0
  %1191 = vmatpush1.msra.mxu0 0.0
  %1192 = vmatprep.subr.mxu0 0.0
  %1193 = vmatpush1.msra.mxu0 0.0
  %1194 = vmatprep.subr.mxu0 0.0
  %1195 = vmatpush1.msra.mxu0 0.0
  %1196 = vmatprep.subr.mxu0 0.0
  %1197 = vmatpush1.msra.mxu0 0.0
  %1198 = vmatprep.subr.mxu0 0.0
  %1199 = vmatpush1.msra.mxu0 0.0
  %1200 = vmatprep.subr.mxu0 0.0
  %1201 = vmatpush1.msra.mxu0 0.0
  %1202 = vmatprep.subr.mxu0 0.0
  %1203 = vmatpush1.msra.mxu0 0.0
  %1204 = vmatprep.subr.mxu0 0.0
  %1205 = vmatpush1.msra.mxu0 0.0
  %1206 = vmatprep.subr.mxu0 0.0
  %1207 = vmatpush1.msra.mxu0 0.0
  %1208 = vmatprep.subr.mxu0 0.0
  %1209 = vmatpush1.msra.mxu0 0.0
  %1210 = vmatprep.subr.mxu0 0.0
  %1211 = vmatpush1.msra.mxu0 0.0
  %1212 = vmatprep.subr.mxu0 0.0
  %1213 = vmatpush1.msra.mxu0 0.0
  %1214 = vmatprep.subr.mxu0 0.0
  %1215 = vmatpush1.msra.mxu0 0.0
  %1216 = vmatprep.subr.mxu0 0.0
  %1217 = vmatpush1.msra.mxu0 0.0
  %1218 = vmatprep.subr.mxu0 0.0
  %1219 = vmatpush1.msra.mxu0 0.0
  %1220 = vmatprep.subr.mxu0 0.0
  %1221 = vmatpush1.msra.mxu0 0.0
  %1222 = vmatprep.subr.mxu0 0.0
  %1223 = vmatpush1.msra.mxu0 0.0
  %1224 = vmatprep.subr.mxu0 0.0
  %1225 = vmatpush1.msra.mxu0 0.0
  %1226 = vmatprep.subr.mxu0 0.0
  %1227 = vmatpush1.msra.mxu0 0.0
  %1228 = vmatprep.subr.mxu0 0.0
  %1229 = vmatpush1.msra.mxu0 0.0
  %1230 = vmatprep.subr.mxu0 0.0
  %1231 = vmatpush1.msra.mxu0 0.0
  %1232 = vmatprep.subr.mxu0 0.0
  %1233 = vmatpush1.msra.mxu0 0.0
  %1234 = vmatprep.subr.mxu0 0.0
  %1235 = vmatpush1.msra.mxu0 0.0
  %1236 = vmatprep.mubr.f32.mxu0 0.0
  %1237 = vmatmul.mubr.f32.gmra.mrb[0].mxu0 %v1161
  %v1238 = vpop.f32.mrb[0].mxu0
  %v1239 = vadd.f32 0.0, %v1238
  %v1240 = vpop.f32.mrb[0].mxu0
  %1241 = vmatprep.mubr.f32.mxu0 0.0
  %1242 = vmatmul.mubr.f32.gmra.mrb[0].mxu0 %v1164
  %v1243 = vpop.f32.mrb[0].mxu0
  %v1244 = vadd.f32 0.0, %v1243
  %v1245 = vpop.f32.mrb[0].mxu0
  %1246 = vmatprep.mubr.f32.mxu0 0.0
  %1247 = vmatmul.mubr.f32.gmra.mrb[0].mxu0 %v1167
  %v1248 = vpop.f32.mrb[0].mxu0
  %v1249 = vadd.f32 0.0, %v1248
  %v1250 = vpop.f32.mrb[0].mxu0
  %1251 = vmatprep.mubr.f32.mxu0 0.0
  %1252 = vmatmul.mubr.f32.gmra.mrb[0].mxu0 %v1170
  %v1253 = vpop.f32.mrb[0].mxu0
  %v1254 = vadd.f32 0.0, %v1253
  %v1255 = vpop.f32.mrb[0].mxu0
  %1256 = vdwg.mxu0
  %v1257 = vadd.f32 %v1129, %v1239
  %v1258 = vadd.f32 %v1134, %v1244
  %v1259 = vadd.f32 %v1139, %v1249
  %v1260 = vadd.f32 %v1144, %v1254
  %v1261 = vadd.f32 %v923, %v1257
  %v1262 = vadd.f32 %v924, %v1258
  %v1263 = vadd.f32 %v925, %v1259
  %v1264 = vadd.f32 %v926, %v1260
  %v1265 = vsel %vm69, %v1261, 0.0
  %v1266 = vsel %vm69, %v1262, 0.0
  %v1267 = vadd.f32 %v1265, %v1266
  %v1268 = vsel %vm69, %v1263, 0.0
  %v1269 = vadd.f32 %v1267, %v1268
  %v1270 = vsel %vm69, %v1264, 0.0
  %v1271 = vadd.f32 %v1269, %v1270
  %v1272 = vrot.slane %v1271, 4
  %v1273 = vadd.f32 %v1271, %v1272
  %v1274 = vrot.slane %v1273, 2
  %v1275 = vadd.f32 %v1273, %v1274
  %v1276 = vrot.slane %v1275, 1
  %v1277 = vadd.f32 %v1275, %v1276
  %v1279 = vsel %vm69, %v1277, 0
  %1281 = vmatprep.subr.mxu0 0.0
  %1282 = vmatpush1.msra.mxu0 %v35
  %1283 = vmatprep.subr.mxu0 0.0
  %1284 = vmatpush1.msra.mxu0 %v36
  %1285 = vmatprep.subr.mxu0 0.0
  %1286 = vmatpush1.msra.mxu0 %v37
  %1287 = vmatprep.subr.mxu0 0.0
  %1288 = vmatpush1.msra.mxu0 %v38
  %1289 = vmatprep.subr.mxu0 0.0
  %1290 = vmatpush1.msra.mxu0 %v39
  %1291 = vmatprep.subr.mxu0 0.0
  %1292 = vmatpush1.msra.mxu0 %v40
  %1293 = vmatprep.subr.mxu0 0.0
  %1294 = vmatpush1.msra.mxu0 %v41
  %1295 = vmatprep.subr.mxu0 0.0
  %1296 = vmatpush1.msra.mxu0 %v42
  %1297 = vmatprep.subr.mxu0 0.0
  %1298 = vmatpush1.msra.mxu0 0.0
  %1299 = vmatprep.subr.mxu0 0.0
  %1300 = vmatpush1.msra.mxu0 0.0
  %1301 = vmatprep.subr.mxu0 0.0
  %1302 = vmatpush1.msra.mxu0 0.0
  %1303 = vmatprep.subr.mxu0 0.0
  %1304 = vmatpush1.msra.mxu0 0.0
  %1305 = vmatprep.subr.mxu0 0.0
  %1306 = vmatpush1.msra.mxu0 0.0
  %1307 = vmatprep.subr.mxu0 0.0
  %1308 = vmatpush1.msra.mxu0 0.0
  %1309 = vmatprep.subr.mxu0 0.0
  %1310 = vmatpush1.msra.mxu0 0.0
  %1311 = vmatprep.subr.mxu0 0.0
  %1312 = vmatpush1.msra.mxu0 0.0
  %1313 = vmatprep.subr.mxu0 0.0
  %1314 = vmatpush1.msra.mxu0 0.0
  %1315 = vmatprep.subr.mxu0 0.0
  %1316 = vmatpush1.msra.mxu0 0.0
  %1317 = vmatprep.subr.mxu0 0.0
  %1318 = vmatpush1.msra.mxu0 0.0
  %1319 = vmatprep.subr.mxu0 0.0
  %1320 = vmatpush1.msra.mxu0 0.0
  %1321 = vmatprep.subr.mxu0 0.0
  %1322 = vmatpush1.msra.mxu0 0.0
  %1323 = vmatprep.subr.mxu0 0.0
  %1324 = vmatpush1.msra.mxu0 0.0
  %1325 = vmatprep.subr.mxu0 0.0
  %1326 = vmatpush1.msra.mxu0 0.0
  %1327 = vmatprep.subr.mxu0 0.0
  %1328 = vmatpush1.msra.mxu0 0.0
  %1329 = vmatprep.subr.mxu0 0.0
  %1330 = vmatpush1.msra.mxu0 0.0
  %1331 = vmatprep.subr.mxu0 0.0
  %1332 = vmatpush1.msra.mxu0 0.0
  %1333 = vmatprep.subr.mxu0 0.0
  %1334 = vmatpush1.msra.mxu0 0.0
  %1335 = vmatprep.subr.mxu0 0.0
  %1336 = vmatpush1.msra.mxu0 0.0
  %1337 = vmatprep.subr.mxu0 0.0
  %1338 = vmatpush1.msra.mxu0 0.0
  %1339 = vmatprep.subr.mxu0 0.0
  %1340 = vmatpush1.msra.mxu0 0.0
  %1341 = vmatprep.subr.mxu0 0.0
  %1342 = vmatpush1.msra.mxu0 0.0
  %1343 = vmatprep.subr.mxu0 0.0
  %1344 = vmatpush1.msra.mxu0 0.0
  %1345 = vmatprep.mubr.f32.mxu0 0.0
  %1346 = vmatmul.mubr.f32.gmra.mrb[0].mxu0 %v1279
  %v1347 = vpop.f32.mrb[0].mxu0
  %v1348 = vadd.f32 0.0, %v1347
  %v1349 = vpop.f32.mrb[0].mxu0
  %1350 = vdwg.mxu0
  %v1351 = vlaneseq
  %v1352 = vshrl.u32 %v1351, 7
  %v1353 = vsub.s32 0, %v1352
  %v1354 = vrot.slane %v1348, %v1353
  %v1355 = vsub.f32 %v1261, %v1354
  %v1356 = vsub.f32 %v1262, %v1354
  %v1357 = vsub.f32 %v1263, %v1354
  %v1358 = vsub.f32 %v1264, %v1354
  %v1359 = vmul.f32 %v1355, %v1355
  %v1360 = vmul.f32 %v1356, %v1356
  %v1361 = vmul.f32 %v1357, %v1357
  %v1362 = vmul.f32 %v1358, %v1358
  %v1363 = vsel %vm69, %v1359, 0.0
  %v1364 = vsel %vm69, %v1360, 0.0
  %v1365 = vadd.f32 %v1363, %v1364
  %v1366 = vsel %vm69, %v1361, 0.0
  %v1367 = vadd.f32 %v1365, %v1366
  %v1368 = vsel %vm69, %v1362, 0.0
  %v1369 = vadd.f32 %v1367, %v1368
  %v1370 = vrot.slane %v1369, 4
  %v1371 = vadd.f32 %v1369, %v1370
  %v1372 = vrot.slane %v1371, 2
  %v1373 = vadd.f32 %v1371, %v1372
  %v1374 = vrot.slane %v1373, 1
  %v1375 = vadd.f32 %v1373, %v1374
  %v1377 = vsel %vm69, %v1375, 0
  %1379 = vmatprep.subr.mxu0 0.0
  %1380 = vmatpush1.msra.mxu0 %v35
  %1381 = vmatprep.subr.mxu0 0.0
  %1382 = vmatpush1.msra.mxu0 %v36
  %1383 = vmatprep.subr.mxu0 0.0
  %1384 = vmatpush1.msra.mxu0 %v37
  %1385 = vmatprep.subr.mxu0 0.0
  %1386 = vmatpush1.msra.mxu0 %v38
  %1387 = vmatprep.subr.mxu0 0.0
  %1388 = vmatpush1.msra.mxu0 %v39
  %1389 = vmatprep.subr.mxu0 0.0
  %1390 = vmatpush1.msra.mxu0 %v40
  %1391 = vmatprep.subr.mxu0 0.0
  %1392 = vmatpush1.msra.mxu0 %v41
  %1393 = vmatprep.subr.mxu0 0.0
  %1394 = vmatpush1.msra.mxu0 %v42
  %1395 = vmatprep.subr.mxu0 0.0
  %1396 = vmatpush1.msra.mxu0 0.0
  %1397 = vmatprep.subr.mxu0 0.0
  %1398 = vmatpush1.msra.mxu0 0.0
  %1399 = vmatprep.subr.mxu0 0.0
  %1400 = vmatpush1.msra.mxu0 0.0
  %1401 = vmatprep.subr.mxu0 0.0
  %1402 = vmatpush1.msra.mxu0 0.0
  %1403 = vmatprep.subr.mxu0 0.0
  %1404 = vmatpush1.msra.mxu0 0.0
  %1405 = vmatprep.subr.mxu0 0.0
  %1406 = vmatpush1.msra.mxu0 0.0
  %1407 = vmatprep.subr.mxu0 0.0
  %1408 = vmatpush1.msra.mxu0 0.0
  %1409 = vmatprep.subr.mxu0 0.0
  %1410 = vmatpush1.msra.mxu0 0.0
  %1411 = vmatprep.subr.mxu0 0.0
  %1412 = vmatpush1.msra.mxu0 0.0
  %1413 = vmatprep.subr.mxu0 0.0
  %1414 = vmatpush1.msra.mxu0 0.0
  %1415 = vmatprep.subr.mxu0 0.0
  %1416 = vmatpush1.msra.mxu0 0.0
  %1417 = vmatprep.subr.mxu0 0.0
  %1418 = vmatpush1.msra.mxu0 0.0
  %1419 = vmatprep.subr.mxu0 0.0
  %1420 = vmatpush1.msra.mxu0 0.0
  %1421 = vmatprep.subr.mxu0 0.0
  %1422 = vmatpush1.msra.mxu0 0.0
  %1423 = vmatprep.subr.mxu0 0.0
  %1424 = vmatpush1.msra.mxu0 0.0
  %1425 = vmatprep.subr.mxu0 0.0
  %1426 = vmatpush1.msra.mxu0 0.0
  %1427 = vmatprep.subr.mxu0 0.0
  %1428 = vmatpush1.msra.mxu0 0.0
  %1429 = vmatprep.subr.mxu0 0.0
  %1430 = vmatpush1.msra.mxu0 0.0
  %1431 = vmatprep.subr.mxu0 0.0
  %1432 = vmatpush1.msra.mxu0 0.0
  %1433 = vmatprep.subr.mxu0 0.0
  %1434 = vmatpush1.msra.mxu0 0.0
  %1435 = vmatprep.subr.mxu0 0.0
  %1436 = vmatpush1.msra.mxu0 0.0
  %1437 = vmatprep.subr.mxu0 0.0
  %1438 = vmatpush1.msra.mxu0 0.0
  %1439 = vmatprep.subr.mxu0 0.0
  %1440 = vmatpush1.msra.mxu0 0.0
  %1441 = vmatprep.subr.mxu0 0.0
  %1442 = vmatpush1.msra.mxu0 0.0
  %1443 = vmatprep.mubr.f32.mxu0 0.0
  %1444 = vmatmul.mubr.f32.gmra.mrb[0].mxu0 %v1377
  %v1445 = vpop.f32.mrb[0].mxu0
  %v1446 = vadd.f32 1e-05, %v1445
  %v1447 = vpop.f32.mrb[0].mxu0
  %1448 = vdwg.mxu0
  %v1449 = vrsqrt.pop %v1446
  %v1451 = vrot.slane %v43, 2
  %v1453 = vmul.f32 %v1449, %v1451
  %v1454 = vlaneseq
  %v1455 = vshrl.u32 %v1454, 7
  %v1456 = vsub.s32 0, %v1455
  %v1457 = vrot.slane %v1453, %v1456
  %v1458 = vmul.f32 %v1355, %v1457
  %v1459 = vmul.f32 %v1356, %v1457
  %v1460 = vmul.f32 %v1357, %v1457
  %v1461 = vmul.f32 %v1358, %v1457
  %v1462 = vlaneseq
  %v1463 = vshrl.u32 %v1462, 7
  %v1464 = vsub.s32 3, %v1463
  %v1465 = vrot.slane %v43, %v1464
  %v1466 = vadd.f32 %v1458, %v1465
  %v1467 = vadd.f32 %v1459, %v1465
  %v1468 = vadd.f32 %v1460, %v1465
  %v1469 = vadd.f32 %v1461, %v1465
  %v1470 = vmax.f32 %v1466, 0.0
  %v1471 = vmax.f32 %v1467, 0.0
  %v1472 = vmax.f32 %v1468, 0.0
  %v1473 = vmax.f32 %v1469, 0.0
  %v1474 = vld [vmem:[%s3] sm:$0xff]
  %v1475 = vld [vmem:[%s3 + $0x8] sm:$0xff]
  %v1476 = vld [vmem:[%s3 + $0x10] sm:$0xff]
  %v1477 = vld [vmem:[%s3 + $0x18] sm:$0xff]
  %v1478 = vld [vmem:[%s3 + $0x20] sm:$0xff]
  %v1479 = vld [vmem:[%s3 + $0x28] sm:$0xff]
  %v1480 = vld [vmem:[%s3 + $0x30] sm:$0xff]
  %v1481 = vld [vmem:[%s3 + $0x38] sm:$0xff]
  %v1482 = vld [vmem:[%s3 + $0x40] sm:$0xff]
  %v1483 = vld [vmem:[%s3 + $0x48] sm:$0xff]
  %v1484 = vld [vmem:[%s3 + $0x50] sm:$0xff]
  %v1485 = vld [vmem:[%s3 + $0x58] sm:$0xff]
  %v1486 = vld [vmem:[%s3 + $0x60] sm:$0xff]
  %v1487 = vld [vmem:[%s3 + $0x68] sm:$0xff]
  %v1488 = vld [vmem:[%s3 + $0x70] sm:$0xff]
  %v1489 = vld [vmem:[%s3 + $0x78] sm:$0xff]
  %v1491 = vsel %vm69, %v1470, 0
  %v1494 = vsel %vm69, %v1471, 0
  %v1497 = vsel %vm69, %v1472, 0
  %v1500 = vsel %vm69, %v1473, 0
  %1502 = vmatprep.subr.mxu0 %v1475
  %1503 = vmatpush1.msra.mxu0 %v1474
  %1504 = vmatprep.subr.mxu0 %v1477
  %1505 = vmatpush1.msra.mxu0 %v1476
  %1506 = vmatprep.subr.mxu0 %v1479
  %1507 = vmatpush1.msra.mxu0 %v1478
  %1508 = vmatprep.subr.mxu0 %v1481
  %1509 = vmatpush1.msra.mxu0 %v1480
  %1510 = vmatprep.subr.mxu0 %v1483
  %1511 = vmatpush1.msra.mxu0 %v1482
  %1512 = vmatprep.subr.mxu0 %v1485
  %1513 = vmatpush1.msra.mxu0 %v1484
  %1514 = vmatprep.subr.mxu0 %v1487
  %1515 = vmatpush1.msra.mxu0 %v1486
  %1516 = vmatprep.subr.mxu0 %v1489
  %1517 = vmatpush1.msra.mxu0 %v1488
  %1518 = vmatprep.subr.mxu0 0.0
  %1519 = vmatpush1.msra.mxu0 0.0
  %1520 = vmatprep.subr.mxu0 0.0
  %1521 = vmatpush1.msra.mxu0 0.0
  %1522 = vmatprep.subr.mxu0 0.0
  %1523 = vmatpush1.msra.mxu0 0.0
  %1524 = vmatprep.subr.mxu0 0.0
  %1525 = vmatpush1.msra.mxu0 0.0
  %1526 = vmatprep.subr.mxu0 0.0
  %1527 = vmatpush1.msra.mxu0 0.0
  %1528 = vmatprep.subr.mxu0 0.0
  %1529 = vmatpush1.msra.mxu0 0.0
  %1530 = vmatprep.subr.mxu0 0.0
  %1531 = vmatpush1.msra.mxu0 0.0
  %1532 = vmatprep.subr.mxu0 0.0
  %1533 = vmatpush1.msra.mxu0 0.0
  %1534 = vmatprep.subr.mxu0 0.0
  %1535 = vmatpush1.msra.mxu0 0.0
  %1536 = vmatprep.subr.mxu0 0.0
  %1537 = vmatpush1.msra.mxu0 0.0
  %1538 = vmatprep.subr.mxu0 0.0
  %1539 = vmatpush1.msra.mxu0 0.0
  %1540 = vmatprep.subr.mxu0 0.0
  %1541 = vmatpush1.msra.mxu0 0.0
  %1542 = vmatprep.subr.mxu0 0.0
  %1543 = vmatpush1.msra.mxu0 0.0
  %1544 = vmatprep.subr.mxu0 0.0
  %1545 = vmatpush1.msra.mxu0 0.0
  %1546 = vmatprep.subr.mxu0 0.0
  %1547 = vmatpush1.msra.mxu0 0.0
  %1548 = vmatprep.subr.mxu0 0.0
  %1549 = vmatpush1.msra.mxu0 0.0
  %1550 = vmatprep.subr.mxu0 0.0
  %1551 = vmatpush1.msra.mxu0 0.0
  %1552 = vmatprep.subr.mxu0 0.0
  %1553 = vmatpush1.msra.mxu0 0.0
  %1554 = vmatprep.subr.mxu0 0.0
  %1555 = vmatpush1.msra.mxu0 0.0
  %1556 = vmatprep.subr.mxu0 0.0
  %1557 = vmatpush1.msra.mxu0 0.0
  %1558 = vmatprep.subr.mxu0 0.0
  %1559 = vmatpush1.msra.mxu0 0.0
  %1560 = vmatprep.subr.mxu0 0.0
  %1561 = vmatpush1.msra.mxu0 0.0
  %1562 = vmatprep.subr.mxu0 0.0
  %1563 = vmatpush1.msra.mxu0 0.0
  %1564 = vmatprep.subr.mxu0 0.0
  %1565 = vmatpush1.msra.mxu0 0.0
  %1566 = vmatprep.mubr.f32.mxu0 0.0
  %1567 = vmatmul.mubr.f32.gmra.mrb[0].mxu0 %v1491
  %v1568 = vpop.f32.mrb[0].mxu0
  %v1569 = vadd.f32 0.0, %v1568
  %v1570 = vpop.f32.mrb[0].mxu0
  %v1571 = vadd.f32 0.0, %v1570
  %1572 = vmatprep.mubr.f32.mxu0 0.0
  %1573 = vmatmul.mubr.f32.gmra.mrb[0].mxu0 %v1494
  %v1574 = vpop.f32.mrb[0].mxu0
  %v1575 = vadd.f32 0.0, %v1574
  %v1576 = vpop.f32.mrb[0].mxu0
  %v1577 = vadd.f32 0.0, %v1576
  %1578 = vmatprep.mubr.f32.mxu0 0.0
  %1579 = vmatmul.mubr.f32.gmra.mrb[0].mxu0 %v1497
  %v1580 = vpop.f32.mrb[0].mxu0
  %v1581 = vadd.f32 0.0, %v1580
  %v1582 = vpop.f32.mrb[0].mxu0
  %v1583 = vadd.f32 0.0, %v1582
  %1584 = vmatprep.mubr.f32.mxu0 0.0
  %1585 = vmatmul.mubr.f32.gmra.mrb[0].mxu0 %v1500
  %v1586 = vpop.f32.mrb[0].mxu0
  %v1587 = vadd.f32 0.0, %v1586
  %v1588 = vpop.f32.mrb[0].mxu0
  %v1589 = vadd.f32 0.0, %v1588
  %1590 = vdwg.mxu0
  %s1591 = scalar_lea.vmem %s3, 128
  %v1592 = vld [vmem:[%s1591] sm:$0xff]
  %v1593 = vld [vmem:[%s1591 + $0x8] sm:$0xff]
  %v1594 = vld [vmem:[%s1591 + $0x10] sm:$0xff]
  %v1595 = vld [vmem:[%s1591 + $0x18] sm:$0xff]
  %v1596 = vld [vmem:[%s1591 + $0x20] sm:$0xff]
  %v1597 = vld [vmem:[%s1591 + $0x28] sm:$0xff]
  %v1598 = vld [vmem:[%s1591 + $0x30] sm:$0xff]
  %v1599 = vld [vmem:[%s1591 + $0x38] sm:$0xff]
  %v1600 = vld [vmem:[%s1591 + $0x40] sm:$0xff]
  %v1601 = vld [vmem:[%s1591 + $0x48] sm:$0xff]
  %v1602 = vld [vmem:[%s1591 + $0x50] sm:$0xff]
  %v1603 = vld [vmem:[%s1591 + $0x58] sm:$0xff]
  %v1604 = vld [vmem:[%s1591 + $0x60] sm:$0xff]
  %v1605 = vld [vmem:[%s1591 + $0x68] sm:$0xff]
  %v1606 = vld [vmem:[%s1591 + $0x70] sm:$0xff]
  %v1607 = vld [vmem:[%s1591 + $0x78] sm:$0xff]
  %1608 = vmatprep.subr.mxu0 %v1593
  %1609 = vmatpush1.msra.mxu0 %v1592
  %1610 = vmatprep.subr.mxu0 %v1595
  %1611 = vmatpush1.msra.mxu0 %v1594
  %1612 = vmatprep.subr.mxu0 %v1597
  %1613 = vmatpush1.msra.mxu0 %v1596
  %1614 = vmatprep.subr.mxu0 %v1599
  %1615 = vmatpush1.msra.mxu0 %v1598
  %1616 = vmatprep.subr.mxu0 %v1601
  %1617 = vmatpush1.msra.mxu0 %v1600
  %1618 = vmatprep.subr.mxu0 %v1603
  %1619 = vmatpush1.msra.mxu0 %v1602
  %1620 = vmatprep.subr.mxu0 %v1605
  %1621 = vmatpush1.msra.mxu0 %v1604
  %1622 = vmatprep.subr.mxu0 %v1607
  %1623 = vmatpush1.msra.mxu0 %v1606
  %1624 = vmatprep.subr.mxu0 0.0
  %1625 = vmatpush1.msra.mxu0 0.0
  %1626 = vmatprep.subr.mxu0 0.0
  %1627 = vmatpush1.msra.mxu0 0.0
  %1628 = vmatprep.subr.mxu0 0.0
  %1629 = vmatpush1.msra.mxu0 0.0
  %1630 = vmatprep.subr.mxu0 0.0
  %1631 = vmatpush1.msra.mxu0 0.0
  %1632 = vmatprep.subr.mxu0 0.0
  %1633 = vmatpush1.msra.mxu0 0.0
  %1634 = vmatprep.subr.mxu0 0.0
  %1635 = vmatpush1.msra.mxu0 0.0
  %1636 = vmatprep.subr.mxu0 0.0
  %1637 = vmatpush1.msra.mxu0 0.0
  %1638 = vmatprep.subr.mxu0 0.0
  %1639 = vmatpush1.msra.mxu0 0.0
  %1640 = vmatprep.subr.mxu0 0.0
  %1641 = vmatpush1.msra.mxu0 0.0
  %1642 = vmatprep.subr.mxu0 0.0
  %1643 = vmatpush1.msra.mxu0 0.0
  %1644 = vmatprep.subr.mxu0 0.0
  %1645 = vmatpush1.msra.mxu0 0.0
  %1646 = vmatprep.subr.mxu0 0.0
  %1647 = vmatpush1.msra.mxu0 0.0
  %1648 = vmatprep.subr.mxu0 0.0
  %1649 = vmatpush1.msra.mxu0 0.0
  %1650 = vmatprep.subr.mxu0 0.0
  %1651 = vmatpush1.msra.mxu0 0.0
  %1652 = vmatprep.subr.mxu0 0.0
  %1653 = vmatpush1.msra.mxu0 0.0
  %1654 = vmatprep.subr.mxu0 0.0
  %1655 = vmatpush1.msra.mxu0 0.0
  %1656 = vmatprep.subr.mxu0 0.0
  %1657 = vmatpush1.msra.mxu0 0.0
  %1658 = vmatprep.subr.mxu0 0.0
  %1659 = vmatpush1.msra.mxu0 0.0
  %1660 = vmatprep.subr.mxu0 0.0
  %1661 = vmatpush1.msra.mxu0 0.0
  %1662 = vmatprep.subr.mxu0 0.0
  %1663 = vmatpush1.msra.mxu0 0.0
  %1664 = vmatprep.subr.mxu0 0.0
  %1665 = vmatpush1.msra.mxu0 0.0
  %1666 = vmatprep.subr.mxu0 0.0
  %1667 = vmatpush1.msra.mxu0 0.0
  %1668 = vmatprep.subr.mxu0 0.0
  %1669 = vmatpush1.msra.mxu0 0.0
  %1670 = vmatprep.subr.mxu0 0.0
  %1671 = vmatpush1.msra.mxu0 0.0
  %1672 = vmatprep.mubr.f32.mxu0 0.0
  %1673 = vmatmul.mubr.f32.gmra.mrb[0].mxu0 %v1491
  %v1674 = vpop.f32.mrb[0].mxu0
  %v1675 = vadd.f32 0.0, %v1674
  %v1676 = vpop.f32.mrb[0].mxu0
  %v1677 = vadd.f32 0.0, %v1676
  %1678 = vmatprep.mubr.f32.mxu0 0.0
  %1679 = vmatmul.mubr.f32.gmra.mrb[0].mxu0 %v1494
  %v1680 = vpop.f32.mrb[0].mxu0
  %v1681 = vadd.f32 0.0, %v1680
  %v1682 = vpop.f32.mrb[0].mxu0
  %v1683 = vadd.f32 0.0, %v1682
  %1684 = vmatprep.mubr.f32.mxu0 0.0
  %1685 = vmatmul.mubr.f32.gmra.mrb[0].mxu0 %v1497
  %v1686 = vpop.f32.mrb[0].mxu0
  %v1687 = vadd.f32 0.0, %v1686
  %v1688 = vpop.f32.mrb[0].mxu0
  %v1689 = vadd.f32 0.0, %v1688
  %1690 = vmatprep.mubr.f32.mxu0 0.0
  %1691 = vmatmul.mubr.f32.gmra.mrb[0].mxu0 %v1500
  %v1692 = vpop.f32.mrb[0].mxu0
  %v1693 = vadd.f32 0.0, %v1692
  %v1694 = vpop.f32.mrb[0].mxu0
  %v1695 = vadd.f32 0.0, %v1694
  %1696 = vdwg.mxu0
  %v1697 = vld [vmem:[%s9] sm:$0xff]
  %v1698 = vld [vmem:[%s9 + $0x8] sm:$0xff]
  %v1699 = vld [vmem:[%s9 + $0x10] sm:$0xff]
  %v1700 = vld [vmem:[%s9 + $0x18] sm:$0xff]
  %v1701 = vld [vmem:[%s9 + $0x20] sm:$0xff]
  %v1702 = vld [vmem:[%s9 + $0x28] sm:$0xff]
  %v1703 = vld [vmem:[%s9 + $0x30] sm:$0xff]
  %v1704 = vld [vmem:[%s9 + $0x38] sm:$0xff]
  %v1705 = vld [vmem:[%s9 + $0x40] sm:$0xff]
  %v1706 = vld [vmem:[%s9 + $0x48] sm:$0xff]
  %v1707 = vld [vmem:[%s9 + $0x50] sm:$0xff]
  %v1708 = vld [vmem:[%s9 + $0x58] sm:$0xff]
  %v1709 = vld [vmem:[%s9 + $0x60] sm:$0xff]
  %v1710 = vld [vmem:[%s9 + $0x68] sm:$0xff]
  %v1711 = vld [vmem:[%s9 + $0x70] sm:$0xff]
  %v1712 = vld [vmem:[%s9 + $0x78] sm:$0xff]
  %v1713 = vld [vmem:[%s9 + $0x80] sm:$0xff]
  %v1714 = vld [vmem:[%s9 + $0x88] sm:$0xff]
  %v1715 = vld [vmem:[%s9 + $0x90] sm:$0xff]
  %v1716 = vld [vmem:[%s9 + $0x98] sm:$0xff]
  %v1717 = vld [vmem:[%s9 + $0xa0] sm:$0xff]
  %v1718 = vld [vmem:[%s9 + $0xa8] sm:$0xff]
  %v1719 = vld [vmem:[%s9 + $0xb0] sm:$0xff]
  %v1720 = vld [vmem:[%s9 + $0xb8] sm:$0xff]
  %v1721 = vld [vmem:[%s9 + $0xc0] sm:$0xff]
  %v1722 = vld [vmem:[%s9 + $0xc8] sm:$0xff]
  %v1723 = vld [vmem:[%s9 + $0xd0] sm:$0xff]
  %v1724 = vld [vmem:[%s9 + $0xd8] sm:$0xff]
  %v1725 = vld [vmem:[%s9 + $0xe0] sm:$0xff]
  %v1726 = vld [vmem:[%s9 + $0xe8] sm:$0xff]
  %v1727 = vld [vmem:[%s9 + $0xf0] sm:$0xff]
  %v1728 = vld [vmem:[%s9 + $0xf8] sm:$0xff]
  %v1729 = vld [vmem:[%s9 + $0x100] sm:$0xff]
  %v1730 = vld [vmem:[%s9 + $0x108] sm:$0xff]
  %v1731 = vld [vmem:[%s9 + $0x110] sm:$0xff]
  %v1732 = vld [vmem:[%s9 + $0x118] sm:$0xff]
  %v1733 = vld [vmem:[%s9 + $0x120] sm:$0xff]
  %v1734 = vld [vmem:[%s9 + $0x128] sm:$0xff]
  %v1735 = vld [vmem:[%s9 + $0x130] sm:$0xff]
  %v1736 = vld [vmem:[%s9 + $0x138] sm:$0xff]
  %v1737 = vld [vmem:[%s9 + $0x140] sm:$0xff]
  %v1738 = vld [vmem:[%s9 + $0x148] sm:$0xff]
  %v1739 = vld [vmem:[%s9 + $0x150] sm:$0xff]
  %v1740 = vld [vmem:[%s9 + $0x158] sm:$0xff]
  %v1741 = vld [vmem:[%s9 + $0x160] sm:$0xff]
  %v1742 = vld [vmem:[%s9 + $0x168] sm:$0xff]
  %v1743 = vld [vmem:[%s9 + $0x170] sm:$0xff]
  %v1744 = vld [vmem:[%s9 + $0x178] sm:$0xff]
  %v1745 = vld [vmem:[%s9 + $0x180] sm:$0xff]
  %v1746 = vld [vmem:[%s9 + $0x188] sm:$0xff]
  %v1747 = vld [vmem:[%s9 + $0x190] sm:$0xff]
  %v1748 = vld [vmem:[%s9 + $0x198] sm:$0xff]
  %v1749 = vld [vmem:[%s9 + $0x1a0] sm:$0xff]
  %v1750 = vld [vmem:[%s9 + $0x1a8] sm:$0xff]
  %v1751 = vld [vmem:[%s9 + $0x1b0] sm:$0xff]
  %v1752 = vld [vmem:[%s9 + $0x1b8] sm:$0xff]
  %v1753 = vld [vmem:[%s9 + $0x1c0] sm:$0xff]
  %v1754 = vld [vmem:[%s9 + $0x1c8] sm:$0xff]
  %v1755 = vld [vmem:[%s9 + $0x1d0] sm:$0xff]
  %v1756 = vld [vmem:[%s9 + $0x1d8] sm:$0xff]
  %v1757 = vld [vmem:[%s9 + $0x1e0] sm:$0xff]
  %v1758 = vld [vmem:[%s9 + $0x1e8] sm:$0xff]
  %v1759 = vld [vmem:[%s9 + $0x1f0] sm:$0xff]
  %v1760 = vld [vmem:[%s9 + $0x1f8] sm:$0xff]
  %v1761 = vld [vmem:[%s7] sm:$0xf]
  %v1762 = vadd.f32 %v1569, %v1575
  %v1763 = vadd.f32 %v1762, %v1581
  %v1764 = vadd.f32 %v1763, %v1587
  %v1765 = vrot.slane %v1764, 4
  %v1766 = vadd.f32 %v1764, %v1765
  %v1767 = vrot.slane %v1766, 2
  %v1768 = vadd.f32 %v1766, %v1767
  %v1769 = vrot.slane %v1768, 1
  %v1770 = vadd.f32 %v1768, %v1769
  %v1771 = vadd.f32 %v1571, %v1577
  %v1772 = vadd.f32 %v1771, %v1583
  %v1773 = vadd.f32 %v1772, %v1589
  %v1774 = vrot.slane %v1773, 4
  %v1775 = vadd.f32 %v1773, %v1774
  %v1776 = vrot.slane %v1775, 2
  %v1777 = vadd.f32 %v1775, %v1776
  %v1778 = vrot.slane %v1777, 1
  %v1779 = vadd.f32 %v1777, %v1778
  %v1780 = vadd.f32 %v1675, %v1681
  %v1781 = vadd.f32 %v1780, %v1687
  %v1782 = vadd.f32 %v1781, %v1693
  %v1783 = vrot.slane %v1782, 4
  %v1784 = vadd.f32 %v1782, %v1783
  %v1785 = vrot.slane %v1784, 2
  %v1786 = vadd.f32 %v1784, %v1785
  %v1787 = vrot.slane %v1786, 1
  %v1788 = vadd.f32 %v1786, %v1787
  %v1789 = vadd.f32 %v1677, %v1683
  %v1790 = vadd.f32 %v1789, %v1689
  %v1791 = vadd.f32 %v1790, %v1695
  %v1792 = vrot.slane %v1791, 4
  %v1793 = vadd.f32 %v1791, %v1792
  %v1794 = vrot.slane %v1793, 2
  %v1795 = vadd.f32 %v1793, %v1794
  %v1796 = vrot.slane %v1795, 1
  %v1797 = vadd.f32 %v1795, %v1796
  %v1798 = vadd.f32 %v1770, %v1788
  %v1799 = vadd.f32 %v1779, %v1797
  %1800 = vmatprep.subr.mxu0 %v1698
  %1801 = vmatpush1.msra.mxu0 %v1697
  %1802 = vmatprep.subr.mxu0 %v1700
  %1803 = vmatpush1.msra.mxu0 %v1699
  %1804 = vmatprep.subr.mxu0 %v1702
  %1805 = vmatpush1.msra.mxu0 %v1701
  %1806 = vmatprep.subr.mxu0 %v1704
  %1807 = vmatpush1.msra.mxu0 %v1703
  %1808 = vmatprep.subr.mxu0 %v1706
  %1809 = vmatpush1.msra.mxu0 %v1705
  %1810 = vmatprep.subr.mxu0 %v1708
  %1811 = vmatpush1.msra.mxu0 %v1707
  %1812 = vmatprep.subr.mxu0 %v1710
  %1813 = vmatpush1.msra.mxu0 %v1709
  %1814 = vmatprep.subr.mxu0 %v1712
  %1815 = vmatpush1.msra.mxu0 %v1711
  %1816 = vmatprep.subr.mxu0 %v1714
  %1817 = vmatpush1.msra.mxu0 %v1713
  %1818 = vmatprep.subr.mxu0 %v1716
  %1819 = vmatpush1.msra.mxu0 %v1715
  %1820 = vmatprep.subr.mxu0 %v1718
  %1821 = vmatpush1.msra.mxu0 %v1717
  %1822 = vmatprep.subr.mxu0 %v1720
  %1823 = vmatpush1.msra.mxu0 %v1719
  %1824 = vmatprep.subr.mxu0 %v1722
  %1825 = vmatpush1.msra.mxu0 %v1721
  %1826 = vmatprep.subr.mxu0 %v1724
  %1827 = vmatpush1.msra.mxu0 %v1723
  %1828 = vmatprep.subr.mxu0 %v1726
  %1829 = vmatpush1.msra.mxu0 %v1725
  %1830 = vmatprep.subr.mxu0 %v1728
  %1831 = vmatpush1.msra.mxu0 %v1727
  %1832 = vmatprep.subr.mxu0 %v1730
  %1833 = vmatpush1.msra.mxu0 %v1729
  %1834 = vmatprep.subr.mxu0 %v1732
  %1835 = vmatpush1.msra.mxu0 %v1731
  %1836 = vmatprep.subr.mxu0 %v1734
  %1837 = vmatpush1.msra.mxu0 %v1733
  %1838 = vmatprep.subr.mxu0 %v1736
  %1839 = vmatpush1.msra.mxu0 %v1735
  %1840 = vmatprep.subr.mxu0 %v1738
  %1841 = vmatpush1.msra.mxu0 %v1737
  %1842 = vmatprep.subr.mxu0 %v1740
  %1843 = vmatpush1.msra.mxu0 %v1739
  %1844 = vmatprep.subr.mxu0 %v1742
  %1845 = vmatpush1.msra.mxu0 %v1741
  %1846 = vmatprep.subr.mxu0 %v1744
  %1847 = vmatpush1.msra.mxu0 %v1743
  %1848 = vmatprep.subr.mxu0 %v1746
  %1849 = vmatpush1.msra.mxu0 %v1745
  %1850 = vmatprep.subr.mxu0 %v1748
  %1851 = vmatpush1.msra.mxu0 %v1747
  %1852 = vmatprep.subr.mxu0 %v1750
  %1853 = vmatpush1.msra.mxu0 %v1749
  %1854 = vmatprep.subr.mxu0 %v1752
  %1855 = vmatpush1.msra.mxu0 %v1751
  %1856 = vmatprep.subr.mxu0 %v1754
  %1857 = vmatpush1.msra.mxu0 %v1753
  %1858 = vmatprep.subr.mxu0 %v1756
  %1859 = vmatpush1.msra.mxu0 %v1755
  %1860 = vmatprep.subr.mxu0 %v1758
  %1861 = vmatpush1.msra.mxu0 %v1757
  %1862 = vmatprep.subr.mxu0 %v1760
  %1863 = vmatpush1.msra.mxu0 %v1759
  %1864 = vmatprep.mubr.f32.mxu0 %v1799
  %1865 = vmatmul.mubr.f32.gmra.mrb[0].mxu0 %v1798
  %v1866 = vpop.f32.mrb[0].mxu0
  %v1867 = vadd.f32 0.0, %v1866
  %v1868 = vpop.f32.mrb[0].mxu0
  %v1869 = vadd.f32 0.0, %v1868
  %1870 = vdwg.mxu0
  %v1871 = vlaneseq
  %v1872 = vshrl.u32 %v1871, 7
  %v1873 = vsub.s32 0, %v1872
  %v1874 = vrot.slane %v1867, %v1873
  %v1875 = vlaneseq
  %v1876 = vshrl.u32 %v1875, 7
  %v1877 = vsub.s32 0, %v1876
  %v1878 = vrot.slane %v1869, %v1877
  %v1879 = vsub.f32 %v1569, %v1874
  %v1880 = vsub.f32 %v1571, %v1878
  %v1881 = vsub.f32 %v1575, %v1874
  %v1882 = vsub.f32 %v1577, %v1878
  %v1883 = vsub.f32 %v1581, %v1874
  %v1884 = vsub.f32 %v1583, %v1878
  %v1885 = vsub.f32 %v1587, %v1874
  %v1886 = vsub.f32 %v1589, %v1878
  %v1887 = vsub.f32 %v1675, %v1874
  %v1888 = vsub.f32 %v1677, %v1878
  %v1889 = vsub.f32 %v1681, %v1874
  %v1890 = vsub.f32 %v1683, %v1878
  %v1891 = vsub.f32 %v1687, %v1874
  %v1892 = vsub.f32 %v1689, %v1878
  %v1893 = vsub.f32 %v1693, %v1874
  %v1894 = vsub.f32 %v1695, %v1878
  %v1895 = vmul.f32 %v1879, %v1879
  %v1896 = vmul.f32 %v1880, %v1880
  %v1897 = vmul.f32 %v1881, %v1881
  %v1898 = vmul.f32 %v1882, %v1882
  %v1899 = vmul.f32 %v1883, %v1883
  %v1900 = vmul.f32 %v1884, %v1884
  %v1901 = vmul.f32 %v1885, %v1885
  %v1902 = vmul.f32 %v1886, %v1886
  %v1903 = vadd.f32 %v1895, %v1897
  %v1904 = vadd.f32 %v1903, %v1899
  %v1905 = vadd.f32 %v1904, %v1901
  %v1906 = vrot.slane %v1905, 4
  %v1907 = vadd.f32 %v1905, %v1906
  %v1908 = vrot.slane %v1907, 2
  %v1909 = vadd.f32 %v1907, %v1908
  %v1910 = vrot.slane %v1909, 1
  %v1911 = vadd.f32 %v1909, %v1910
  %v1912 = vadd.f32 %v1896, %v1898
  %v1913 = vadd.f32 %v1912, %v1900
  %v1914 = vadd.f32 %v1913, %v1902
  %v1915 = vrot.slane %v1914, 4
  %v1916 = vadd.f32 %v1914, %v1915
  %v1917 = vrot.slane %v1916, 2
  %v1918 = vadd.f32 %v1916, %v1917
  %v1919 = vrot.slane %v1918, 1
  %v1920 = vadd.f32 %v1918, %v1919
  %v1921 = vmul.f32 %v1887, %v1887
  %v1922 = vmul.f32 %v1888, %v1888
  %v1923 = vmul.f32 %v1889, %v1889
  %v1924 = vmul.f32 %v1890, %v1890
  %v1925 = vmul.f32 %v1891, %v1891
  %v1926 = vmul.f32 %v1892, %v1892
  %v1927 = vmul.f32 %v1893, %v1893
  %v1928 = vmul.f32 %v1894, %v1894
  %v1929 = vadd.f32 %v1921, %v1923
  %v1930 = vadd.f32 %v1929, %v1925
  %v1931 = vadd.f32 %v1930, %v1927
  %v1932 = vrot.slane %v1931, 4
  %v1933 = vadd.f32 %v1931, %v1932
  %v1934 = vrot.slane %v1933, 2
  %v1935 = vadd.f32 %v1933, %v1934
  %v1936 = vrot.slane %v1935, 1
  %v1937 = vadd.f32 %v1935, %v1936
  %v1938 = vadd.f32 %v1922, %v1924
  %v1939 = vadd.f32 %v1938, %v1926
  %v1940 = vadd.f32 %v1939, %v1928
  %v1941 = vrot.slane %v1940, 4
  %v1942 = vadd.f32 %v1940, %v1941
  %v1943 = vrot.slane %v1942, 2
  %v1944 = vadd.f32 %v1942, %v1943
  %v1945 = vrot.slane %v1944, 1
  %v1946 = vadd.f32 %v1944, %v1945
  %v1947 = vadd.f32 %v1911, %v1937
  %v1948 = vadd.f32 %v1920, %v1946
  %1949 = vmatprep.subr.mxu0 %v1698
  %1950 = vmatpush1.msra.mxu0 %v1697
  %1951 = vmatprep.subr.mxu0 %v1700
  %1952 = vmatpush1.msra.mxu0 %v1699
  %1953 = vmatprep.subr.mxu0 %v1702
  %1954 = vmatpush1.msra.mxu0 %v1701
  %1955 = vmatprep.subr.mxu0 %v1704
  %1956 = vmatpush1.msra.mxu0 %v1703
  %1957 = vmatprep.subr.mxu0 %v1706
  %1958 = vmatpush1.msra.mxu0 %v1705
  %1959 = vmatprep.subr.mxu0 %v1708
  %1960 = vmatpush1.msra.mxu0 %v1707
  %1961 = vmatprep.subr.mxu0 %v1710
  %1962 = vmatpush1.msra.mxu0 %v1709
  %1963 = vmatprep.subr.mxu0 %v1712
  %1964 = vmatpush1.msra.mxu0 %v1711
  %1965 = vmatprep.subr.mxu0 %v1714
  %1966 = vmatpush1.msra.mxu0 %v1713
  %1967 = vmatprep.subr.mxu0 %v1716
  %1968 = vmatpush1.msra.mxu0 %v1715
  %1969 = vmatprep.subr.mxu0 %v1718
  %1970 = vmatpush1.msra.mxu0 %v1717
  %1971 = vmatprep.subr.mxu0 %v1720
  %1972 = vmatpush1.msra.mxu0 %v1719
  %1973 = vmatprep.subr.mxu0 %v1722
  %1974 = vmatpush1.msra.mxu0 %v1721
  %1975 = vmatprep.subr.mxu0 %v1724
  %1976 = vmatpush1.msra.mxu0 %v1723
  %1977 = vmatprep.subr.mxu0 %v1726
  %1978 = vmatpush1.msra.mxu0 %v1725
  %1979 = vmatprep.subr.mxu0 %v1728
  %1980 = vmatpush1.msra.mxu0 %v1727
  %1981 = vmatprep.subr.mxu0 %v1730
  %1982 = vmatpush1.msra.mxu0 %v1729
  %1983 = vmatprep.subr.mxu0 %v1732
  %1984 = vmatpush1.msra.mxu0 %v1731
  %1985 = vmatprep.subr.mxu0 %v1734
  %1986 = vmatpush1.msra.mxu0 %v1733
  %1987 = vmatprep.subr.mxu0 %v1736
  %1988 = vmatpush1.msra.mxu0 %v1735
  %1989 = vmatprep.subr.mxu0 %v1738
  %1990 = vmatpush1.msra.mxu0 %v1737
  %1991 = vmatprep.subr.mxu0 %v1740
  %1992 = vmatpush1.msra.mxu0 %v1739
  %1993 = vmatprep.subr.mxu0 %v1742
  %1994 = vmatpush1.msra.mxu0 %v1741
  %1995 = vmatprep.subr.mxu0 %v1744
  %1996 = vmatpush1.msra.mxu0 %v1743
  %1997 = vmatprep.subr.mxu0 %v1746
  %1998 = vmatpush1.msra.mxu0 %v1745
  %1999 = vmatprep.subr.mxu0 %v1748
  %2000 = vmatpush1.msra.mxu0 %v1747
  %2001 = vmatprep.subr.mxu0 %v1750
  %2002 = vmatpush1.msra.mxu0 %v1749
  %2003 = vmatprep.subr.mxu0 %v1752
  %2004 = vmatpush1.msra.mxu0 %v1751
  %2005 = vmatprep.subr.mxu0 %v1754
  %2006 = vmatpush1.msra.mxu0 %v1753
  %2007 = vmatprep.subr.mxu0 %v1756
  %2008 = vmatpush1.msra.mxu0 %v1755
  %2009 = vmatprep.subr.mxu0 %v1758
  %2010 = vmatpush1.msra.mxu0 %v1757
  %2011 = vmatprep.subr.mxu0 %v1760
  %2012 = vmatpush1.msra.mxu0 %v1759
  %2013 = vmatprep.mubr.f32.mxu0 %v1948
  %2014 = vmatmul.mubr.f32.gmra.mrb[0].mxu0 %v1947
  %v2015 = vpop.f32.mrb[0].mxu0
  %v2016 = vadd.f32 1e-05, %v2015
  %v2017 = vpop.f32.mrb[0].mxu0
  %v2018 = vadd.f32 1e-05, %v2017
  %2019 = vdwg.mxu0
  %v2020 = vrsqrt.pop %v2016
  %v2021 = vrsqrt.pop %v2018
  %v2023 = vlaneseq
  %v2024 = vshrl.u32 %v2023, 7
  %v2025 = vsub.s32 0, %v2024
  %v2026 = vrot.slane %v1761, %v2025
  %v2027 = vlaneseq
  %v2028 = vshrl.u32 %v2027, 7
  %v2029 = vsub.s32 2, %v2028
  %v2030 = vrot.slane %v1761, %v2029
  %v2033 = vmul.f32 %v2020, %v2026
  %v2034 = vmul.f32 %v2021, %v2030
  %v2035 = vlaneseq
  %v2036 = vshrl.u32 %v2035, 7
  %v2037 = vsub.s32 0, %v2036
  %v2038 = vrot.slane %v2033, %v2037
  %v2039 = vlaneseq
  %v2040 = vshrl.u32 %v2039, 7
  %v2041 = vsub.s32 0, %v2040
  %v2042 = vrot.slane %v2034, %v2041
  %v2043 = vmul.f32 %v1879, %v2038
  %v2044 = vmul.f32 %v1880, %v2042
  %v2045 = vmul.f32 %v1881, %v2038
  %v2046 = vmul.f32 %v1882, %v2042
  %v2047 = vmul.f32 %v1883, %v2038
  %v2048 = vmul.f32 %v1884, %v2042
  %v2049 = vmul.f32 %v1885, %v2038
  %v2050 = vmul.f32 %v1886, %v2042
  %v2051 = vlaneseq
  %v2052 = vshrl.u32 %v2051, 7
  %v2053 = vsub.s32 1, %v2052
  %v2054 = vrot.slane %v1761, %v2053
  %v2055 = vlaneseq
  %v2056 = vshrl.u32 %v2055, 7
  %v2057 = vsub.s32 3, %v2056
  %v2058 = vrot.slane %v1761, %v2057
  %v2061 = vlaneseq
  %v2062 = vshrl.u32 %v2061, 7
  %v2063 = vsub.s32 1, %v2062
  %v2064 = vrot.slane %v2054, %v2063
  %v2065 = vlaneseq
  %v2066 = vshrl.u32 %v2065, 7
  %v2067 = vsub.s32 1, %v2066
  %v2068 = vrot.slane %v2058, %v2067
  %v2069 = vadd.f32 %v2043, %v2064
  %v2070 = vadd.f32 %v2044, %v2068
  %v2071 = vadd.f32 %v2045, %v2064
  %v2072 = vadd.f32 %v2046, %v2068
  %v2073 = vadd.f32 %v2047, %v2064
  %v2074 = vadd.f32 %v2048, %v2068
  %v2075 = vadd.f32 %v2049, %v2064
  %v2076 = vadd.f32 %v2050, %v2068
  %v2077 = vmul.f32 %v1887, %v2038
  %v2078 = vmul.f32 %v1888, %v2042
  %v2079 = vmul.f32 %v1889, %v2038
  %v2080 = vmul.f32 %v1890, %v2042
  %v2081 = vmul.f32 %v1891, %v2038
  %v2082 = vmul.f32 %v1892, %v2042
  %v2083 = vmul.f32 %v1893, %v2038
  %v2084 = vmul.f32 %v1894, %v2042
  %v2085 = vadd.f32 %v2077, %v2064
  %v2086 = vadd.f32 %v2078, %v2068
  %v2087 = vadd.f32 %v2079, %v2064
  %v2088 = vadd.f32 %v2080, %v2068
  %v2089 = vadd.f32 %v2081, %v2064
  %v2090 = vadd.f32 %v2082, %v2068
  %v2091 = vadd.f32 %v2083, %v2064
  %v2092 = vadd.f32 %v2084, %v2068
  %vm2093 = vcmp.ge.f32.partialorder %v2069, 0.0
  %vm2094 = vcmp.ge.f32.partialorder %v2070, 0.0
  %vm2095 = vcmp.ge.f32.partialorder %v2071, 0.0
  %vm2096 = vcmp.ge.f32.partialorder %v2072, 0.0
  %vm2097 = vcmp.ge.f32.partialorder %v2073, 0.0
  %vm2098 = vcmp.ge.f32.partialorder %v2074, 0.0
  %vm2099 = vcmp.ge.f32.partialorder %v2075, 0.0
  %vm2100 = vcmp.ge.f32.partialorder %v2076, 0.0
  %v2101 = vmul.f32 %v2069, 0.01
  %v2102 = vmul.f32 %v2070, 0.01
  %v2103 = vmul.f32 %v2071, 0.01
  %v2104 = vmul.f32 %v2072, 0.01
  %v2105 = vmul.f32 %v2073, 0.01
  %v2106 = vmul.f32 %v2074, 0.01
  %v2107 = vmul.f32 %v2075, 0.01
  %v2108 = vmul.f32 %v2076, 0.01
  %v2109 = vsel %vm2093, %v2069, %v2101
  %v2110 = vsel %vm2094, %v2070, %v2102
  %v2111 = vsel %vm2095, %v2071, %v2103
  %v2112 = vsel %vm2096, %v2072, %v2104
  %v2113 = vsel %vm2097, %v2073, %v2105
  %v2114 = vsel %vm2098, %v2074, %v2106
  %v2115 = vsel %vm2099, %v2075, %v2107
  %v2116 = vsel %vm2100, %v2076, %v2108
  %vm2117 = vcmp.ge.f32.partialorder %v2085, 0.0
  %vm2118 = vcmp.ge.f32.partialorder %v2086, 0.0
  %vm2119 = vcmp.ge.f32.partialorder %v2087, 0.0
  %vm2120 = vcmp.ge.f32.partialorder %v2088, 0.0
  %vm2121 = vcmp.ge.f32.partialorder %v2089, 0.0
  %vm2122 = vcmp.ge.f32.partialorder %v2090, 0.0
  %vm2123 = vcmp.ge.f32.partialorder %v2091, 0.0
  %vm2124 = vcmp.ge.f32.partialorder %v2092, 0.0
  %v2125 = vmul.f32 %v2085, 0.01
  %v2126 = vmul.f32 %v2086, 0.01
  %v2127 = vmul.f32 %v2087, 0.01
  %v2128 = vmul.f32 %v2088, 0.01
  %v2129 = vmul.f32 %v2089, 0.01
  %v2130 = vmul.f32 %v2090, 0.01
  %v2131 = vmul.f32 %v2091, 0.01
  %v2132 = vmul.f32 %v2092, 0.01
  %v2133 = vsel %vm2117, %v2085, %v2125
  %v2134 = vsel %vm2118, %v2086, %v2126
  %v2135 = vsel %vm2119, %v2087, %v2127
  %v2136 = vsel %vm2120, %v2088, %v2128
  %v2137 = vsel %vm2121, %v2089, %v2129
  %v2138 = vsel %vm2122, %v2090, %v2130
  %v2139 = vsel %vm2123, %v2091, %v2131
  %v2140 = vsel %vm2124, %v2092, %v2132
  %v2141 = vld [vmem:[%s4] sm:$0xff]
  %v2142 = vld [vmem:[%s4 + $0x8] sm:$0xff]
  %v2143 = vld [vmem:[%s4 + $0x10] sm:$0xff]
  %v2144 = vld [vmem:[%s4 + $0x18] sm:$0xff]
  %v2145 = vld [vmem:[%s4 + $0x20] sm:$0xff]
  %v2146 = vld [vmem:[%s4 + $0x28] sm:$0xff]
  %v2147 = vld [vmem:[%s4 + $0x30] sm:$0xff]
  %v2148 = vld [vmem:[%s4 + $0x38] sm:$0xff]
  %v2149 = vld [vmem:[%s4 + $0x40] sm:$0xff]
  %v2150 = vld [vmem:[%s4 + $0x48] sm:$0xff]
  %v2151 = vld [vmem:[%s4 + $0x50] sm:$0xff]
  %v2152 = vld [vmem:[%s4 + $0x58] sm:$0xff]
  %v2153 = vld [vmem:[%s4 + $0x60] sm:$0xff]
  %v2154 = vld [vmem:[%s4 + $0x68] sm:$0xff]
  %v2155 = vld [vmem:[%s4 + $0x70] sm:$0xff]
  %v2156 = vld [vmem:[%s4 + $0x78] sm:$0xff]
  %v2157 = vld [vmem:[%s4 + $0x80] sm:$0xff]
  %v2158 = vld [vmem:[%s4 + $0x88] sm:$0xff]
  %v2159 = vld [vmem:[%s4 + $0x90] sm:$0xff]
  %v2160 = vld [vmem:[%s4 + $0x98] sm:$0xff]
  %v2161 = vld [vmem:[%s4 + $0xa0] sm:$0xff]
  %v2162 = vld [vmem:[%s4 + $0xa8] sm:$0xff]
  %v2163 = vld [vmem:[%s4 + $0xb0] sm:$0xff]
  %v2164 = vld [vmem:[%s4 + $0xb8] sm:$0xff]
  %v2165 = vld [vmem:[%s4 + $0xc0] sm:$0xff]
  %v2166 = vld [vmem:[%s4 + $0xc8] sm:$0xff]
  %v2167 = vld [vmem:[%s4 + $0xd0] sm:$0xff]
  %v2168 = vld [vmem:[%s4 + $0xd8] sm:$0xff]
  %v2169 = vld [vmem:[%s4 + $0xe0] sm:$0xff]
  %v2170 = vld [vmem:[%s4 + $0xe8] sm:$0xff]
  %v2171 = vld [vmem:[%s4 + $0xf0] sm:$0xff]
  %v2172 = vld [vmem:[%s4 + $0xf8] sm:$0xff]
  %v2173 = vld [vmem:[%s4 + $0x100] sm:$0xff]
  %v2174 = vld [vmem:[%s4 + $0x108] sm:$0xff]
  %v2175 = vld [vmem:[%s4 + $0x110] sm:$0xff]
  %v2176 = vld [vmem:[%s4 + $0x118] sm:$0xff]
  %v2177 = vld [vmem:[%s4 + $0x120] sm:$0xff]
  %v2178 = vld [vmem:[%s4 + $0x128] sm:$0xff]
  %v2179 = vld [vmem:[%s4 + $0x130] sm:$0xff]
  %v2180 = vld [vmem:[%s4 + $0x138] sm:$0xff]
  %v2181 = vld [vmem:[%s4 + $0x140] sm:$0xff]
  %v2182 = vld [vmem:[%s4 + $0x148] sm:$0xff]
  %v2183 = vld [vmem:[%s4 + $0x150] sm:$0xff]
  %v2184 = vld [vmem:[%s4 + $0x158] sm:$0xff]
  %v2185 = vld [vmem:[%s4 + $0x160] sm:$0xff]
  %v2186 = vld [vmem:[%s4 + $0x168] sm:$0xff]
  %v2187 = vld [vmem:[%s4 + $0x170] sm:$0xff]
  %v2188 = vld [vmem:[%s4 + $0x178] sm:$0xff]
  %v2189 = vld [vmem:[%s4 + $0x180] sm:$0xff]
  %v2190 = vld [vmem:[%s4 + $0x188] sm:$0xff]
  %v2191 = vld [vmem:[%s4 + $0x190] sm:$0xff]
  %v2192 = vld [vmem:[%s4 + $0x198] sm:$0xff]
  %v2193 = vld [vmem:[%s4 + $0x1a0] sm:$0xff]
  %v2194 = vld [vmem:[%s4 + $0x1a8] sm:$0xff]
  %v2195 = vld [vmem:[%s4 + $0x1b0] sm:$0xff]
  %v2196 = vld [vmem:[%s4 + $0x1b8] sm:$0xff]
  %v2197 = vld [vmem:[%s4 + $0x1c0] sm:$0xff]
  %v2198 = vld [vmem:[%s4 + $0x1c8] sm:$0xff]
  %v2199 = vld [vmem:[%s4 + $0x1d0] sm:$0xff]
  %v2200 = vld [vmem:[%s4 + $0x1d8] sm:$0xff]
  %v2201 = vld [vmem:[%s4 + $0x1e0] sm:$0xff]
  %v2202 = vld [vmem:[%s4 + $0x1e8] sm:$0xff]
  %v2203 = vld [vmem:[%s4 + $0x1f0] sm:$0xff]
  %v2204 = vld [vmem:[%s4 + $0x1f8] sm:$0xff]
  %2205 = vmatprep.subr.mxu0 %v2142
  %2206 = vmatpush1.msra.mxu0 %v2141
  %2207 = vmatprep.subr.mxu0 %v2144
  %2208 = vmatpush1.msra.mxu0 %v2143
  %2209 = vmatprep.subr.mxu0 %v2146
  %2210 = vmatpush1.msra.mxu0 %v2145
  %2211 = vmatprep.subr.mxu0 %v2148
  %2212 = vmatpush1.msra.mxu0 %v2147
  %2213 = vmatprep.subr.mxu0 %v2150
  %2214 = vmatpush1.msra.mxu0 %v2149
  %2215 = vmatprep.subr.mxu0 %v2152
  %2216 = vmatpush1.msra.mxu0 %v2151
  %2217 = vmatprep.subr.mxu0 %v2154
  %2218 = vmatpush1.msra.mxu0 %v2153
  %2219 = vmatprep.subr.mxu0 %v2156
  %2220 = vmatpush1.msra.mxu0 %v2155
  %2221 = vmatprep.subr.mxu0 %v2158
  %2222 = vmatpush1.msra.mxu0 %v2157
  %2223 = vmatprep.subr.mxu0 %v2160
  %2224 = vmatpush1.msra.mxu0 %v2159
  %2225 = vmatprep.subr.mxu0 %v2162
  %2226 = vmatpush1.msra.mxu0 %v2161
  %2227 = vmatprep.subr.mxu0 %v2164
  %2228 = vmatpush1.msra.mxu0 %v2163
  %2229 = vmatprep.subr.mxu0 %v2166
  %2230 = vmatpush1.msra.mxu0 %v2165
  %2231 = vmatprep.subr.mxu0 %v2168
  %2232 = vmatpush1.msra.mxu0 %v2167
  %2233 = vmatprep.subr.mxu0 %v2170
  %2234 = vmatpush1.msra.mxu0 %v2169
  %2235 = vmatprep.subr.mxu0 %v2172
  %2236 = vmatpush1.msra.mxu0 %v2171
  %2237 = vmatprep.subr.mxu0 %v2174
  %2238 = vmatpush1.msra.mxu0 %v2173
  %2239 = vmatprep.subr.mxu0 %v2176
  %2240 = vmatpush1.msra.mxu0 %v2175
  %2241 = vmatprep.subr.mxu0 %v2178
  %2242 = vmatpush1.msra.mxu0 %v2177
  %2243 = vmatprep.subr.mxu0 %v2180
  %2244 = vmatpush1.msra.mxu0 %v2179
  %2245 = vmatprep.subr.mxu0 %v2182
  %2246 = vmatpush1.msra.mxu0 %v2181
  %2247 = vmatprep.subr.mxu0 %v2184
  %2248 = vmatpush1.msra.mxu0 %v2183
  %2249 = vmatprep.subr.mxu0 %v2186
  %2250 = vmatpush1.msra.mxu0 %v2185
  %2251 = vmatprep.subr.mxu0 %v2188
  %2252 = vmatpush1.msra.mxu0 %v2187
  %2253 = vmatprep.subr.mxu0 %v2190
  %2254 = vmatpush1.msra.mxu0 %v2189
  %2255 = vmatprep.subr.mxu0 %v2192
  %2256 = vmatpush1.msra.mxu0 %v2191
  %2257 = vmatprep.subr.mxu0 %v2194
  %2258 = vmatpush1.msra.mxu0 %v2193
  %2259 = vmatprep.subr.mxu0 %v2196
  %2260 = vmatpush1.msra.mxu0 %v2195
  %2261 = vmatprep.subr.mxu0 %v2198
  %2262 = vmatpush1.msra.mxu0 %v2197
  %2263 = vmatprep.subr.mxu0 %v2200
  %2264 = vmatpush1.msra.mxu0 %v2199
  %2265 = vmatprep.subr.mxu0 %v2202
  %2266 = vmatpush1.msra.mxu0 %v2201
  %2267 = vmatprep.subr.mxu0 %v2204
  %2268 = vmatpush1.msra.mxu0 %v2203
  %2269 = vmatprep.mubr.f32.mxu0 %v2110
  %2270 = vmatmul.mubr.f32.gmra.mrb[0].mxu0 %v2109
  %v2271 = vpop.f32.mrb[0].mxu0
  %v2272 = vadd.f32 0.0, %v2271
  %v2273 = vpop.f32.mrb[0].mxu0
  %v2274 = vadd.f32 0.0, %v2273
  %2275 = vmatprep.mubr.f32.mxu0 %v2112
  %2276 = vmatmul.mubr.f32.gmra.mrb[0].mxu0 %v2111
  %v2277 = vpop.f32.mrb[0].mxu0
  %v2278 = vadd.f32 0.0, %v2277
  %v2279 = vpop.f32.mrb[0].mxu0
  %v2280 = vadd.f32 0.0, %v2279
  %2281 = vmatprep.mubr.f32.mxu0 %v2114
  %2282 = vmatmul.mubr.f32.gmra.mrb[0].mxu0 %v2113
  %v2283 = vpop.f32.mrb[0].mxu0
  %v2284 = vadd.f32 0.0, %v2283
  %v2285 = vpop.f32.mrb[0].mxu0
  %v2286 = vadd.f32 0.0, %v2285
  %2287 = vmatprep.mubr.f32.mxu0 %v2116
  %2288 = vmatmul.mubr.f32.gmra.mrb[0].mxu0 %v2115
  %v2289 = vpop.f32.mrb[0].mxu0
  %v2290 = vadd.f32 0.0, %v2289
  %v2291 = vpop.f32.mrb[0].mxu0
  %v2292 = vadd.f32 0.0, %v2291
  %2293 = vdwg.mxu0
  %2294 = vmatprep.subr.mxu0 %v2142
  %2295 = vmatpush1.msra.mxu0 %v2141
  %2296 = vmatprep.subr.mxu0 %v2144
  %2297 = vmatpush1.msra.mxu0 %v2143
  %2298 = vmatprep.subr.mxu0 %v2146
  %2299 = vmatpush1.msra.mxu0 %v2145
  %2300 = vmatprep.subr.mxu0 %v2148
  %2301 = vmatpush1.msra.mxu0 %v2147
  %2302 = vmatprep.subr.mxu0 %v2150
  %2303 = vmatpush1.msra.mxu0 %v2149
  %2304 = vmatprep.subr.mxu0 %v2152
  %2305 = vmatpush1.msra.mxu0 %v2151
  %2306 = vmatprep.subr.mxu0 %v2154
  %2307 = vmatpush1.msra.mxu0 %v2153
  %2308 = vmatprep.subr.mxu0 %v2156
  %2309 = vmatpush1.msra.mxu0 %v2155
  %2310 = vmatprep.subr.mxu0 %v2158
  %2311 = vmatpush1.msra.mxu0 %v2157
  %2312 = vmatprep.subr.mxu0 %v2160
  %2313 = vmatpush1.msra.mxu0 %v2159
  %2314 = vmatprep.subr.mxu0 %v2162
  %2315 = vmatpush1.msra.mxu0 %v2161
  %2316 = vmatprep.subr.mxu0 %v2164
  %2317 = vmatpush1.msra.mxu0 %v2163
  %2318 = vmatprep.subr.mxu0 %v2166
  %2319 = vmatpush1.msra.mxu0 %v2165
  %2320 = vmatprep.subr.mxu0 %v2168
  %2321 = vmatpush1.msra.mxu0 %v2167
  %2322 = vmatprep.subr.mxu0 %v2170
  %2323 = vmatpush1.msra.mxu0 %v2169
  %2324 = vmatprep.subr.mxu0 %v2172
  %2325 = vmatpush1.msra.mxu0 %v2171
  %2326 = vmatprep.subr.mxu0 %v2174
  %2327 = vmatpush1.msra.mxu0 %v2173
  %2328 = vmatprep.subr.mxu0 %v2176
  %2329 = vmatpush1.msra.mxu0 %v2175
  %2330 = vmatprep.subr.mxu0 %v2178
  %2331 = vmatpush1.msra.mxu0 %v2177
  %2332 = vmatprep.subr.mxu0 %v2180
  %2333 = vmatpush1.msra.mxu0 %v2179
  %2334 = vmatprep.subr.mxu0 %v2182
  %2335 = vmatpush1.msra.mxu0 %v2181
  %2336 = vmatprep.subr.mxu0 %v2184
  %2337 = vmatpush1.msra.mxu0 %v2183
  %2338 = vmatprep.subr.mxu0 %v2186
  %2339 = vmatpush1.msra.mxu0 %v2185
  %2340 = vmatprep.subr.mxu0 %v2188
  %2341 = vmatpush1.msra.mxu0 %v2187
  %2342 = vmatprep.subr.mxu0 %v2190
  %2343 = vmatpush1.msra.mxu0 %v2189
  %2344 = vmatprep.subr.mxu0 %v2192
  %2345 = vmatpush1.msra.mxu0 %v2191
  %2346 = vmatprep.subr.mxu0 %v2194
  %2347 = vmatpush1.msra.mxu0 %v2193
  %2348 = vmatprep.subr.mxu0 %v2196
  %2349 = vmatpush1.msra.mxu0 %v2195
  %2350 = vmatprep.subr.mxu0 %v2198
  %2351 = vmatpush1.msra.mxu0 %v2197
  %2352 = vmatprep.subr.mxu0 %v2200
  %2353 = vmatpush1.msra.mxu0 %v2199
  %2354 = vmatprep.subr.mxu0 %v2202
  %2355 = vmatpush1.msra.mxu0 %v2201
  %2356 = vmatprep.subr.mxu0 %v2204
  %2357 = vmatpush1.msra.mxu0 %v2203
  %2358 = vmatprep.mubr.f32.mxu0 %v2134
  %2359 = vmatmul.mubr.f32.gmra.mrb[0].mxu0 %v2133
  %v2360 = vpop.f32.mrb[0].mxu0
  %v2361 = vadd.f32 0.0, %v2360
  %v2362 = vpop.f32.mrb[0].mxu0
  %v2363 = vadd.f32 0.0, %v2362
  %2364 = vmatprep.mubr.f32.mxu0 %v2136
  %2365 = vmatmul.mubr.f32.gmra.mrb[0].mxu0 %v2135
  %v2366 = vpop.f32.mrb[0].mxu0
  %v2367 = vadd.f32 0.0, %v2366
  %v2368 = vpop.f32.mrb[0].mxu0
  %v2369 = vadd.f32 0.0, %v2368
  %2370 = vmatprep.mubr.f32.mxu0 %v2138
  %2371 = vmatmul.mubr.f32.gmra.mrb[0].mxu0 %v2137
  %v2372 = vpop.f32.mrb[0].mxu0
  %v2373 = vadd.f32 0.0, %v2372
  %v2374 = vpop.f32.mrb[0].mxu0
  %v2375 = vadd.f32 0.0, %v2374
  %2376 = vmatprep.mubr.f32.mxu0 %v2140
  %2377 = vmatmul.mubr.f32.gmra.mrb[0].mxu0 %v2139
  %v2378 = vpop.f32.mrb[0].mxu0
  %v2379 = vadd.f32 0.0, %v2378
  %v2380 = vpop.f32.mrb[0].mxu0
  %v2381 = vadd.f32 0.0, %v2380
  %2382 = vdwg.mxu0
  %v2383 = vld [vmem:[%s5] sm:$0xff]
  %v2384 = vld [vmem:[%s5 + $0x8] sm:$0xff]
  %v2385 = vld [vmem:[%s5 + $0x10] sm:$0xff]
  %v2386 = vld [vmem:[%s5 + $0x18] sm:$0xff]
  %v2387 = vld [vmem:[%s5 + $0x20] sm:$0xf]
  %s2388 = scalar_lea.vmem %s5, 40
  %v2389 = vld [vmem:[%s2388] sm:$0xff]
  %v2390 = vld [vmem:[%s2388 + $0x8] sm:$0xff]
  %v2391 = vld [vmem:[%s2388 + $0x10] sm:$0xff]
  %v2392 = vld [vmem:[%s2388 + $0x18] sm:$0xff]
  %v2393 = vld [vmem:[%s2388 + $0x20] sm:$0xf]
  %vm2394 = vcmask 261120
  %v2396 = vsel %vm2394, %v2389, 0
  %v2399 = vsel %vm2394, %v2390, 0
  %v2402 = vsel %vm2394, %v2391, 0
  %v2405 = vsel %vm2394, %v2392, 0
  %v2408 = vsel %vm2394, %v2393, 0
  %2410 = vmatprep.subr.mxu0 %v2363
  %2411 = vmatpush1.msra.mxu0 %v2361
  %2412 = vmatprep.subr.mxu0 %v2369
  %2413 = vmatpush1.msra.mxu0 %v2367
  %2414 = vmatprep.subr.mxu0 %v2375
  %2415 = vmatpush1.msra.mxu0 %v2373
  %2416 = vmatprep.subr.mxu0 %v2381
  %2417 = vmatpush1.msra.mxu0 %v2379
  %2418 = vmatprep.subr.mxu0 0.0
  %2419 = vmatpush1.msra.mxu0 0.0
  %2420 = vmatprep.subr.mxu0 0.0
  %2421 = vmatpush1.msra.mxu0 0.0
  %2422 = vmatprep.subr.mxu0 0.0
  %2423 = vmatpush1.msra.mxu0 0.0
  %2424 = vmatprep.subr.mxu0 0.0
  %2425 = vmatpush1.msra.mxu0 0.0
  %2426 = vmatprep.subr.mxu0 0.0
  %2427 = vmatpush1.msra.mxu0 0.0
  %2428 = vmatprep.subr.mxu0 0.0
  %2429 = vmatpush1.msra.mxu0 0.0
  %2430 = vmatprep.subr.mxu0 0.0
  %2431 = vmatpush1.msra.mxu0 0.0
  %2432 = vmatprep.subr.mxu0 0.0
  %2433 = vmatpush1.msra.mxu0 0.0
  %2434 = vmatprep.subr.mxu0 0.0
  %2435 = vmatpush1.msra.mxu0 0.0
  %2436 = vmatprep.subr.mxu0 0.0
  %2437 = vmatpush1.msra.mxu0 0.0
  %2438 = vmatprep.subr.mxu0 0.0
  %2439 = vmatpush1.msra.mxu0 0.0
  %2440 = vmatprep.subr.mxu0 0.0
  %2441 = vmatpush1.msra.mxu0 0.0
  %2442 = vmatprep.subr.mxu0 0.0
  %2443 = vmatpush1.msra.mxu0 0.0
  %2444 = vmatprep.subr.mxu0 0.0
  %2445 = vmatpush1.msra.mxu0 0.0
  %2446 = vmatprep.subr.mxu0 0.0
  %2447 = vmatpush1.msra.mxu0 0.0
  %2448 = vmatprep.subr.mxu0 0.0
  %2449 = vmatpush1.msra.mxu0 0.0
  %2450 = vmatprep.subr.mxu0 0.0
  %2451 = vmatpush1.msra.mxu0 0.0
  %2452 = vmatprep.subr.mxu0 0.0
  %2453 = vmatpush1.msra.mxu0 0.0
  %2454 = vmatprep.subr.mxu0 0.0
  %2455 = vmatpush1.msra.mxu0 0.0
  %2456 = vmatprep.subr.mxu0 0.0
  %2457 = vmatpush1.msra.mxu0 0.0
  %2458 = vmatprep.subr.mxu0 0.0
  %2459 = vmatpush1.msra.mxu0 0.0
  %2460 = vmatprep.subr.mxu0 0.0
  %2461 = vmatpush1.msra.mxu0 0.0
  %2462 = vmatprep.subr.mxu0 0.0
  %2463 = vmatpush1.msra.mxu0 0.0
  %2464 = vmatprep.subr.mxu0 0.0
  %2465 = vmatpush1.msra.mxu0 0.0
  %2466 = vmatprep.subr.mxu0 0.0
  %2467 = vmatpush1.msra.mxu0 0.0
  %2468 = vmatprep.subr.mxu0 0.0
  %2469 = vmatpush1.msra.mxu0 0.0
  %2470 = vmatprep.subr.mxu0 0.0
  %2471 = vmatpush1.msra.mxu0 0.0
  %2472 = vmatprep.subr.mxu0 0.0
  %2473 = vmatpush1.msra.mxu0 0.0
  %2474 = vmatprep.mubr.f32.mxu0 0.0
  %2475 = vmatmul.mubr.f32.gmra.mrb[0].mxu0 %v2396
  %v2476 = vpop.f32.mrb[0].mxu0
  %v2477 = vadd.f32 0.0, %v2476
  %v2478 = vpop.f32.mrb[0].mxu0
  %v2479 = vadd.f32 0.0, %v2478
  %2480 = vmatprep.mubr.f32.mxu0 0.0
  %2481 = vmatmul.mubr.f32.gmra.mrb[0].mxu0 %v2399
  %v2482 = vpop.f32.mrb[0].mxu0
  %v2483 = vadd.f32 0.0, %v2482
  %v2484 = vpop.f32.mrb[0].mxu0
  %v2485 = vadd.f32 0.0, %v2484
  %2486 = vmatprep.mubr.f32.mxu0 0.0
  %2487 = vmatmul.mubr.f32.gmra.mrb[0].mxu0 %v2402
  %v2488 = vpop.f32.mrb[0].mxu0
  %v2489 = vadd.f32 0.0, %v2488
  %v2490 = vpop.f32.mrb[0].mxu0
  %v2491 = vadd.f32 0.0, %v2490
  %2492 = vmatprep.mubr.f32.mxu0 0.0
  %2493 = vmatmul.mubr.f32.gmra.mrb[0].mxu0 %v2405
  %v2494 = vpop.f32.mrb[0].mxu0
  %v2495 = vadd.f32 0.0, %v2494
  %v2496 = vpop.f32.mrb[0].mxu0
  %v2497 = vadd.f32 0.0, %v2496
  %2498 = vmatprep.mubr.f32.mxu0 0.0
  %2499 = vmatmul.mubr.f32.gmra.mrb[0].mxu0 %v2408
  %v2500 = vpop.f32.mrb[0].mxu0
  %v2501 = vadd.f32 0.0, %v2500
  %v2502 = vpop.f32.mrb[0].mxu0
  %v2503 = vadd.f32 0.0, %v2502
  %2504 = vdwg.mxu0
  %v2506 = vsel %vm2394, %v2383, 0
  %v2509 = vsel %vm2394, %v2384, 0
  %v2512 = vsel %vm2394, %v2385, 0
  %v2515 = vsel %vm2394, %v2386, 0
  %v2518 = vsel %vm2394, %v2387, 0
  %2520 = vmatprep.subr.mxu0 %v2274
  %2521 = vmatpush1.msra.mxu0 %v2272
  %2522 = vmatprep.subr.mxu0 %v2280
  %2523 = vmatpush1.msra.mxu0 %v2278
  %2524 = vmatprep.subr.mxu0 %v2286
  %2525 = vmatpush1.msra.mxu0 %v2284
  %2526 = vmatprep.subr.mxu0 %v2292
  %2527 = vmatpush1.msra.mxu0 %v2290
  %2528 = vmatprep.subr.mxu0 0.0
  %2529 = vmatpush1.msra.mxu0 0.0
  %2530 = vmatprep.subr.mxu0 0.0
  %2531 = vmatpush1.msra.mxu0 0.0
  %2532 = vmatprep.subr.mxu0 0.0
  %2533 = vmatpush1.msra.mxu0 0.0
  %2534 = vmatprep.subr.mxu0 0.0
  %2535 = vmatpush1.msra.mxu0 0.0
  %2536 = vmatprep.subr.mxu0 0.0
  %2537 = vmatpush1.msra.mxu0 0.0
  %2538 = vmatprep.subr.mxu0 0.0
  %2539 = vmatpush1.msra.mxu0 0.0
  %2540 = vmatprep.subr.mxu0 0.0
  %2541 = vmatpush1.msra.mxu0 0.0
  %2542 = vmatprep.subr.mxu0 0.0
  %2543 = vmatpush1.msra.mxu0 0.0
  %2544 = vmatprep.subr.mxu0 0.0
  %2545 = vmatpush1.msra.mxu0 0.0
  %2546 = vmatprep.subr.mxu0 0.0
  %2547 = vmatpush1.msra.mxu0 0.0
  %2548 = vmatprep.subr.mxu0 0.0
  %2549 = vmatpush1.msra.mxu0 0.0
  %2550 = vmatprep.subr.mxu0 0.0
  %2551 = vmatpush1.msra.mxu0 0.0
  %2552 = vmatprep.subr.mxu0 0.0
  %2553 = vmatpush1.msra.mxu0 0.0
  %2554 = vmatprep.subr.mxu0 0.0
  %2555 = vmatpush1.msra.mxu0 0.0
  %2556 = vmatprep.subr.mxu0 0.0
  %2557 = vmatpush1.msra.mxu0 0.0
  %2558 = vmatprep.subr.mxu0 0.0
  %2559 = vmatpush1.msra.mxu0 0.0
  %2560 = vmatprep.subr.mxu0 0.0
  %2561 = vmatpush1.msra.mxu0 0.0
  %2562 = vmatprep.subr.mxu0 0.0
  %2563 = vmatpush1.msra.mxu0 0.0
  %2564 = vmatprep.subr.mxu0 0.0
  %2565 = vmatpush1.msra.mxu0 0.0
  %2566 = vmatprep.subr.mxu0 0.0
  %2567 = vmatpush1.msra.mxu0 0.0
  %2568 = vmatprep.subr.mxu0 0.0
  %2569 = vmatpush1.msra.mxu0 0.0
  %2570 = vmatprep.subr.mxu0 0.0
  %2571 = vmatpush1.msra.mxu0 0.0
  %2572 = vmatprep.subr.mxu0 0.0
  %2573 = vmatpush1.msra.mxu0 0.0
  %2574 = vmatprep.subr.mxu0 0.0
  %2575 = vmatpush1.msra.mxu0 0.0
  %2576 = vmatprep.subr.mxu0 0.0
  %2577 = vmatpush1.msra.mxu0 0.0
  %2578 = vmatprep.subr.mxu0 0.0
  %2579 = vmatpush1.msra.mxu0 0.0
  %2580 = vmatprep.subr.mxu0 0.0
  %2581 = vmatpush1.msra.mxu0 0.0
  %2582 = vmatprep.subr.mxu0 0.0
  %2583 = vmatpush1.msra.mxu0 0.0
  %2584 = vmatprep.mubr.f32.mxu0 0.0
  %2585 = vmatmul.mubr.f32.gmra.mrb[0].mxu0 %v2506
  %v2586 = vpop.f32.mrb[0].mxu0
  %v2587 = vadd.f32 %v2477, %v2586
  %v2588 = vpop.f32.mrb[0].mxu0
  %v2589 = vadd.f32 %v2479, %v2588
  %2590 = vmatprep.mubr.f32.mxu0 0.0
  %2591 = vmatmul.mubr.f32.gmra.mrb[0].mxu0 %v2509
  %v2592 = vpop.f32.mrb[0].mxu0
  %v2593 = vadd.f32 %v2483, %v2592
  %v2594 = vpop.f32.mrb[0].mxu0
  %v2595 = vadd.f32 %v2485, %v2594
  %2596 = vmatprep.mubr.f32.mxu0 0.0
  %2597 = vmatmul.mubr.f32.gmra.mrb[0].mxu0 %v2512
  %v2598 = vpop.f32.mrb[0].mxu0
  %v2599 = vadd.f32 %v2489, %v2598
  %v2600 = vpop.f32.mrb[0].mxu0
  %v2601 = vadd.f32 %v2491, %v2600
  %2602 = vmatprep.mubr.f32.mxu0 0.0
  %2603 = vmatmul.mubr.f32.gmra.mrb[0].mxu0 %v2515
  %v2604 = vpop.f32.mrb[0].mxu0
  %v2605 = vadd.f32 %v2495, %v2604
  %v2606 = vpop.f32.mrb[0].mxu0
  %v2607 = vadd.f32 %v2497, %v2606
  %2608 = vmatprep.mubr.f32.mxu0 0.0
  %2609 = vmatmul.mubr.f32.gmra.mrb[0].mxu0 %v2518
  %v2610 = vpop.f32.mrb[0].mxu0
  %v2611 = vadd.f32 %v2501, %v2610
  %v2612 = vpop.f32.mrb[0].mxu0
  %v2613 = vadd.f32 %v2503, %v2612
  %2614 = vdwg.mxu0
  %2615 = vst [vmem:[%s10] sm:$0xff] %v2587
  %vm2616 = vcmask 130048
  %2617 = vst.msk [vmem:[%s10 + $0x8] sm:$0xff] %vm2616, %v2589
  %2618 = vst [vmem:[%s10 + $0x10] sm:$0xff] %v2593
  %2619 = vst.msk [vmem:[%s10 + $0x18] sm:$0xff] %vm2616, %v2595
  %2620 = vst [vmem:[%s10 + $0x20] sm:$0xff] %v2599
  %2621 = vst.msk [vmem:[%s10 + $0x28] sm:$0xff] %vm2616, %v2601
  %2622 = vst [vmem:[%s10 + $0x30] sm:$0xff] %v2605
  %2623 = vst.msk [vmem:[%s10 + $0x38] sm:$0xff] %vm2616, %v2607
  %2624 = vst [vmem:[%s10 + $0x40] sm:$0xf] %v2611
  %vm2625 = vcmask 125952
  %2626 = vst.msk [vmem:[%s10 + $0x48] sm:$0xf] %vm2625, %v2613
  // Predicated region
  $region42: #{deconv_block_skip_forward.1} parent=0 // pred_check
    _
  $region43: #{deconv_block_skip_forward.1} parent=0 // pred_check_branch
    %2628 = sbr.rel (0) target = $region45
  $region44: #{deconv_block_skip_forward.1} parent=0 // pred_region
    _
  $region45: #{deconv_block_skip_forward.1} parent=0 // pred_fallthru
    _
  // Predicated region
  $region46: #{deconv_block_skip_forward.1} parent=0 // pred_check
    _
  $region47: #{deconv_block_skip_forward.1} parent=0 // pred_check_branch
    %2630 = sbr.rel (0) target = $region49
  $region48: #{deconv_block_skip_forward.1} parent=0 // pred_region
    _
  $region49: #{deconv_block_skip_forward.1} parent=0 // pred_fallthru
    _

</llo_original>
